<compile_context>
chip_gen: v6e
topology: v6e:2x2x1
jax: 0.10.0
libtpu: 0.0.40
codegen_flags: <defaults>
</compile_context>

<pallas_src>
import jax
import jax.numpy as jnp
from jax.experimental import pallas as pl
from jax.experimental.pallas import tpu as pltpu

# Module hyper-parameters (PyTorch defaults of the module).
INPUT_SIZE = 1
D_MODEL = 64
NHEAD = 4
HEAD_DIM = D_MODEL // NHEAD
DFF = 2048          # nn.TransformerEncoderLayer default dim_feedforward
MAX_POS = 1000
EPS = 1e-5          # layer_norm_eps default


def _ln(z, g, b):
    mu = jnp.mean(z, axis=-1, keepdims=True)
    var = jnp.mean((z - mu) ** 2, axis=-1, keepdims=True)
    return (z - mu) * jax.lax.rsqrt(var + EPS) * g + b


def _make_kernel(TB, S):
    R = TB * S
    scale = 1.0 / (HEAD_DIM ** 0.5)

    def kernel(x_ref, posb_ref, bias_ref, vecs_ref, wqkv_ref, bqkv_ref, wo_ref,
               w1_ref, b1_ref, w2_ref, out_ref, y_scratch):
        vecs = vecs_ref[...]                      # (8, D) packed 1-row params
        w_in_row = vecs[0:1, :]
        bo  = vecs[1:2, :]
        g1  = vecs[2:3, :]
        be1 = vecs[3:4, :]
        g2  = vecs[4:5, :]
        be2 = vecs[5:6, :]
        b2  = vecs[6:7, :]

        # Input projection (K=1 -> VPU broadcast) + positional encoding (+ b_in folded in posb).
        h = x_ref[...] * w_in_row + posb_ref[...]                       # (R, D)

        # Block-diagonal additive mask (0 within a batch element, -1e30 across packed batches).
        neg = bias_ref[...]                                             # (R, R)

        # Multi-head self-attention with per-head weight slabs (no lane slicing / concat).
        attn = jnp.zeros((R, D_MODEL), jnp.float32)
        for hd in range(NHEAD):
            qh = jnp.dot(h, wqkv_ref[0 * NHEAD + hd],
                         preferred_element_type=jnp.float32) + bqkv_ref[0 * NHEAD + hd]
            kh = jnp.dot(h, wqkv_ref[1 * NHEAD + hd],
                         preferred_element_type=jnp.float32) + bqkv_ref[1 * NHEAD + hd]
            vh = jnp.dot(h, wqkv_ref[2 * NHEAD + hd],
                         preferred_element_type=jnp.float32) + bqkv_ref[2 * NHEAD + hd]
            # q . k^T without an explicit transpose (contract dim 1 of both operands).
            s = jax.lax.dot_general(qh * scale, kh, (((1,), (1,)), ((), ())),
                                    preferred_element_type=jnp.float32)  # (R, R)
            s = s + neg
            s = s - jnp.max(s, axis=-1, keepdims=True)
            p = jnp.exp(s)
            p = p * pl.reciprocal(jnp.sum(p, axis=-1, keepdims=True), approx=False)
            oh = jnp.dot(p, vh, preferred_element_type=jnp.float32)      # (R, HEAD_DIM)
            attn = attn + jnp.dot(oh, wo_ref[hd],
                                  preferred_element_type=jnp.float32)    # (R, D)
        attn = attn + bo

        # Residual + LayerNorm 1 (post-norm, norm_first=False).
        h1 = _ln(h + attn, g1, be1)

        # Feed-forward (relu) in bf16 with f32 accumulation on the MXU.
        ff = jnp.dot(h1.astype(jnp.bfloat16), w1_ref[...],
                     preferred_element_type=jnp.float32) + b1_ref[...]
        ff = jnp.maximum(ff, 0.0)
        ff = jnp.dot(ff.astype(jnp.bfloat16), w2_ref[...],
                     preferred_element_type=jnp.float32) + b2

        # Residual, then extract last token of each packed batch element via a strided read,
        # LayerNorm 2 only on those rows; output is a lane-dense (TB, D) block.
        y_scratch[...] = h1 + ff                                          # (R, D)
        last = y_scratch[pl.ds(S - 1, TB, stride=S), :]                   # (TB, D)
        out_ref[...] = _ln(last, g2, be2)

    return kernel


def time_series_transformer(x, p, rows_target=256):
    """x: (B, S, INPUT_SIZE) float32 -> (B, 1) float32."""
    B, S, F = x.shape
    assert F == INPUT_SIZE == 1  # TODO(synk): input_size > 1 would need a real MXU input projection
    D = D_MODEL

    # Batch-packing: TB batch elements (TB*S rows) per grid step.
    TB = max(1, rows_target // S)
    if B <= TB:
        TB = B                               # single step, blocks equal full array extents
    else:
        TB = max(8, (TB // 8) * 8)           # keep tiled block dims (8,128)-friendly
    n_steps = -(-B // TB)
    B_pad = n_steps * TB
    R = TB * S

    if B_pad != B:                           # pad; padded rows are masked off in attention and dropped
        x = jnp.concatenate([x, jnp.zeros((B_pad - B, S, F), x.dtype)], axis=0)
    x_rows = x.reshape(B_pad * S, 1).astype(jnp.float32)

    # ---- packed / fused parameter slabs (instead of 22 tiny inputs) ----
    posb = (p["pos"][0, :S, :] + p["b_in"]).astype(jnp.float32)         # (S, D) pos + input bias
    posb_tiled = jnp.tile(posb, (TB, 1))                                # (R, D)

    rid = jnp.arange(R) // S
    attn_bias = jnp.where(rid[:, None] == rid[None, :], 0.0, -1e30).astype(jnp.float32)  # (R, R)

    vecs = jnp.concatenate(
        [p["w_in"], p["bo"], p["g1"], p["be1"], p["g2"], p["be2"], p["b2"],
         jnp.zeros((1, D), jnp.float32)], axis=0)                       # (8, D)

    wqkv = jnp.concatenate(
        [p["wq"].reshape(D, NHEAD, HEAD_DIM).transpose(1, 0, 2),
         p["wk"].reshape(D, NHEAD, HEAD_DIM).transpose(1, 0, 2),
         p["wv"].reshape(D, NHEAD, HEAD_DIM).transpose(1, 0, 2)], axis=0)   # (3*NHEAD, D, HEAD_DIM)
    bqkv = jnp.concatenate(
        [p["bq"].reshape(NHEAD, 1, HEAD_DIM),
         p["bk"].reshape(NHEAD, 1, HEAD_DIM),
         p["bv"].reshape(NHEAD, 1, HEAD_DIM)], axis=0)                  # (3*NHEAD, 1, HEAD_DIM)
    wo_heads = p["wo"].reshape(NHEAD, HEAD_DIM, D)                      # (NHEAD, HEAD_DIM, D)

    w1_bf16 = p["w1"].astype(jnp.bfloat16)                              # (D, DFF)
    w2_bf16 = p["w2"].astype(jnp.bfloat16)                              # (DFF, D)
    b1 = p["b1"].astype(jnp.float32)                                    # (1, DFF)

    def full(shape):
        nd = len(shape)
        return pl.BlockSpec(shape, lambda i, _n=nd: (0,) * _n)

    last_hidden = pl.pallas_call(
        _make_kernel(TB, S),
        out_shape=jax.ShapeDtypeStruct((B_pad, D), jnp.float32),
        grid=(n_steps,),
        in_specs=[
            pl.BlockSpec((R, 1), lambda i: (i, 0)),   # packed input rows
            full((R, D)),                             # pos + b_in (tiled)
            full((R, R)),                             # block-diagonal attention bias
            full((8, D)),                             # packed 1-row params
            full((3 * NHEAD, D, HEAD_DIM)),           # per-head Wq|Wk|Wv
            full((3 * NHEAD, 1, HEAD_DIM)),           # per-head bq|bk|bv
            full((NHEAD, HEAD_DIM, D)),               # per-head Wo
            full((D, DFF)),                           # W1 (bf16)
            full((1, DFF)),                           # b1
            full((DFF, D)),                           # W2 (bf16)
        ],
        out_specs=pl.BlockSpec((TB, D), lambda i: (i, 0)),
        scratch_shapes=[pltpu.VMEM((R, D), jnp.float32)],
        compiler_params=pltpu.CompilerParams(dimension_semantics=("parallel",)),
    )(x_rows, posb_tiled, attn_bias, vecs, wqkv, bqkv, wo_heads, w1_bf16, b1, w2_bf16)

    # Tiny decoder GEMM kept outside the kernel (avoids an M=1/N=1 MXU dot and 1-lane stores).
    return last_hidden[:B] @ p["wdec"] + p["bdec"]


def build_params(key):
    ks = jax.random.split(key, 16)
    n = lambda k, shape, scale=0.05: (scale * jax.random.normal(k, shape)).astype(jnp.float32)
    return {
        "pos":  n(ks[0], (1, MAX_POS, D_MODEL), 1.0),      # nn.Parameter(torch.randn(1,1000,d))
        "w_in": n(ks[1], (INPUT_SIZE, D_MODEL)), "b_in": n(ks[2], (1, D_MODEL)),
        "wq":   n(ks[3], (D_MODEL, D_MODEL)),   "bq":   n(ks[4], (1, D_MODEL)),
        "wk":   n(ks[5], (D_MODEL, D_MODEL)),   "bk":   n(ks[6], (1, D_MODEL)),
        "wv":   n(ks[7], (D_MODEL, D_MODEL)),   "bv":   n(ks[8], (1, D_MODEL)),
        "wo":   n(ks[9], (D_MODEL, D_MODEL)),   "bo":   n(ks[10], (1, D_MODEL)),
        "g1": jnp.ones((1, D_MODEL), jnp.float32),  "be1": jnp.zeros((1, D_MODEL), jnp.float32),
        "w1":   n(ks[11], (D_MODEL, DFF)),      "b1":   n(ks[12], (1, DFF)),
        "w2":   n(ks[13], (DFF, D_MODEL)),      "b2":   n(ks[14], (1, D_MODEL)),
        "g2": jnp.ones((1, D_MODEL), jnp.float32),  "be2": jnp.zeros((1, D_MODEL), jnp.float32),
        "wdec": n(ks[15], (D_MODEL, 1)),        "bdec": jnp.zeros((1, 1), jnp.float32),
    }


def reference_forward(x, p):
    """Pure-JAX f32 reference mirroring PyTorch eval-mode forward."""
    B, S, _ = x.shape
    h = x @ p["w_in"] + p["b_in"][0]
    h = h + p["pos"][0, :S]
    q = (h @ p["wq"] + p["bq"][0]).reshape(B, S, NHEAD, HEAD_DIM)
    k = (h @ p["wk"] + p["bk"][0]).reshape(B, S, NHEAD, HEAD_DIM)
    v = (h @ p["wv"] + p["bv"][0]).reshape(B, S, NHEAD, HEAD_DIM)
    s = jnp.einsum("bqhd,bkhd->bhqk", q, k) * (1.0 / (HEAD_DIM ** 0.5))
    a = jax.nn.softmax(s, axis=-1)
    o = jnp.einsum("bhqk,bkhd->bqhd", a, v).reshape(B, S, D_MODEL)
    o = o @ p["wo"] + p["bo"][0]

    def ln(z, g, b):
        mu = jnp.mean(z, axis=-1, keepdims=True)
        var = jnp.mean((z - mu) ** 2, axis=-1, keepdims=True)
        return (z - mu) / jnp.sqrt(var + EPS) * g + b

    h1 = ln(h + o, p["g1"][0], p["be1"][0])
    ff = jax.nn.relu(h1 @ p["w1"] + p["b1"][0]) @ p["w2"] + p["b2"][0]
    h2 = ln(h1 + ff, p["g2"][0], p["be2"][0])
    return h2[:, -1, :] @ p["wdec"] + p["bdec"]


if __name__ == "__main__":
    key = jax.random.PRNGKey(0)
    kx, kp, kx2 = jax.random.split(key, 3)
    params = build_params(kp)
    S = 8

    # Tolerance loosened vs the pure-f32 reference because the FFN matmuls run in bf16.
    ATOL = RTOL = 2e-2

    # Small spec-like case (B=2: single grid step, blocks == full extents).
    x_small = jax.random.normal(kx, (2, S, INPUT_SIZE), dtype=jnp.float32)
    out_small = jax.block_until_ready(time_series_transformer(x_small, params))
    assert out_small.shape == (2, 1), out_small.shape
    ref_small = reference_forward(x_small, params)
    assert jnp.allclose(out_small, ref_small, atol=ATOL, rtol=RTOL), (out_small, ref_small)

    # Batch-packed case: TB=32 -> 256-row MXU tiles, grid=3, exercises padding (66 -> 96)
    # and the block-diagonal attention mask across packed batch elements.
    x_big = jax.random.normal(kx2, (66, S, INPUT_SIZE), dtype=jnp.float32)
    out_big = jax.block_until_ready(time_series_transformer(x_big, params))
    assert out_big.shape == (66, 1), out_big.shape
    ref_big = reference_forward(x_big, params)
    assert jnp.allclose(out_big, ref_big, atol=ATOL, rtol=RTOL), (out_big, ref_big)

    print("KERNEL_OK")
</pallas_src>

<mosaic_0001>
module attributes {stable_mosaic.version = 11 : i64} {
  func.func @kernel(%arg0: i32, %arg1: memref<16x1xf32, #tpu.memory_space<vmem>>, %arg2: memref<16x64xf32, #tpu.memory_space<vmem>>, %arg3: memref<16x16xf32, #tpu.memory_space<vmem>>, %arg4: memref<8x64xf32, #tpu.memory_space<vmem>>, %arg5: memref<12x64x16xf32, #tpu.memory_space<vmem>>, %arg6: memref<12x1x16xf32, #tpu.memory_space<vmem>>, %arg7: memref<4x16x64xf32, #tpu.memory_space<vmem>>, %arg8: memref<64x2048xbf16, #tpu.memory_space<vmem>>, %arg9: memref<1x2048xf32, #tpu.memory_space<vmem>>, %arg10: memref<2048x64xbf16, #tpu.memory_space<vmem>>, %arg11: memref<2x64xf32, #tpu.memory_space<vmem>>, %arg12: memref<16x64xf32, #tpu.memory_space<vmem>>) attributes {dimension_semantics = [#tpu.dimension_semantics<parallel>], iteration_bounds = array<i64: 1>, scalar_prefetch = 0 : i64, scratch_operands = 1 : i64, tpu.core_type = #tpu.core_type<tc>, window_params = [{transform_indices = @transform_0, window_bounds = array<i64: 16, 1>}, {pipeline_mode = #tpu.pipeline_mode<synchronous>, transform_indices = @transform_1, window_bounds = array<i64: 16, 64>}, {pipeline_mode = #tpu.pipeline_mode<synchronous>, transform_indices = @transform_2, window_bounds = array<i64: 16, 16>}, {pipeline_mode = #tpu.pipeline_mode<synchronous>, transform_indices = @transform_3, window_bounds = array<i64: 8, 64>}, {pipeline_mode = #tpu.pipeline_mode<synchronous>, transform_indices = @transform_4, window_bounds = array<i64: 12, 64, 16>}, {pipeline_mode = #tpu.pipeline_mode<synchronous>, transform_indices = @transform_5, window_bounds = array<i64: 12, 1, 16>}, {pipeline_mode = #tpu.pipeline_mode<synchronous>, transform_indices = @transform_6, window_bounds = array<i64: 4, 16, 64>}, {pipeline_mode = #tpu.pipeline_mode<synchronous>, transform_indices = @transform_7, window_bounds = array<i64: 64, 2048>}, {pipeline_mode = #tpu.pipeline_mode<synchronous>, transform_indices = @transform_8, window_bounds = array<i64: 1, 2048>}, {pipeline_mode = #tpu.pipeline_mode<synchronous>, transform_indices = @transform_9, window_bounds = array<i64: 2048, 64>}, {transform_indices = @transform_10, window_bounds = array<i64: 2, 64>}]} {
    %c0 = arith.constant 0 : index
    %c0_0 = arith.constant 0 : index
    %0 = vector.load %arg4[%c0, %c0_0] : memref<8x64xf32, #tpu.memory_space<vmem>>, vector<8x64xf32>
    %1 = vector.extract_strided_slice %0 {offsets = [0, 0], sizes = [1, 64], strides = [1, 1]} : vector<8x64xf32> to vector<1x64xf32>
    %2 = vector.extract_strided_slice %0 {offsets = [1, 0], sizes = [1, 64], strides = [1, 1]} : vector<8x64xf32> to vector<1x64xf32>
    %3 = vector.extract_strided_slice %0 {offsets = [2, 0], sizes = [1, 64], strides = [1, 1]} : vector<8x64xf32> to vector<1x64xf32>
    %4 = vector.extract_strided_slice %0 {offsets = [3, 0], sizes = [1, 64], strides = [1, 1]} : vector<8x64xf32> to vector<1x64xf32>
    %5 = vector.extract_strided_slice %0 {offsets = [4, 0], sizes = [1, 64], strides = [1, 1]} : vector<8x64xf32> to vector<1x64xf32>
    %6 = vector.extract_strided_slice %0 {offsets = [5, 0], sizes = [1, 64], strides = [1, 1]} : vector<8x64xf32> to vector<1x64xf32>
    %7 = vector.extract_strided_slice %0 {offsets = [6, 0], sizes = [1, 64], strides = [1, 1]} : vector<8x64xf32> to vector<1x64xf32>
    %c0_1 = arith.constant 0 : index
    %c0_2 = arith.constant 0 : index
    %8 = vector.load %arg1[%c0_1, %c0_2] : memref<16x1xf32, #tpu.memory_space<vmem>>, vector<16x1xf32>
    %9 = vector.broadcast %8 : vector<16x1xf32> to vector<16x64xf32>
    %10 = vector.broadcast %1 : vector<1x64xf32> to vector<16x64xf32>
    %11 = arith.mulf %9, %10 : vector<16x64xf32>
    %c0_3 = arith.constant 0 : index
    %c0_4 = arith.constant 0 : index
    %12 = vector.load %arg2[%c0_3, %c0_4] : memref<16x64xf32, #tpu.memory_space<vmem>>, vector<16x64xf32>
    %13 = arith.addf %11, %12 : vector<16x64xf32>
    %c0_5 = arith.constant 0 : index
    %c0_6 = arith.constant 0 : index
    %14 = vector.load %arg3[%c0_5, %c0_6] : memref<16x16xf32, #tpu.memory_space<vmem>>, vector<16x16xf32>
    %cst = arith.constant 0.000000e+00 : f32
    %15 = vector.broadcast %cst : f32 to vector<16x64xf32>
    %c0_7 = arith.constant 0 : index
    %c0_8 = arith.constant 0 : index
    %c0_9 = arith.constant 0 : index
    %16 = vector.load %arg5[%c0_7, %c0_8, %c0_9] : memref<12x64x16xf32, #tpu.memory_space<vmem>>, vector<1x64x16xf32>
    %17 = vector.shape_cast %16 : vector<1x64x16xf32> to vector<64x16xf32>
    %cst_10 = arith.constant dense<0.000000e+00> : vector<16x16xf32>
    %18 = tpu.matmul %13, %17, %cst_10 {dimension_numbers = #tpu.dot_dimension_numbers<[1], [0], [0], [1], [0, 0, 1, 1], [], []>} : vector<16x64xf32>, vector<64x16xf32>, vector<16x16xf32> -> vector<16x16xf32>
    %c0_11 = arith.constant 0 : index
    %c0_12 = arith.constant 0 : index
    %c0_13 = arith.constant 0 : index
    %19 = vector.load %arg6[%c0_11, %c0_12, %c0_13] : memref<12x1x16xf32, #tpu.memory_space<vmem>>, vector<1x1x16xf32>
    %20 = vector.shape_cast %19 : vector<1x1x16xf32> to vector<1x16xf32>
    %21 = vector.broadcast %20 : vector<1x16xf32> to vector<16x16xf32>
    %22 = arith.addf %18, %21 : vector<16x16xf32>
    %c4 = arith.constant 4 : index
    %c0_14 = arith.constant 0 : index
    %c0_15 = arith.constant 0 : index
    %23 = vector.load %arg5[%c4, %c0_14, %c0_15] : memref<12x64x16xf32, #tpu.memory_space<vmem>>, vector<1x64x16xf32>
    %24 = vector.shape_cast %23 : vector<1x64x16xf32> to vector<64x16xf32>
    %cst_16 = arith.constant dense<0.000000e+00> : vector<16x16xf32>
    %25 = tpu.matmul %13, %24, %cst_16 {dimension_numbers = #tpu.dot_dimension_numbers<[1], [0], [0], [1], [0, 0, 1, 1], [], []>} : vector<16x64xf32>, vector<64x16xf32>, vector<16x16xf32> -> vector<16x16xf32>
    %c4_17 = arith.constant 4 : index
    %c0_18 = arith.constant 0 : index
    %c0_19 = arith.constant 0 : index
    %26 = vector.load %arg6[%c4_17, %c0_18, %c0_19] : memref<12x1x16xf32, #tpu.memory_space<vmem>>, vector<1x1x16xf32>
    %27 = vector.shape_cast %26 : vector<1x1x16xf32> to vector<1x16xf32>
    %28 = vector.broadcast %27 : vector<1x16xf32> to vector<16x16xf32>
    %29 = arith.addf %25, %28 : vector<16x16xf32>
    %c8 = arith.constant 8 : index
    %c0_20 = arith.constant 0 : index
    %c0_21 = arith.constant 0 : index
    %30 = vector.load %arg5[%c8, %c0_20, %c0_21] : memref<12x64x16xf32, #tpu.memory_space<vmem>>, vector<1x64x16xf32>
    %31 = vector.shape_cast %30 : vector<1x64x16xf32> to vector<64x16xf32>
    %cst_22 = arith.constant dense<0.000000e+00> : vector<16x16xf32>
    %32 = tpu.matmul %13, %31, %cst_22 {dimension_numbers = #tpu.dot_dimension_numbers<[1], [0], [0], [1], [0, 0, 1, 1], [], []>} : vector<16x64xf32>, vector<64x16xf32>, vector<16x16xf32> -> vector<16x16xf32>
    %c8_23 = arith.constant 8 : index
    %c0_24 = arith.constant 0 : index
    %c0_25 = arith.constant 0 : index
    %33 = vector.load %arg6[%c8_23, %c0_24, %c0_25] : memref<12x1x16xf32, #tpu.memory_space<vmem>>, vector<1x1x16xf32>
    %34 = vector.shape_cast %33 : vector<1x1x16xf32> to vector<1x16xf32>
    %35 = vector.broadcast %34 : vector<1x16xf32> to vector<16x16xf32>
    %36 = arith.addf %32, %35 : vector<16x16xf32>
    %cst_26 = arith.constant 2.500000e-01 : f32
    %37 = vector.broadcast %cst_26 : f32 to vector<16x16xf32>
    %38 = arith.mulf %22, %37 : vector<16x16xf32>
    %cst_27 = arith.constant dense<0.000000e+00> : vector<16x16xf32>
    %39 = tpu.matmul %38, %29, %cst_27 {dimension_numbers = #tpu.dot_dimension_numbers<[1], [1], [0], [0], [0, 0, 1, 0], [], []>} : vector<16x16xf32>, vector<16x16xf32>, vector<16x16xf32> -> vector<16x16xf32>
    %40 = arith.addf %39, %14 : vector<16x16xf32>
    %cst_28 = arith.constant dense<0xFF800000> : vector<16xf32>
    %41 = vector.multi_reduction <maximumf>, %40, %cst_28 [1] : vector<16x16xf32> to vector<16xf32>
    %42 = vector.shape_cast %41 : vector<16xf32> to vector<16x1xf32>
    %43 = vector.broadcast %42 : vector<16x1xf32> to vector<16x16xf32>
    %44 = arith.subf %40, %43 : vector<16x16xf32>
    %45 = math.exp %44 : vector<16x16xf32>
    %cst_29 = arith.constant dense<0.000000e+00> : vector<16xf32>
    %46 = vector.multi_reduction <add>, %45, %cst_29 [1] : vector<16x16xf32> to vector<16xf32>
    %47 = vector.shape_cast %46 : vector<16xf32> to vector<16x1xf32>
    %48 = tpu.reciprocal %47 : vector<16x1xf32> -> vector<16x1xf32>
    %49 = vector.broadcast %48 : vector<16x1xf32> to vector<16x16xf32>
    %50 = arith.mulf %45, %49 : vector<16x16xf32>
    %cst_30 = arith.constant dense<0.000000e+00> : vector<16x16xf32>
    %51 = tpu.matmul %50, %36, %cst_30 {dimension_numbers = #tpu.dot_dimension_numbers<[1], [0], [0], [1], [0, 0, 1, 1], [], []>} : vector<16x16xf32>, vector<16x16xf32>, vector<16x16xf32> -> vector<16x16xf32>
    %c0_31 = arith.constant 0 : index
    %c0_32 = arith.constant 0 : index
    %c0_33 = arith.constant 0 : index
    %52 = vector.load %arg7[%c0_31, %c0_32, %c0_33] : memref<4x16x64xf32, #tpu.memory_space<vmem>>, vector<1x16x64xf32>
    %53 = vector.shape_cast %52 : vector<1x16x64xf32> to vector<16x64xf32>
    %cst_34 = arith.constant dense<0.000000e+00> : vector<16x64xf32>
    %54 = tpu.matmul %51, %53, %cst_34 {dimension_numbers = #tpu.dot_dimension_numbers<[1], [0], [0], [1], [0, 0, 1, 1], [], []>} : vector<16x16xf32>, vector<16x64xf32>, vector<16x64xf32> -> vector<16x64xf32>
    %55 = arith.addf %15, %54 : vector<16x64xf32>
    %c1 = arith.constant 1 : index
    %c0_35 = arith.constant 0 : index
    %c0_36 = arith.constant 0 : index
    %56 = vector.load %arg5[%c1, %c0_35, %c0_36] : memref<12x64x16xf32, #tpu.memory_space<vmem>>, vector<1x64x16xf32>
    %57 = vector.shape_cast %56 : vector<1x64x16xf32> to vector<64x16xf32>
    %cst_37 = arith.constant dense<0.000000e+00> : vector<16x16xf32>
    %58 = tpu.matmul %13, %57, %cst_37 {dimension_numbers = #tpu.dot_dimension_numbers<[1], [0], [0], [1], [0, 0, 1, 1], [], []>} : vector<16x64xf32>, vector<64x16xf32>, vector<16x16xf32> -> vector<16x16xf32>
    %c1_38 = arith.constant 1 : index
    %c0_39 = arith.constant 0 : index
    %c0_40 = arith.constant 0 : index
    %59 = vector.load %arg6[%c1_38, %c0_39, %c0_40] : memref<12x1x16xf32, #tpu.memory_space<vmem>>, vector<1x1x16xf32>
    %60 = vector.shape_cast %59 : vector<1x1x16xf32> to vector<1x16xf32>
    %61 = vector.broadcast %60 : vector<1x16xf32> to vector<16x16xf32>
    %62 = arith.addf %58, %61 : vector<16x16xf32>
    %c5 = arith.constant 5 : index
    %c0_41 = arith.constant 0 : index
    %c0_42 = arith.constant 0 : index
    %63 = vector.load %arg5[%c5, %c0_41, %c0_42] : memref<12x64x16xf32, #tpu.memory_space<vmem>>, vector<1x64x16xf32>
    %64 = vector.shape_cast %63 : vector<1x64x16xf32> to vector<64x16xf32>
    %cst_43 = arith.constant dense<0.000000e+00> : vector<16x16xf32>
    %65 = tpu.matmul %13, %64, %cst_43 {dimension_numbers = #tpu.dot_dimension_numbers<[1], [0], [0], [1], [0, 0, 1, 1], [], []>} : vector<16x64xf32>, vector<64x16xf32>, vector<16x16xf32> -> vector<16x16xf32>
    %c5_44 = arith.constant 5 : index
    %c0_45 = arith.constant 0 : index
    %c0_46 = arith.constant 0 : index
    %66 = vector.load %arg6[%c5_44, %c0_45, %c0_46] : memref<12x1x16xf32, #tpu.memory_space<vmem>>, vector<1x1x16xf32>
    %67 = vector.shape_cast %66 : vector<1x1x16xf32> to vector<1x16xf32>
    %68 = vector.broadcast %67 : vector<1x16xf32> to vector<16x16xf32>
    %69 = arith.addf %65, %68 : vector<16x16xf32>
    %c9 = arith.constant 9 : index
    %c0_47 = arith.constant 0 : index
    %c0_48 = arith.constant 0 : index
    %70 = vector.load %arg5[%c9, %c0_47, %c0_48] : memref<12x64x16xf32, #tpu.memory_space<vmem>>, vector<1x64x16xf32>
    %71 = vector.shape_cast %70 : vector<1x64x16xf32> to vector<64x16xf32>
    %cst_49 = arith.constant dense<0.000000e+00> : vector<16x16xf32>
    %72 = tpu.matmul %13, %71, %cst_49 {dimension_numbers = #tpu.dot_dimension_numbers<[1], [0], [0], [1], [0, 0, 1, 1], [], []>} : vector<16x64xf32>, vector<64x16xf32>, vector<16x16xf32> -> vector<16x16xf32>
    %c9_50 = arith.constant 9 : index
    %c0_51 = arith.constant 0 : index
    %c0_52 = arith.constant 0 : index
    %73 = vector.load %arg6[%c9_50, %c0_51, %c0_52] : memref<12x1x16xf32, #tpu.memory_space<vmem>>, vector<1x1x16xf32>
    %74 = vector.shape_cast %73 : vector<1x1x16xf32> to vector<1x16xf32>
    %75 = vector.broadcast %74 : vector<1x16xf32> to vector<16x16xf32>
    %76 = arith.addf %72, %75 : vector<16x16xf32>
    %cst_53 = arith.constant 2.500000e-01 : f32
    %77 = vector.broadcast %cst_53 : f32 to vector<16x16xf32>
    %78 = arith.mulf %62, %77 : vector<16x16xf32>
    %cst_54 = arith.constant dense<0.000000e+00> : vector<16x16xf32>
    %79 = tpu.matmul %78, %69, %cst_54 {dimension_numbers = #tpu.dot_dimension_numbers<[1], [1], [0], [0], [0, 0, 1, 0], [], []>} : vector<16x16xf32>, vector<16x16xf32>, vector<16x16xf32> -> vector<16x16xf32>
    %80 = arith.addf %79, %14 : vector<16x16xf32>
    %cst_55 = arith.constant dense<0xFF800000> : vector<16xf32>
    %81 = vector.multi_reduction <maximumf>, %80, %cst_55 [1] : vector<16x16xf32> to vector<16xf32>
    %82 = vector.shape_cast %81 : vector<16xf32> to vector<16x1xf32>
    %83 = vector.broadcast %82 : vector<16x1xf32> to vector<16x16xf32>
    %84 = arith.subf %80, %83 : vector<16x16xf32>
    %85 = math.exp %84 : vector<16x16xf32>
    %cst_56 = arith.constant dense<0.000000e+00> : vector<16xf32>
    %86 = vector.multi_reduction <add>, %85, %cst_56 [1] : vector<16x16xf32> to vector<16xf32>
    %87 = vector.shape_cast %86 : vector<16xf32> to vector<16x1xf32>
    %88 = tpu.reciprocal %87 : vector<16x1xf32> -> vector<16x1xf32>
    %89 = vector.broadcast %88 : vector<16x1xf32> to vector<16x16xf32>
    %90 = arith.mulf %85, %89 : vector<16x16xf32>
    %cst_57 = arith.constant dense<0.000000e+00> : vector<16x16xf32>
    %91 = tpu.matmul %90, %76, %cst_57 {dimension_numbers = #tpu.dot_dimension_numbers<[1], [0], [0], [1], [0, 0, 1, 1], [], []>} : vector<16x16xf32>, vector<16x16xf32>, vector<16x16xf32> -> vector<16x16xf32>
    %c1_58 = arith.constant 1 : index
    %c0_59 = arith.constant 0 : index
    %c0_60 = arith.constant 0 : index
    %92 = vector.load %arg7[%c1_58, %c0_59, %c0_60] : memref<4x16x64xf32, #tpu.memory_space<vmem>>, vector<1x16x64xf32>
    %93 = vector.shape_cast %92 : vector<1x16x64xf32> to vector<16x64xf32>
    %cst_61 = arith.constant dense<0.000000e+00> : vector<16x64xf32>
    %94 = tpu.matmul %91, %93, %cst_61 {dimension_numbers = #tpu.dot_dimension_numbers<[1], [0], [0], [1], [0, 0, 1, 1], [], []>} : vector<16x16xf32>, vector<16x64xf32>, vector<16x64xf32> -> vector<16x64xf32>
    %95 = arith.addf %55, %94 : vector<16x64xf32>
    %c2 = arith.constant 2 : index
    %c0_62 = arith.constant 0 : index
    %c0_63 = arith.constant 0 : index
    %96 = vector.load %arg5[%c2, %c0_62, %c0_63] : memref<12x64x16xf32, #tpu.memory_space<vmem>>, vector<1x64x16xf32>
    %97 = vector.shape_cast %96 : vector<1x64x16xf32> to vector<64x16xf32>
    %cst_64 = arith.constant dense<0.000000e+00> : vector<16x16xf32>
    %98 = tpu.matmul %13, %97, %cst_64 {dimension_numbers = #tpu.dot_dimension_numbers<[1], [0], [0], [1], [0, 0, 1, 1], [], []>} : vector<16x64xf32>, vector<64x16xf32>, vector<16x16xf32> -> vector<16x16xf32>
    %c2_65 = arith.constant 2 : index
    %c0_66 = arith.constant 0 : index
    %c0_67 = arith.constant 0 : index
    %99 = vector.load %arg6[%c2_65, %c0_66, %c0_67] : memref<12x1x16xf32, #tpu.memory_space<vmem>>, vector<1x1x16xf32>
    %100 = vector.shape_cast %99 : vector<1x1x16xf32> to vector<1x16xf32>
    %101 = vector.broadcast %100 : vector<1x16xf32> to vector<16x16xf32>
    %102 = arith.addf %98, %101 : vector<16x16xf32>
    %c6 = arith.constant 6 : index
    %c0_68 = arith.constant 0 : index
    %c0_69 = arith.constant 0 : index
    %103 = vector.load %arg5[%c6, %c0_68, %c0_69] : memref<12x64x16xf32, #tpu.memory_space<vmem>>, vector<1x64x16xf32>
    %104 = vector.shape_cast %103 : vector<1x64x16xf32> to vector<64x16xf32>
    %cst_70 = arith.constant dense<0.000000e+00> : vector<16x16xf32>
    %105 = tpu.matmul %13, %104, %cst_70 {dimension_numbers = #tpu.dot_dimension_numbers<[1], [0], [0], [1], [0, 0, 1, 1], [], []>} : vector<16x64xf32>, vector<64x16xf32>, vector<16x16xf32> -> vector<16x16xf32>
    %c6_71 = arith.constant 6 : index
    %c0_72 = arith.constant 0 : index
    %c0_73 = arith.constant 0 : index
    %106 = vector.load %arg6[%c6_71, %c0_72, %c0_73] : memref<12x1x16xf32, #tpu.memory_space<vmem>>, vector<1x1x16xf32>
    %107 = vector.shape_cast %106 : vector<1x1x16xf32> to vector<1x16xf32>
    %108 = vector.broadcast %107 : vector<1x16xf32> to vector<16x16xf32>
    %109 = arith.addf %105, %108 : vector<16x16xf32>
    %c10 = arith.constant 10 : index
    %c0_74 = arith.constant 0 : index
    %c0_75 = arith.constant 0 : index
    %110 = vector.load %arg5[%c10, %c0_74, %c0_75] : memref<12x64x16xf32, #tpu.memory_space<vmem>>, vector<1x64x16xf32>
    %111 = vector.shape_cast %110 : vector<1x64x16xf32> to vector<64x16xf32>
    %cst_76 = arith.constant dense<0.000000e+00> : vector<16x16xf32>
    %112 = tpu.matmul %13, %111, %cst_76 {dimension_numbers = #tpu.dot_dimension_numbers<[1], [0], [0], [1], [0, 0, 1, 1], [], []>} : vector<16x64xf32>, vector<64x16xf32>, vector<16x16xf32> -> vector<16x16xf32>
    %c10_77 = arith.constant 10 : index
    %c0_78 = arith.constant 0 : index
    %c0_79 = arith.constant 0 : index
    %113 = vector.load %arg6[%c10_77, %c0_78, %c0_79] : memref<12x1x16xf32, #tpu.memory_space<vmem>>, vector<1x1x16xf32>
    %114 = vector.shape_cast %113 : vector<1x1x16xf32> to vector<1x16xf32>
    %115 = vector.broadcast %114 : vector<1x16xf32> to vector<16x16xf32>
    %116 = arith.addf %112, %115 : vector<16x16xf32>
    %cst_80 = arith.constant 2.500000e-01 : f32
    %117 = vector.broadcast %cst_80 : f32 to vector<16x16xf32>
    %118 = arith.mulf %102, %117 : vector<16x16xf32>
    %cst_81 = arith.constant dense<0.000000e+00> : vector<16x16xf32>
    %119 = tpu.matmul %118, %109, %cst_81 {dimension_numbers = #tpu.dot_dimension_numbers<[1], [1], [0], [0], [0, 0, 1, 0], [], []>} : vector<16x16xf32>, vector<16x16xf32>, vector<16x16xf32> -> vector<16x16xf32>
    %120 = arith.addf %119, %14 : vector<16x16xf32>
    %cst_82 = arith.constant dense<0xFF800000> : vector<16xf32>
    %121 = vector.multi_reduction <maximumf>, %120, %cst_82 [1] : vector<16x16xf32> to vector<16xf32>
    %122 = vector.shape_cast %121 : vector<16xf32> to vector<16x1xf32>
    %123 = vector.broadcast %122 : vector<16x1xf32> to vector<16x16xf32>
    %124 = arith.subf %120, %123 : vector<16x16xf32>
    %125 = math.exp %124 : vector<16x16xf32>
    %cst_83 = arith.constant dense<0.000000e+00> : vector<16xf32>
    %126 = vector.multi_reduction <add>, %125, %cst_83 [1] : vector<16x16xf32> to vector<16xf32>
    %127 = vector.shape_cast %126 : vector<16xf32> to vector<16x1xf32>
    %128 = tpu.reciprocal %127 : vector<16x1xf32> -> vector<16x1xf32>
    %129 = vector.broadcast %128 : vector<16x1xf32> to vector<16x16xf32>
    %130 = arith.mulf %125, %129 : vector<16x16xf32>
    %cst_84 = arith.constant dense<0.000000e+00> : vector<16x16xf32>
    %131 = tpu.matmul %130, %116, %cst_84 {dimension_numbers = #tpu.dot_dimension_numbers<[1], [0], [0], [1], [0, 0, 1, 1], [], []>} : vector<16x16xf32>, vector<16x16xf32>, vector<16x16xf32> -> vector<16x16xf32>
    %c2_85 = arith.constant 2 : index
    %c0_86 = arith.constant 0 : index
    %c0_87 = arith.constant 0 : index
    %132 = vector.load %arg7[%c2_85, %c0_86, %c0_87] : memref<4x16x64xf32, #tpu.memory_space<vmem>>, vector<1x16x64xf32>
    %133 = vector.shape_cast %132 : vector<1x16x64xf32> to vector<16x64xf32>
    %cst_88 = arith.constant dense<0.000000e+00> : vector<16x64xf32>
    %134 = tpu.matmul %131, %133, %cst_88 {dimension_numbers = #tpu.dot_dimension_numbers<[1], [0], [0], [1], [0, 0, 1, 1], [], []>} : vector<16x16xf32>, vector<16x64xf32>, vector<16x64xf32> -> vector<16x64xf32>
    %135 = arith.addf %95, %134 : vector<16x64xf32>
    %c3 = arith.constant 3 : index
    %c0_89 = arith.constant 0 : index
    %c0_90 = arith.constant 0 : index
    %136 = vector.load %arg5[%c3, %c0_89, %c0_90] : memref<12x64x16xf32, #tpu.memory_space<vmem>>, vector<1x64x16xf32>
    %137 = vector.shape_cast %136 : vector<1x64x16xf32> to vector<64x16xf32>
    %cst_91 = arith.constant dense<0.000000e+00> : vector<16x16xf32>
    %138 = tpu.matmul %13, %137, %cst_91 {dimension_numbers = #tpu.dot_dimension_numbers<[1], [0], [0], [1], [0, 0, 1, 1], [], []>} : vector<16x64xf32>, vector<64x16xf32>, vector<16x16xf32> -> vector<16x16xf32>
    %c3_92 = arith.constant 3 : index
    %c0_93 = arith.constant 0 : index
    %c0_94 = arith.constant 0 : index
    %139 = vector.load %arg6[%c3_92, %c0_93, %c0_94] : memref<12x1x16xf32, #tpu.memory_space<vmem>>, vector<1x1x16xf32>
    %140 = vector.shape_cast %139 : vector<1x1x16xf32> to vector<1x16xf32>
    %141 = vector.broadcast %140 : vector<1x16xf32> to vector<16x16xf32>
    %142 = arith.addf %138, %141 : vector<16x16xf32>
    %c7 = arith.constant 7 : index
    %c0_95 = arith.constant 0 : index
    %c0_96 = arith.constant 0 : index
    %143 = vector.load %arg5[%c7, %c0_95, %c0_96] : memref<12x64x16xf32, #tpu.memory_space<vmem>>, vector<1x64x16xf32>
    %144 = vector.shape_cast %143 : vector<1x64x16xf32> to vector<64x16xf32>
    %cst_97 = arith.constant dense<0.000000e+00> : vector<16x16xf32>
    %145 = tpu.matmul %13, %144, %cst_97 {dimension_numbers = #tpu.dot_dimension_numbers<[1], [0], [0], [1], [0, 0, 1, 1], [], []>} : vector<16x64xf32>, vector<64x16xf32>, vector<16x16xf32> -> vector<16x16xf32>
    %c7_98 = arith.constant 7 : index
    %c0_99 = arith.constant 0 : index
    %c0_100 = arith.constant 0 : index
    %146 = vector.load %arg6[%c7_98, %c0_99, %c0_100] : memref<12x1x16xf32, #tpu.memory_space<vmem>>, vector<1x1x16xf32>
    %147 = vector.shape_cast %146 : vector<1x1x16xf32> to vector<1x16xf32>
    %148 = vector.broadcast %147 : vector<1x16xf32> to vector<16x16xf32>
    %149 = arith.addf %145, %148 : vector<16x16xf32>
    %c11 = arith.constant 11 : index
    %c0_101 = arith.constant 0 : index
    %c0_102 = arith.constant 0 : index
    %150 = vector.load %arg5[%c11, %c0_101, %c0_102] : memref<12x64x16xf32, #tpu.memory_space<vmem>>, vector<1x64x16xf32>
    %151 = vector.shape_cast %150 : vector<1x64x16xf32> to vector<64x16xf32>
    %cst_103 = arith.constant dense<0.000000e+00> : vector<16x16xf32>
    %152 = tpu.matmul %13, %151, %cst_103 {dimension_numbers = #tpu.dot_dimension_numbers<[1], [0], [0], [1], [0, 0, 1, 1], [], []>} : vector<16x64xf32>, vector<64x16xf32>, vector<16x16xf32> -> vector<16x16xf32>
    %c11_104 = arith.constant 11 : index
    %c0_105 = arith.constant 0 : index
    %c0_106 = arith.constant 0 : index
    %153 = vector.load %arg6[%c11_104, %c0_105, %c0_106] : memref<12x1x16xf32, #tpu.memory_space<vmem>>, vector<1x1x16xf32>
    %154 = vector.shape_cast %153 : vector<1x1x16xf32> to vector<1x16xf32>
    %155 = vector.broadcast %154 : vector<1x16xf32> to vector<16x16xf32>
    %156 = arith.addf %152, %155 : vector<16x16xf32>
    %cst_107 = arith.constant 2.500000e-01 : f32
    %157 = vector.broadcast %cst_107 : f32 to vector<16x16xf32>
    %158 = arith.mulf %142, %157 : vector<16x16xf32>
    %cst_108 = arith.constant dense<0.000000e+00> : vector<16x16xf32>
    %159 = tpu.matmul %158, %149, %cst_108 {dimension_numbers = #tpu.dot_dimension_numbers<[1], [1], [0], [0], [0, 0, 1, 0], [], []>} : vector<16x16xf32>, vector<16x16xf32>, vector<16x16xf32> -> vector<16x16xf32>
    %160 = arith.addf %159, %14 : vector<16x16xf32>
    %cst_109 = arith.constant dense<0xFF800000> : vector<16xf32>
    %161 = vector.multi_reduction <maximumf>, %160, %cst_109 [1] : vector<16x16xf32> to vector<16xf32>
    %162 = vector.shape_cast %161 : vector<16xf32> to vector<16x1xf32>
    %163 = vector.broadcast %162 : vector<16x1xf32> to vector<16x16xf32>
    %164 = arith.subf %160, %163 : vector<16x16xf32>
    %165 = math.exp %164 : vector<16x16xf32>
    %cst_110 = arith.constant dense<0.000000e+00> : vector<16xf32>
    %166 = vector.multi_reduction <add>, %165, %cst_110 [1] : vector<16x16xf32> to vector<16xf32>
    %167 = vector.shape_cast %166 : vector<16xf32> to vector<16x1xf32>
    %168 = tpu.reciprocal %167 : vector<16x1xf32> -> vector<16x1xf32>
    %169 = vector.broadcast %168 : vector<16x1xf32> to vector<16x16xf32>
    %170 = arith.mulf %165, %169 : vector<16x16xf32>
    %cst_111 = arith.constant dense<0.000000e+00> : vector<16x16xf32>
    %171 = tpu.matmul %170, %156, %cst_111 {dimension_numbers = #tpu.dot_dimension_numbers<[1], [0], [0], [1], [0, 0, 1, 1], [], []>} : vector<16x16xf32>, vector<16x16xf32>, vector<16x16xf32> -> vector<16x16xf32>
    %c3_112 = arith.constant 3 : index
    %c0_113 = arith.constant 0 : index
    %c0_114 = arith.constant 0 : index
    %172 = vector.load %arg7[%c3_112, %c0_113, %c0_114] : memref<4x16x64xf32, #tpu.memory_space<vmem>>, vector<1x16x64xf32>
    %173 = vector.shape_cast %172 : vector<1x16x64xf32> to vector<16x64xf32>
    %cst_115 = arith.constant dense<0.000000e+00> : vector<16x64xf32>
    %174 = tpu.matmul %171, %173, %cst_115 {dimension_numbers = #tpu.dot_dimension_numbers<[1], [0], [0], [1], [0, 0, 1, 1], [], []>} : vector<16x16xf32>, vector<16x64xf32>, vector<16x64xf32> -> vector<16x64xf32>
    %175 = arith.addf %135, %174 : vector<16x64xf32>
    %176 = vector.broadcast %2 : vector<1x64xf32> to vector<16x64xf32>
    %177 = arith.addf %175, %176 : vector<16x64xf32>
    %178 = arith.addf %13, %177 : vector<16x64xf32>
    %cst_116 = arith.constant dense<0.000000e+00> : vector<16xf32>
    %179 = vector.multi_reduction <add>, %178, %cst_116 [1] : vector<16x64xf32> to vector<16xf32>
    %180 = vector.shape_cast %179 : vector<16xf32> to vector<16x1xf32>
    %cst_117 = arith.constant 6.400000e+01 : f32
    %181 = vector.broadcast %cst_117 : f32 to vector<16x1xf32>
    %182 = arith.divf %180, %181 : vector<16x1xf32>
    %183 = vector.broadcast %182 : vector<16x1xf32> to vector<16x64xf32>
    %184 = arith.subf %178, %183 : vector<16x64xf32>
    %185 = arith.mulf %184, %184 : vector<16x64xf32>
    %cst_118 = arith.constant dense<0.000000e+00> : vector<16xf32>
    %186 = vector.multi_reduction <add>, %185, %cst_118 [1] : vector<16x64xf32> to vector<16xf32>
    %187 = vector.shape_cast %186 : vector<16xf32> to vector<16x1xf32>
    %cst_119 = arith.constant 6.400000e+01 : f32
    %188 = vector.broadcast %cst_119 : f32 to vector<16x1xf32>
    %189 = arith.divf %187, %188 : vector<16x1xf32>
    %190 = vector.broadcast %182 : vector<16x1xf32> to vector<16x64xf32>
    %191 = arith.subf %178, %190 : vector<16x64xf32>
    %cst_120 = arith.constant 9.99999974E-6 : f32
    %192 = vector.broadcast %cst_120 : f32 to vector<16x1xf32>
    %193 = arith.addf %189, %192 : vector<16x1xf32>
    %194 = math.rsqrt %193 : vector<16x1xf32>
    %195 = vector.broadcast %194 : vector<16x1xf32> to vector<16x64xf32>
    %196 = arith.mulf %191, %195 : vector<16x64xf32>
    %197 = vector.broadcast %3 : vector<1x64xf32> to vector<16x64xf32>
    %198 = arith.mulf %196, %197 : vector<16x64xf32>
    %199 = vector.broadcast %4 : vector<1x64xf32> to vector<16x64xf32>
    %200 = arith.addf %198, %199 : vector<16x64xf32>
    %201 = arith.truncf %200 : vector<16x64xf32> to vector<16x64xbf16>
    %c0_121 = arith.constant 0 : index
    %c0_122 = arith.constant 0 : index
    %202 = vector.load %arg8[%c0_121, %c0_122] : memref<64x2048xbf16, #tpu.memory_space<vmem>>, vector<64x2048xbf16>
    %cst_123 = arith.constant dense<0.000000e+00> : vector<16x2048xf32>
    %203 = tpu.matmul %201, %202, %cst_123 {dimension_numbers = #tpu.dot_dimension_numbers<[1], [0], [0], [1], [0, 0, 1, 1], [], []>} : vector<16x64xbf16>, vector<64x2048xbf16>, vector<16x2048xf32> -> vector<16x2048xf32>
    %c0_124 = arith.constant 0 : index
    %c0_125 = arith.constant 0 : index
    %204 = vector.load %arg9[%c0_124, %c0_125] : memref<1x2048xf32, #tpu.memory_space<vmem>>, vector<1x2048xf32>
    %205 = vector.broadcast %204 : vector<1x2048xf32> to vector<16x2048xf32>
    %206 = arith.addf %203, %205 : vector<16x2048xf32>
    %cst_126 = arith.constant 0.000000e+00 : f32
    %207 = vector.broadcast %cst_126 : f32 to vector<16x2048xf32>
    %208 = arith.maximumf %206, %207 : vector<16x2048xf32>
    %209 = arith.truncf %208 : vector<16x2048xf32> to vector<16x2048xbf16>
    %c0_127 = arith.constant 0 : index
    %c0_128 = arith.constant 0 : index
    %210 = vector.load %arg10[%c0_127, %c0_128] : memref<2048x64xbf16, #tpu.memory_space<vmem>>, vector<2048x64xbf16>
    %cst_129 = arith.constant dense<0.000000e+00> : vector<16x64xf32>
    %211 = tpu.matmul %209, %210, %cst_129 {dimension_numbers = #tpu.dot_dimension_numbers<[1], [0], [0], [1], [0, 0, 1, 1], [], []>} : vector<16x2048xbf16>, vector<2048x64xbf16>, vector<16x64xf32> -> vector<16x64xf32>
    %212 = vector.broadcast %7 : vector<1x64xf32> to vector<16x64xf32>
    %213 = arith.addf %211, %212 : vector<16x64xf32>
    %214 = arith.addf %200, %213 : vector<16x64xf32>
    %c0_130 = arith.constant 0 : index
    %c0_131 = arith.constant 0 : index
    %215 = vector.load %arg12[%c0_130, %c0_131] : memref<16x64xf32, #tpu.memory_space<vmem>>, vector<16x64xf32>
    tpu.vector_store %arg12[%c0_130, %c0_131], %214 {strides = array<i32>} : memref<16x64xf32, #tpu.memory_space<vmem>>, vector<16x64xf32>,
    %c7_132 = arith.constant 7 : index
    %c0_133 = arith.constant 0 : index
    %216 = tpu.strided_load %arg12[%c7_132, %c0_133] {strides = array<i32: 8, 1>} : memref<16x64xf32, #tpu.memory_space<vmem>>, vector<2x64xf32>
    %cst_134 = arith.constant dense<0.000000e+00> : vector<2xf32>
    %217 = vector.multi_reduction <add>, %216, %cst_134 [1] : vector<2x64xf32> to vector<2xf32>
    %218 = vector.shape_cast %217 : vector<2xf32> to vector<2x1xf32>
    %cst_135 = arith.constant 6.400000e+01 : f32
    %219 = vector.broadcast %cst_135 : f32 to vector<2x1xf32>
    %220 = arith.divf %218, %219 : vector<2x1xf32>
    %221 = vector.broadcast %220 : vector<2x1xf32> to vector<2x64xf32>
    %222 = arith.subf %216, %221 : vector<2x64xf32>
    %223 = arith.mulf %222, %222 : vector<2x64xf32>
    %cst_136 = arith.constant dense<0.000000e+00> : vector<2xf32>
    %224 = vector.multi_reduction <add>, %223, %cst_136 [1] : vector<2x64xf32> to vector<2xf32>
    %225 = vector.shape_cast %224 : vector<2xf32> to vector<2x1xf32>
    %cst_137 = arith.constant 6.400000e+01 : f32
    %226 = vector.broadcast %cst_137 : f32 to vector<2x1xf32>
    %227 = arith.divf %225, %226 : vector<2x1xf32>
    %228 = vector.broadcast %220 : vector<2x1xf32> to vector<2x64xf32>
    %229 = arith.subf %216, %228 : vector<2x64xf32>
    %cst_138 = arith.constant 9.99999974E-6 : f32
    %230 = vector.broadcast %cst_138 : f32 to vector<2x1xf32>
    %231 = arith.addf %227, %230 : vector<2x1xf32>
    %232 = math.rsqrt %231 : vector<2x1xf32>
    %233 = vector.broadcast %232 : vector<2x1xf32> to vector<2x64xf32>
    %234 = arith.mulf %229, %233 : vector<2x64xf32>
    %235 = vector.broadcast %5 : vector<1x64xf32> to vector<2x64xf32>
    %236 = arith.mulf %234, %235 : vector<2x64xf32>
    %237 = vector.broadcast %6 : vector<1x64xf32> to vector<2x64xf32>
    %238 = arith.addf %236, %237 : vector<2x64xf32>
    %c0_139 = arith.constant 0 : index
    %c0_140 = arith.constant 0 : index
    %239 = vector.load %arg11[%c0_139, %c0_140] : memref<2x64xf32, #tpu.memory_space<vmem>>, vector<2x64xf32>
    tpu.vector_store %arg11[%c0_139, %c0_140], %238 {strides = array<i32>} : memref<2x64xf32, #tpu.memory_space<vmem>>, vector<2x64xf32>,
    return
  }
  func.func @transform_0(%arg0: i32) -> (i32, i32) {
    %c0_i32 = arith.constant 0 : i32
    %c0_i32_0 = arith.constant 0 : i32
    return %arg0, %c0_i32 : i32, i32
  }
  func.func @transform_1(%arg0: i32) -> (i32, i32) {
    %c0_i32 = arith.constant 0 : i32
    %c0_i32_0 = arith.constant 0 : i32
    %c0_i32_1 = arith.constant 0 : i32
    return %c0_i32, %c0_i32_0 : i32, i32
  }
  func.func @transform_2(%arg0: i32) -> (i32, i32) {
    %c0_i32 = arith.constant 0 : i32
    %c0_i32_0 = arith.constant 0 : i32
    %c0_i32_1 = arith.constant 0 : i32
    return %c0_i32, %c0_i32_0 : i32, i32
  }
  func.func @transform_3(%arg0: i32) -> (i32, i32) {
    %c0_i32 = arith.constant 0 : i32
    %c0_i32_0 = arith.constant 0 : i32
    %c0_i32_1 = arith.constant 0 : i32
    return %c0_i32, %c0_i32_0 : i32, i32
  }
  func.func @transform_4(%arg0: i32) -> (i32, i32, i32) {
    %c0_i32 = arith.constant 0 : i32
    %c0_i32_0 = arith.constant 0 : i32
    %c0_i32_1 = arith.constant 0 : i32
    %c0_i32_2 = arith.constant 0 : i32
    return %c0_i32, %c0_i32_0, %c0_i32_1 : i32, i32, i32
  }
  func.func @transform_5(%arg0: i32) -> (i32, i32, i32) {
    %c0_i32 = arith.constant 0 : i32
    %c0_i32_0 = arith.constant 0 : i32
    %c0_i32_1 = arith.constant 0 : i32
    %c0_i32_2 = arith.constant 0 : i32
    return %c0_i32, %c0_i32_0, %c0_i32_1 : i32, i32, i32
  }
  func.func @transform_6(%arg0: i32) -> (i32, i32, i32) {
    %c0_i32 = arith.constant 0 : i32
    %c0_i32_0 = arith.constant 0 : i32
    %c0_i32_1 = arith.constant 0 : i32
    %c0_i32_2 = arith.constant 0 : i32
    return %c0_i32, %c0_i32_0, %c0_i32_1 : i32, i32, i32
  }
  func.func @transform_7(%arg0: i32) -> (i32, i32) {
    %c0_i32 = arith.constant 0 : i32
    %c0_i32_0 = arith.constant 0 : i32
    %c0_i32_1 = arith.constant 0 : i32
    return %c0_i32, %c0_i32_0 : i32, i32
  }
  func.func @transform_8(%arg0: i32) -> (i32, i32) {
    %c0_i32 = arith.constant 0 : i32
    %c0_i32_0 = arith.constant 0 : i32
    %c0_i32_1 = arith.constant 0 : i32
    return %c0_i32, %c0_i32_0 : i32, i32
  }
  func.func @transform_9(%arg0: i32) -> (i32, i32) {
    %c0_i32 = arith.constant 0 : i32
    %c0_i32_0 = arith.constant 0 : i32
    %c0_i32_1 = arith.constant 0 : i32
    return %c0_i32, %c0_i32_0 : i32, i32
  }
  func.func @transform_10(%arg0: i32) -> (i32, i32) {
    %c0_i32 = arith.constant 0 : i32
    %c0_i32_0 = arith.constant 0 : i32
    return %arg0, %c0_i32 : i32, i32
  }
}

</mosaic_0001>

<llo_original>
// kernel: tpu_custom_call.1
$region0: #{tpu_custom_call.1}
  #allocation0 [shape = 'u32[]', space=smem, size = 0x4, offset = 0x4, fixed_abs, tag = 'smem constant byte address 0x4 - core index']
  #allocation1 [shape = 'u32[144,128]{1,0:T(1,128)}', space=vmem, size = 0x12000, scoped, tag = 'internal scratch']
  #allocation2 [shape = 'f32[16,64]{1,0:T(8,128)}', space=vmem, size = 0x2000, scoped, tag = 'scratch operand']
  %s0 = inlined_call_operand.vmem [shape: f32[16,1], index: 0, kind: input, shape index: {}]
  %s1 = inlined_call_operand.vmem [shape: f32[16,64], index: 1, kind: input, shape index: {}]
  %s2 = inlined_call_operand.vmem [shape: f32[16,16], index: 2, kind: input, shape index: {}]
  %s3 = inlined_call_operand.vmem [shape: f32[8,64], index: 3, kind: input, shape index: {}]
  %s4 = inlined_call_operand.vmem [shape: f32[12,64,16], index: 4, kind: input, shape index: {}]
  %s5 = inlined_call_operand.vmem [shape: f32[12,1,16], index: 5, kind: input, shape index: {}]
  %s6 = inlined_call_operand.vmem [shape: f32[4,16,64], index: 6, kind: input, shape index: {}]
  %s7 = inlined_call_operand.vmem [shape: bf16[64,2048], index: 7, kind: input, shape index: {}]
  %s8 = inlined_call_operand.vmem [shape: f32[1,2048], index: 8, kind: input, shape index: {}]
  %s9 = inlined_call_operand.vmem [shape: bf16[2048,64], index: 9, kind: input, shape index: {}]
  %s10 = inlined_call_operand.hbm [shape: f32[2,64], index: 10, kind: output, shape index: {}]
  %s11 = sld [smem:[#allocation0]]
  $region50: #{tpu_custom_call.1} parent=0
    _
  %s13 = ssub.s32 1, %s11
  %s14 = scalar_select 0, %s13, %s11
  $region1: #{tpu_custom_call.1} parent=0
    #allocation3 [shape = 'u8[1024]{0}', space=vmem, size = 0x400, scoped, tag = 'output window, operand 0, single buffered']
    #allocation4 [shape = 's32[1]{0}', space=sflag, size = 0x4, scoped, tag = 'scoped memory for tpu_custom_call.1']
    %15 = vsyncpa [#allocation4], 0
    // Predicated region
    $region2: #{tpu_custom_call.1} parent=1 // pred_check
      _
    $region3: #{tpu_custom_call.1} parent=1 // pred_check_branch
      %17 = sbr.rel (0) target = $region5
    $region4: #{tpu_custom_call.1} parent=1 // pred_region
      _
    $region5: #{tpu_custom_call.1} parent=1 // pred_fallthru
      _
    // Predicated region
    $region6: #{tpu_custom_call.1} parent=1 // pred_check
      _
    $region7: #{tpu_custom_call.1} parent=1 // pred_check_branch
      %19 = sbr.rel (0) target = $region9
    $region8: #{tpu_custom_call.1} parent=1 // pred_region
      _
    $region9: #{tpu_custom_call.1} parent=1 // pred_fallthru
      _
    // Predicated region
    $region10: #{tpu_custom_call.1} parent=1 // pred_check
      _
    $region11: #{tpu_custom_call.1} parent=1 // pred_check_branch
      %21 = sbr.rel (0) target = $region13
    $region12: #{tpu_custom_call.1} parent=1 // pred_region
      _
    $region13: #{tpu_custom_call.1} parent=1 // pred_fallthru
      _
    // Predicated region
    $region14: #{tpu_custom_call.1} parent=1 // pred_check
      _
    $region15: #{tpu_custom_call.1} parent=1 // pred_check_branch
      %23 = sbr.rel (0) target = $region17
    $region16: #{tpu_custom_call.1} parent=1 // pred_region
      _
    $region17: #{tpu_custom_call.1} parent=1 // pred_fallthru
      _
    // Predicated region
    $region18: #{tpu_custom_call.1} parent=1 // pred_check
      _
    $region19: #{tpu_custom_call.1} parent=1 // pred_check_branch
      %25 = sbr.rel (0) target = $region21
    $region20: #{tpu_custom_call.1} parent=1 // pred_region
      _
    $region21: #{tpu_custom_call.1} parent=1 // pred_fallthru
      _
    // Predicated region
    $region22: #{tpu_custom_call.1} parent=1 // pred_check
      _
    $region23: #{tpu_custom_call.1} parent=1 // pred_check_branch
      %27 = sbr.rel (0) target = $region25
    $region24: #{tpu_custom_call.1} parent=1 // pred_region
      _
    $region25: #{tpu_custom_call.1} parent=1 // pred_fallthru
      _
    // Predicated region
    $region26: #{tpu_custom_call.1} parent=1 // pred_check
      _
    $region27: #{tpu_custom_call.1} parent=1 // pred_check_branch
      %29 = sbr.rel (0) target = $region29
    $region28: #{tpu_custom_call.1} parent=1 // pred_region
      _
    $region29: #{tpu_custom_call.1} parent=1 // pred_fallthru
      _
    // Predicated region
    $region30: #{tpu_custom_call.1} parent=1 // pred_check
      _
    $region31: #{tpu_custom_call.1} parent=1 // pred_check_branch
      %31 = sbr.rel (0) target = $region33
    $region32: #{tpu_custom_call.1} parent=1 // pred_region
      _
    $region33: #{tpu_custom_call.1} parent=1 // pred_fallthru
      _
    // Predicated region
    $region34: #{tpu_custom_call.1} parent=1 // pred_check
      _
    $region35: #{tpu_custom_call.1} parent=1 // pred_check_branch
      %33 = sbr.rel (0) target = $region37
    $region36: #{tpu_custom_call.1} parent=1 // pred_region
      _
    $region37: #{tpu_custom_call.1} parent=1 // pred_fallthru
      _
    // Predicated region
    $region38: #{tpu_custom_call.1} parent=1 // pred_check
      _
    $region39: #{tpu_custom_call.1} parent=1 // pred_check_branch
      %35 = sbr.rel (0) target = $region41
    $region40: #{tpu_custom_call.1} parent=1 // pred_region
      _
    $region41: #{tpu_custom_call.1} parent=1 // pred_fallthru
      _
    %v37 = vld [vmem:[%s3] sm:$0xff]
    %v38 = vld [vmem:[%s0] sm:$0xff]
    %v39 = vld [vmem:[%s0 + $0x8] sm:$0xff]
    %41 = vset.pattern.permute.xlu0 0
    %42 = vperm.xlu0 %41, %v38
    %v43 = vpop.permute.xlu0 %42
    %46 = vset.pattern.permute.xlu0 0
    %47 = vperm.xlu0 %46, %v39
    %v48 = vpop.permute.xlu0 %47
    %v50 = vlaneseq
    %v51 = vshrl.u32 %v50, 7
    %v52 = vsub.s32 0, %v51
    %v53 = vrot.slane %v37, %v52
    %v54 = vmul.f32 %v43, %v53
    %v55 = vmul.f32 %v48, %v53
    %v56 = vld [vmem:[%s1] sm:$0xff]
    %v57 = vld [vmem:[%s1 + $0x8] sm:$0xff]
    %v58 = vadd.f32 %v54, %v56
    %v59 = vadd.f32 %v55, %v57
    %v60 = vld [vmem:[%s2] sm:$0xff]
    %v61 = vld [vmem:[%s2 + $0x8] sm:$0xff]
    %v62 = vld [vmem:[%s4] sm:$0xff]
    %v63 = vld [vmem:[%s4 + $0x8] sm:$0xff]
    %v64 = vld [vmem:[%s4 + $0x10] sm:$0xff]
    %v65 = vld [vmem:[%s4 + $0x18] sm:$0xff]
    %v66 = vld [vmem:[%s4 + $0x20] sm:$0xff]
    %v67 = vld [vmem:[%s4 + $0x28] sm:$0xff]
    %v68 = vld [vmem:[%s4 + $0x30] sm:$0xff]
    %v69 = vld [vmem:[%s4 + $0x38] sm:$0xff]
    %v70 = vld [vmem:[%s5] sm:$0x1]
    %v72 = vlaneseq
    %v73 = vshrl.u32 %v72, 7
    %v74 = vsub.s32 0, %v73
    %v75 = vrot.slane %v70, %v74
    %vm77 = vcmask 523264
    %v79 = vsel %vm77, %v58, 0
    %v82 = vsel %vm77, %v59, 0
    %84 = vmatprep.subr.mxu0 0.0
    %85 = vmatpush1.msra.mxu0 0.0
    %86 = vmatprep.subr.mxu0 0.0
    %87 = vmatpush1.msra.mxu0 0.0
    %88 = vmatprep.subr.mxu0 0.0
    %89 = vmatpush1.msra.mxu0 0.0
    %90 = vmatprep.subr.mxu0 0.0
    %91 = vmatpush1.msra.mxu0 0.0
    %92 = vmatprep.subr.mxu0 0.0
    %93 = vmatpush1.msra.mxu0 0.0
    %94 = vmatprep.subr.mxu0 0.0
    %95 = vmatpush1.msra.mxu0 0.0
    %96 = vmatprep.subr.mxu0 0.0
    %97 = vmatpush1.msra.mxu0 0.0
    %98 = vmatprep.subr.mxu0 0.0
    %99 = vmatpush1.msra.mxu0 0.0
    %100 = vmatprep.subr.mxu0 0.0
    %101 = vmatpush1.msra.mxu0 %v69
    %102 = vmatprep.subr.mxu0 0.0
    %103 = vmatpush1.msra.mxu0 %v68
    %104 = vmatprep.subr.mxu0 0.0
    %105 = vmatpush1.msra.mxu0 %v67
    %106 = vmatprep.subr.mxu0 0.0
    %107 = vmatpush1.msra.mxu0 %v66
    %108 = vmatprep.subr.mxu0 0.0
    %109 = vmatpush1.msra.mxu0 %v65
    %110 = vmatprep.subr.mxu0 0.0
    %111 = vmatpush1.msra.mxu0 %v64
    %112 = vmatprep.subr.mxu0 0.0
    %113 = vmatpush1.msra.mxu0 %v63
    %114 = vmatprep.subr.mxu0 0.0
    %115 = vmatpush1.msra.mxu0 %v62
    %116 = vmatprep.subr.mxu0 0.0
    %117 = vmatpush2.msra.mxu0 0.0
    %118 = vmatprep.subr.mxu0 0.0
    %119 = vmatpush2.msra.mxu0 0.0
    %120 = vmatprep.subr.mxu0 0.0
    %121 = vmatpush2.msra.mxu0 0.0
    %122 = vmatprep.subr.mxu0 0.0
    %123 = vmatpush2.msra.mxu0 0.0
    %124 = vmatprep.subr.mxu0 0.0
    %125 = vmatpush2.msra.mxu0 0.0
    %126 = vmatprep.subr.mxu0 0.0
    %127 = vmatpush2.msra.mxu0 0.0
    %128 = vmatprep.subr.mxu0 0.0
    %129 = vmatpush2.msra.mxu0 0.0
    %130 = vmatprep.subr.mxu0 0.0
    %131 = vmatpush2.msra.mxu0 0.0
    %132 = vmatprep.subr.mxu0 0.0
    %133 = vmatpush2.msra.mxu0 0.0
    %134 = vmatprep.subr.mxu0 0.0
    %135 = vmatpush2.msra.mxu0 0.0
    %136 = vmatprep.subr.mxu0 0.0
    %137 = vmatpush2.msra.mxu0 0.0
    %138 = vmatprep.subr.mxu0 0.0
    %139 = vmatpush2.msra.mxu0 0.0
    %140 = vmatprep.subr.mxu0 0.0
    %141 = vmatpush2.msra.mxu0 0.0
    %142 = vmatprep.subr.mxu0 0.0
    %143 = vmatpush2.msra.mxu0 0.0
    %144 = vmatprep.subr.mxu0 0.0
    %145 = vmatpush2.msra.mxu0 0.0
    %146 = vmatprep.subr.mxu0 0.0
    %147 = vmatpush2.msra.mxu0 0.0
    %148 = vmatprep.mubr.f32.mxu0 0.0
    %149 = vmatmul.mubr.f32.gmra.mxu0 %v79
    %v150 = vpop.f32.mrf.mxu0
    %v151 = vadd.f32 %v75, %v150
    %v152 = vpop.f32.mrf.mxu0
    %153 = vmatprep.mubr.f32.mxu0 0.0
    %154 = vmatmul.mubr.f32.gmra.mxu0 %v82
    %v155 = vpop.f32.mrf.mxu0
    %v156 = vadd.f32 %v75, %v155
    %v157 = vpop.f32.mrf.mxu0
    %158 = vdwg.mxu0
    %s159 = scalar_lea.vmem %s4, 256
    %v160 = vld [vmem:[%s159] sm:$0xff]
    %v161 = vld [vmem:[%s159 + $0x8] sm:$0xff]
    %v162 = vld [vmem:[%s159 + $0x10] sm:$0xff]
    %v163 = vld [vmem:[%s159 + $0x18] sm:$0xff]
    %v164 = vld [vmem:[%s159 + $0x20] sm:$0xff]
    %v165 = vld [vmem:[%s159 + $0x28] sm:$0xff]
    %v166 = vld [vmem:[%s159 + $0x30] sm:$0xff]
    %v167 = vld [vmem:[%s159 + $0x38] sm:$0xff]
    %s168 = scalar_lea.vmem %s5, 4
    %v169 = vld [vmem:[%s168] sm:$0x1]
    %v171 = vlaneseq
    %v172 = vshrl.u32 %v171, 7
    %v173 = vsub.s32 0, %v172
    %v174 = vrot.slane %v169, %v173
    %176 = vmatprep.subr.mxu0 0.0
    %177 = vmatpush1.msra.mxu0 0.0
    %178 = vmatprep.subr.mxu0 0.0
    %179 = vmatpush1.msra.mxu0 0.0
    %180 = vmatprep.subr.mxu0 0.0
    %181 = vmatpush1.msra.mxu0 0.0
    %182 = vmatprep.subr.mxu0 0.0
    %183 = vmatpush1.msra.mxu0 0.0
    %184 = vmatprep.subr.mxu0 0.0
    %185 = vmatpush1.msra.mxu0 0.0
    %186 = vmatprep.subr.mxu0 0.0
    %187 = vmatpush1.msra.mxu0 0.0
    %188 = vmatprep.subr.mxu0 0.0
    %189 = vmatpush1.msra.mxu0 0.0
    %190 = vmatprep.subr.mxu0 0.0
    %191 = vmatpush1.msra.mxu0 0.0
    %192 = vmatprep.subr.mxu0 0.0
    %193 = vmatpush1.msra.mxu0 %v167
    %194 = vmatprep.subr.mxu0 0.0
    %195 = vmatpush1.msra.mxu0 %v166
    %196 = vmatprep.subr.mxu0 0.0
    %197 = vmatpush1.msra.mxu0 %v165
    %198 = vmatprep.subr.mxu0 0.0
    %199 = vmatpush1.msra.mxu0 %v164
    %200 = vmatprep.subr.mxu0 0.0
    %201 = vmatpush1.msra.mxu0 %v163
    %202 = vmatprep.subr.mxu0 0.0
    %203 = vmatpush1.msra.mxu0 %v162
    %204 = vmatprep.subr.mxu0 0.0
    %205 = vmatpush1.msra.mxu0 %v161
    %206 = vmatprep.subr.mxu0 0.0
    %207 = vmatpush1.msra.mxu0 %v160
    %208 = vmatprep.subr.mxu0 0.0
    %209 = vmatpush2.msra.mxu0 0.0
    %210 = vmatprep.subr.mxu0 0.0
    %211 = vmatpush2.msra.mxu0 0.0
    %212 = vmatprep.subr.mxu0 0.0
    %213 = vmatpush2.msra.mxu0 0.0
    %214 = vmatprep.subr.mxu0 0.0
    %215 = vmatpush2.msra.mxu0 0.0
    %216 = vmatprep.subr.mxu0 0.0
    %217 = vmatpush2.msra.mxu0 0.0
    %218 = vmatprep.subr.mxu0 0.0
    %219 = vmatpush2.msra.mxu0 0.0
    %220 = vmatprep.subr.mxu0 0.0
    %221 = vmatpush2.msra.mxu0 0.0
    %222 = vmatprep.subr.mxu0 0.0
    %223 = vmatpush2.msra.mxu0 0.0
    %224 = vmatprep.subr.mxu0 0.0
    %225 = vmatpush2.msra.mxu0 0.0
    %226 = vmatprep.subr.mxu0 0.0
    %227 = vmatpush2.msra.mxu0 0.0
    %228 = vmatprep.subr.mxu0 0.0
    %229 = vmatpush2.msra.mxu0 0.0
    %230 = vmatprep.subr.mxu0 0.0
    %231 = vmatpush2.msra.mxu0 0.0
    %232 = vmatprep.subr.mxu0 0.0
    %233 = vmatpush2.msra.mxu0 0.0
    %234 = vmatprep.subr.mxu0 0.0
    %235 = vmatpush2.msra.mxu0 0.0
    %236 = vmatprep.subr.mxu0 0.0
    %237 = vmatpush2.msra.mxu0 0.0
    %238 = vmatprep.subr.mxu0 0.0
    %239 = vmatpush2.msra.mxu0 0.0
    %240 = vmatprep.mubr.f32.mxu0 0.0
    %241 = vmatmul.mubr.f32.gmra.mxu0 %v79
    %v242 = vpop.f32.mrf.mxu0
    %v243 = vadd.f32 %v174, %v242
    %v244 = vpop.f32.mrf.mxu0
    %245 = vmatprep.mubr.f32.mxu0 0.0
    %246 = vmatmul.mubr.f32.gmra.mxu0 %v82
    %v247 = vpop.f32.mrf.mxu0
    %v248 = vadd.f32 %v174, %v247
    %v249 = vpop.f32.mrf.mxu0
    %250 = vdwg.mxu0
    %s251 = scalar_lea.vmem %s4, 512
    %v252 = vld [vmem:[%s251] sm:$0xff]
    %v253 = vld [vmem:[%s251 + $0x8] sm:$0xff]
    %v254 = vld [vmem:[%s251 + $0x10] sm:$0xff]
    %v255 = vld [vmem:[%s251 + $0x18] sm:$0xff]
    %v256 = vld [vmem:[%s251 + $0x20] sm:$0xff]
    %v257 = vld [vmem:[%s251 + $0x28] sm:$0xff]
    %v258 = vld [vmem:[%s251 + $0x30] sm:$0xff]
    %v259 = vld [vmem:[%s251 + $0x38] sm:$0xff]
    %s260 = scalar_lea.vmem %s5, 8
    %v261 = vld [vmem:[%s260] sm:$0x1]
    %v263 = vlaneseq
    %v264 = vshrl.u32 %v263, 7
    %v265 = vsub.s32 0, %v264
    %v266 = vrot.slane %v261, %v265
    %268 = vmatprep.subr.mxu0 0.0
    %269 = vmatpush1.msra.mxu0 0.0
    %270 = vmatprep.subr.mxu0 0.0
    %271 = vmatpush1.msra.mxu0 0.0
    %272 = vmatprep.subr.mxu0 0.0
    %273 = vmatpush1.msra.mxu0 0.0
    %274 = vmatprep.subr.mxu0 0.0
    %275 = vmatpush1.msra.mxu0 0.0
    %276 = vmatprep.subr.mxu0 0.0
    %277 = vmatpush1.msra.mxu0 0.0
    %278 = vmatprep.subr.mxu0 0.0
    %279 = vmatpush1.msra.mxu0 0.0
    %280 = vmatprep.subr.mxu0 0.0
    %281 = vmatpush1.msra.mxu0 0.0
    %282 = vmatprep.subr.mxu0 0.0
    %283 = vmatpush1.msra.mxu0 0.0
    %284 = vmatprep.subr.mxu0 0.0
    %285 = vmatpush1.msra.mxu0 %v259
    %286 = vmatprep.subr.mxu0 0.0
    %287 = vmatpush1.msra.mxu0 %v258
    %288 = vmatprep.subr.mxu0 0.0
    %289 = vmatpush1.msra.mxu0 %v257
    %290 = vmatprep.subr.mxu0 0.0
    %291 = vmatpush1.msra.mxu0 %v256
    %292 = vmatprep.subr.mxu0 0.0
    %293 = vmatpush1.msra.mxu0 %v255
    %294 = vmatprep.subr.mxu0 0.0
    %295 = vmatpush1.msra.mxu0 %v254
    %296 = vmatprep.subr.mxu0 0.0
    %297 = vmatpush1.msra.mxu0 %v253
    %298 = vmatprep.subr.mxu0 0.0
    %299 = vmatpush1.msra.mxu0 %v252
    %300 = vmatprep.subr.mxu0 0.0
    %301 = vmatpush2.msra.mxu0 0.0
    %302 = vmatprep.subr.mxu0 0.0
    %303 = vmatpush2.msra.mxu0 0.0
    %304 = vmatprep.subr.mxu0 0.0
    %305 = vmatpush2.msra.mxu0 0.0
    %306 = vmatprep.subr.mxu0 0.0
    %307 = vmatpush2.msra.mxu0 0.0
    %308 = vmatprep.subr.mxu0 0.0
    %309 = vmatpush2.msra.mxu0 0.0
    %310 = vmatprep.subr.mxu0 0.0
    %311 = vmatpush2.msra.mxu0 0.0
    %312 = vmatprep.subr.mxu0 0.0
    %313 = vmatpush2.msra.mxu0 0.0
    %314 = vmatprep.subr.mxu0 0.0
    %315 = vmatpush2.msra.mxu0 0.0
    %316 = vmatprep.subr.mxu0 0.0
    %317 = vmatpush2.msra.mxu0 0.0
    %318 = vmatprep.subr.mxu0 0.0
    %319 = vmatpush2.msra.mxu0 0.0
    %320 = vmatprep.subr.mxu0 0.0
    %321 = vmatpush2.msra.mxu0 0.0
    %322 = vmatprep.subr.mxu0 0.0
    %323 = vmatpush2.msra.mxu0 0.0
    %324 = vmatprep.subr.mxu0 0.0
    %325 = vmatpush2.msra.mxu0 0.0
    %326 = vmatprep.subr.mxu0 0.0
    %327 = vmatpush2.msra.mxu0 0.0
    %328 = vmatprep.subr.mxu0 0.0
    %329 = vmatpush2.msra.mxu0 0.0
    %330 = vmatprep.subr.mxu0 0.0
    %331 = vmatpush2.msra.mxu0 0.0
    %332 = vmatprep.mubr.f32.mxu0 0.0
    %333 = vmatmul.mubr.f32.gmra.mxu0 %v79
    %v334 = vpop.f32.mrf.mxu0
    %v335 = vadd.f32 %v266, %v334
    %v336 = vpop.f32.mrf.mxu0
    %337 = vmatprep.mubr.f32.mxu0 0.0
    %338 = vmatmul.mubr.f32.gmra.mxu0 %v82
    %v339 = vpop.f32.mrf.mxu0
    %v340 = vadd.f32 %v266, %v339
    %v341 = vpop.f32.mrf.mxu0
    %342 = vdwg.mxu0
    %v343 = vmul.f32 %v151, 0.25
    %v344 = vmul.f32 %v156, 0.25
    %vm345 = vcmask 130048
    %v347 = vsel %vm345, %v343, 0
    %v350 = vsel %vm345, %v344, 0
    %v353 = vsel %vm345, %v243, 0
    %v356 = vsel %vm345, %v248, 0
    %358 = vmatprep.subr.mxu0 0.0
    %359 = vmatpush1.xpose.msra.mxu0 0.0
    %360 = vmatprep.subr.mxu0 0.0
    %361 = vmatpush1.xpose.msra.mxu0 0.0
    %362 = vmatprep.subr.mxu0 0.0
    %363 = vmatpush1.xpose.msra.mxu0 0.0
    %364 = vmatprep.subr.mxu0 0.0
    %365 = vmatpush1.xpose.msra.mxu0 0.0
    %366 = vmatprep.subr.mxu0 0.0
    %367 = vmatpush1.xpose.msra.mxu0 0.0
    %368 = vmatprep.subr.mxu0 0.0
    %369 = vmatpush1.xpose.msra.mxu0 0.0
    %370 = vmatprep.subr.mxu0 0.0
    %371 = vmatpush1.xpose.msra.mxu0 0.0
    %372 = vmatprep.subr.mxu0 0.0
    %373 = vmatpush1.xpose.msra.mxu0 0.0
    %374 = vmatprep.subr.mxu0 0.0
    %375 = vmatpush1.xpose.msra.mxu0 0.0
    %376 = vmatprep.subr.mxu0 0.0
    %377 = vmatpush1.xpose.msra.mxu0 0.0
    %378 = vmatprep.subr.mxu0 0.0
    %379 = vmatpush1.xpose.msra.mxu0 0.0
    %380 = vmatprep.subr.mxu0 0.0
    %381 = vmatpush1.xpose.msra.mxu0 0.0
    %382 = vmatprep.subr.mxu0 0.0
    %383 = vmatpush1.xpose.msra.mxu0 0.0
    %384 = vmatprep.subr.mxu0 0.0
    %385 = vmatpush1.xpose.msra.mxu0 0.0
    %386 = vmatprep.subr.mxu0 0.0
    %387 = vmatpush1.xpose.msra.mxu0 %v356
    %388 = vmatprep.subr.mxu0 0.0
    %389 = vmatpush1.xpose.msra.mxu0 %v353
    %390 = vmatprep.subr.mxu0 0.0
    %391 = vmatpush2.xpose.msra.mxu0 0.0
    %392 = vmatprep.subr.mxu0 0.0
    %393 = vmatpush2.xpose.msra.mxu0 0.0
    %394 = vmatprep.subr.mxu0 0.0
    %395 = vmatpush2.xpose.msra.mxu0 0.0
    %396 = vmatprep.subr.mxu0 0.0
    %397 = vmatpush2.xpose.msra.mxu0 0.0
    %398 = vmatprep.subr.mxu0 0.0
    %399 = vmatpush2.xpose.msra.mxu0 0.0
    %400 = vmatprep.subr.mxu0 0.0
    %401 = vmatpush2.xpose.msra.mxu0 0.0
    %402 = vmatprep.subr.mxu0 0.0
    %403 = vmatpush2.xpose.msra.mxu0 0.0
    %404 = vmatprep.subr.mxu0 0.0
    %405 = vmatpush2.xpose.msra.mxu0 0.0
    %406 = vmatprep.subr.mxu0 0.0
    %407 = vmatpush2.xpose.msra.mxu0 0.0
    %408 = vmatprep.subr.mxu0 0.0
    %409 = vmatpush2.xpose.msra.mxu0 0.0
    %410 = vmatprep.subr.mxu0 0.0
    %411 = vmatpush2.xpose.msra.mxu0 0.0
    %412 = vmatprep.subr.mxu0 0.0
    %413 = vmatpush2.xpose.msra.mxu0 0.0
    %414 = vmatprep.subr.mxu0 0.0
    %415 = vmatpush2.xpose.msra.mxu0 0.0
    %416 = vmatprep.subr.mxu0 0.0
    %417 = vmatpush2.xpose.msra.mxu0 0.0
    %418 = vmatprep.subr.mxu0 0.0
    %419 = vmatpush2.xpose.msra.mxu0 0.0
    %420 = vmatprep.subr.mxu0 0.0
    %421 = vmatpush2.xpose.msra.mxu0 0.0
    %422 = vmatprep.mubr.f32.mxu0 0.0
    %423 = vmatmul.mubr.f32.gmra.mxu0 %v347
    %v424 = vpop.f32.mrf.mxu0
    %v425 = vadd.f32 %v60, %v424
    %v426 = vpop.f32.mrf.mxu0
    %427 = vmatprep.mubr.f32.mxu0 0.0
    %428 = vmatmul.mubr.f32.gmra.mxu0 %v350
    %v429 = vpop.f32.mrf.mxu0
    %v430 = vadd.f32 %v61, %v429
    %v431 = vpop.f32.mrf.mxu0
    %432 = vdwg.mxu0
    %v433 = vsel %vm345, %v425, -inf
    %434 = vmax.xlane.f32.xlu0 %v433
    %v435 = vpop.xlane.xlu0 %434
    %v436 = vsel %vm345, %v430, -inf
    %437 = vmax.xlane.f32.xlu0 %v436
    %v438 = vpop.xlane.xlu0 %437
    %v439 = vsub.f32 %v425, %v435
    %v440 = vsub.f32 %v430, %v438
    %v441 = vmul.f32 %v439, 1.442695
    %v442 = vpow.pop %v441
    %v443 = vmul.f32 %v440, 1.442695
    %v444 = vpow.pop %v443
    %v445 = vsel %vm345, %v442, 0.0
    %446 = vadd.xlane.f32.xlu0 %v445
    %v447 = vpop.xlane.xlu0 %446
    %v448 = vsel %vm345, %v444, 0.0
    %449 = vadd.xlane.f32.xlu0 %v448
    %v450 = vpop.xlane.xlu0 %449
    %v451 = vrcp.pop %v447
    %v452 = vrcp.pop %v450
    %v453 = vmul.f32 %v442, %v451
    %v454 = vmul.f32 %v444, %v452
    %v456 = vsel %vm345, %v453, 0
    %v459 = vsel %vm345, %v454, 0
    %461 = vmatprep.subr.mxu0 0.0
    %462 = vmatpush1.msra.mxu0 0.0
    %463 = vmatprep.subr.mxu0 0.0
    %464 = vmatpush1.msra.mxu0 0.0
    %465 = vmatprep.subr.mxu0 0.0
    %466 = vmatpush1.msra.mxu0 0.0
    %467 = vmatprep.subr.mxu0 0.0
    %468 = vmatpush1.msra.mxu0 0.0
    %469 = vmatprep.subr.mxu0 0.0
    %470 = vmatpush1.msra.mxu0 0.0
    %471 = vmatprep.subr.mxu0 0.0
    %472 = vmatpush1.msra.mxu0 0.0
    %473 = vmatprep.subr.mxu0 0.0
    %474 = vmatpush1.msra.mxu0 0.0
    %475 = vmatprep.subr.mxu0 0.0
    %476 = vmatpush1.msra.mxu0 0.0
    %477 = vmatprep.subr.mxu0 0.0
    %478 = vmatpush1.msra.mxu0 0.0
    %479 = vmatprep.subr.mxu0 0.0
    %480 = vmatpush1.msra.mxu0 0.0
    %481 = vmatprep.subr.mxu0 0.0
    %482 = vmatpush1.msra.mxu0 0.0
    %483 = vmatprep.subr.mxu0 0.0
    %484 = vmatpush1.msra.mxu0 0.0
    %485 = vmatprep.subr.mxu0 0.0
    %486 = vmatpush1.msra.mxu0 0.0
    %487 = vmatprep.subr.mxu0 0.0
    %488 = vmatpush1.msra.mxu0 0.0
    %489 = vmatprep.subr.mxu0 0.0
    %490 = vmatpush1.msra.mxu0 %v340
    %491 = vmatprep.subr.mxu0 0.0
    %492 = vmatpush1.msra.mxu0 %v335
    %493 = vmatprep.subr.mxu0 0.0
    %494 = vmatpush2.msra.mxu0 0.0
    %495 = vmatprep.subr.mxu0 0.0
    %496 = vmatpush2.msra.mxu0 0.0
    %497 = vmatprep.subr.mxu0 0.0
    %498 = vmatpush2.msra.mxu0 0.0
    %499 = vmatprep.subr.mxu0 0.0
    %500 = vmatpush2.msra.mxu0 0.0
    %501 = vmatprep.subr.mxu0 0.0
    %502 = vmatpush2.msra.mxu0 0.0
    %503 = vmatprep.subr.mxu0 0.0
    %504 = vmatpush2.msra.mxu0 0.0
    %505 = vmatprep.subr.mxu0 0.0
    %506 = vmatpush2.msra.mxu0 0.0
    %507 = vmatprep.subr.mxu0 0.0
    %508 = vmatpush2.msra.mxu0 0.0
    %509 = vmatprep.subr.mxu0 0.0
    %510 = vmatpush2.msra.mxu0 0.0
    %511 = vmatprep.subr.mxu0 0.0
    %512 = vmatpush2.msra.mxu0 0.0
    %513 = vmatprep.subr.mxu0 0.0
    %514 = vmatpush2.msra.mxu0 0.0
    %515 = vmatprep.subr.mxu0 0.0
    %516 = vmatpush2.msra.mxu0 0.0
    %517 = vmatprep.subr.mxu0 0.0
    %518 = vmatpush2.msra.mxu0 0.0
    %519 = vmatprep.subr.mxu0 0.0
    %520 = vmatpush2.msra.mxu0 0.0
    %521 = vmatprep.subr.mxu0 0.0
    %522 = vmatpush2.msra.mxu0 0.0
    %523 = vmatprep.subr.mxu0 0.0
    %524 = vmatpush2.msra.mxu0 0.0
    %525 = vmatprep.mubr.f32.mxu0 0.0
    %526 = vmatmul.mubr.f32.gmra.mxu0 %v456
    %v527 = vpop.f32.mrf.mxu0
    %v528 = vadd.f32 0.0, %v527
    %v529 = vpop.f32.mrf.mxu0
    %530 = vmatprep.mubr.f32.mxu0 0.0
    %531 = vmatmul.mubr.f32.gmra.mxu0 %v459
    %v532 = vpop.f32.mrf.mxu0
    %v533 = vadd.f32 0.0, %v532
    %v534 = vpop.f32.mrf.mxu0
    %535 = vdwg.mxu0
    %v536 = vld [vmem:[%s6] sm:$0xff]
    %v537 = vld [vmem:[%s6 + $0x8] sm:$0xff]
    %s538 = scalar_lea.vmem %s4, 64
    %v539 = vld [vmem:[%s538] sm:$0xff]
    %v540 = vld [vmem:[%s538 + $0x8] sm:$0xff]
    %v541 = vld [vmem:[%s538 + $0x10] sm:$0xff]
    %v542 = vld [vmem:[%s538 + $0x18] sm:$0xff]
    %v543 = vld [vmem:[%s538 + $0x20] sm:$0xff]
    %v544 = vld [vmem:[%s538 + $0x28] sm:$0xff]
    %v545 = vld [vmem:[%s538 + $0x30] sm:$0xff]
    %v546 = vld [vmem:[%s538 + $0x38] sm:$0xff]
    %s547 = scalar_lea.vmem %s5, 1
    %v548 = vld [vmem:[%s547] sm:$0x1]
    %v550 = vlaneseq
    %v551 = vshrl.u32 %v550, 7
    %v552 = vsub.s32 0, %v551
    %v553 = vrot.slane %v548, %v552
    %555 = vmatprep.subr.mxu0 0.0
    %556 = vmatpush1.msra.mxu0 0.0
    %557 = vmatprep.subr.mxu0 0.0
    %558 = vmatpush1.msra.mxu0 0.0
    %559 = vmatprep.subr.mxu0 0.0
    %560 = vmatpush1.msra.mxu0 0.0
    %561 = vmatprep.subr.mxu0 0.0
    %562 = vmatpush1.msra.mxu0 0.0
    %563 = vmatprep.subr.mxu0 0.0
    %564 = vmatpush1.msra.mxu0 0.0
    %565 = vmatprep.subr.mxu0 0.0
    %566 = vmatpush1.msra.mxu0 0.0
    %567 = vmatprep.subr.mxu0 0.0
    %568 = vmatpush1.msra.mxu0 0.0
    %569 = vmatprep.subr.mxu0 0.0
    %570 = vmatpush1.msra.mxu0 0.0
    %571 = vmatprep.subr.mxu0 0.0
    %572 = vmatpush1.msra.mxu0 %v546
    %573 = vmatprep.subr.mxu0 0.0
    %574 = vmatpush1.msra.mxu0 %v545
    %575 = vmatprep.subr.mxu0 0.0
    %576 = vmatpush1.msra.mxu0 %v544
    %577 = vmatprep.subr.mxu0 0.0
    %578 = vmatpush1.msra.mxu0 %v543
    %579 = vmatprep.subr.mxu0 0.0
    %580 = vmatpush1.msra.mxu0 %v542
    %581 = vmatprep.subr.mxu0 0.0
    %582 = vmatpush1.msra.mxu0 %v541
    %583 = vmatprep.subr.mxu0 0.0
    %584 = vmatpush1.msra.mxu0 %v540
    %585 = vmatprep.subr.mxu0 0.0
    %586 = vmatpush1.msra.mxu0 %v539
    %587 = vmatprep.subr.mxu0 0.0
    %588 = vmatpush2.msra.mxu0 0.0
    %589 = vmatprep.subr.mxu0 0.0
    %590 = vmatpush2.msra.mxu0 0.0
    %591 = vmatprep.subr.mxu0 0.0
    %592 = vmatpush2.msra.mxu0 0.0
    %593 = vmatprep.subr.mxu0 0.0
    %594 = vmatpush2.msra.mxu0 0.0
    %595 = vmatprep.subr.mxu0 0.0
    %596 = vmatpush2.msra.mxu0 0.0
    %597 = vmatprep.subr.mxu0 0.0
    %598 = vmatpush2.msra.mxu0 0.0
    %599 = vmatprep.subr.mxu0 0.0
    %600 = vmatpush2.msra.mxu0 0.0
    %601 = vmatprep.subr.mxu0 0.0
    %602 = vmatpush2.msra.mxu0 0.0
    %603 = vmatprep.subr.mxu0 0.0
    %604 = vmatpush2.msra.mxu0 0.0
    %605 = vmatprep.subr.mxu0 0.0
    %606 = vmatpush2.msra.mxu0 0.0
    %607 = vmatprep.subr.mxu0 0.0
    %608 = vmatpush2.msra.mxu0 0.0
    %609 = vmatprep.subr.mxu0 0.0
    %610 = vmatpush2.msra.mxu0 0.0
    %611 = vmatprep.subr.mxu0 0.0
    %612 = vmatpush2.msra.mxu0 0.0
    %613 = vmatprep.subr.mxu0 0.0
    %614 = vmatpush2.msra.mxu0 0.0
    %615 = vmatprep.subr.mxu0 0.0
    %616 = vmatpush2.msra.mxu0 0.0
    %617 = vmatprep.subr.mxu0 0.0
    %618 = vmatpush2.msra.mxu0 0.0
    %619 = vmatprep.mubr.f32.mxu0 0.0
    %620 = vmatmul.mubr.f32.gmra.mxu0 %v79
    %v621 = vpop.f32.mrf.mxu0
    %v622 = vadd.f32 %v553, %v621
    %v623 = vpop.f32.mrf.mxu0
    %624 = vmatprep.mubr.f32.mxu0 0.0
    %625 = vmatmul.mubr.f32.gmra.mxu0 %v82
    %v626 = vpop.f32.mrf.mxu0
    %v627 = vadd.f32 %v553, %v626
    %v628 = vpop.f32.mrf.mxu0
    %629 = vdwg.mxu0
    %s630 = scalar_lea.vmem %s4, 320
    %v631 = vld [vmem:[%s630] sm:$0xff]
    %v632 = vld [vmem:[%s630 + $0x8] sm:$0xff]
    %v633 = vld [vmem:[%s630 + $0x10] sm:$0xff]
    %v634 = vld [vmem:[%s630 + $0x18] sm:$0xff]
    %v635 = vld [vmem:[%s630 + $0x20] sm:$0xff]
    %v636 = vld [vmem:[%s630 + $0x28] sm:$0xff]
    %v637 = vld [vmem:[%s630 + $0x30] sm:$0xff]
    %v638 = vld [vmem:[%s630 + $0x38] sm:$0xff]
    %s639 = scalar_lea.vmem %s5, 5
    %v640 = vld [vmem:[%s639] sm:$0x1]
    %v642 = vlaneseq
    %v643 = vshrl.u32 %v642, 7
    %v644 = vsub.s32 0, %v643
    %v645 = vrot.slane %v640, %v644
    %647 = vmatprep.subr.mxu0 0.0
    %648 = vmatpush1.msra.mxu0 0.0
    %649 = vmatprep.subr.mxu0 0.0
    %650 = vmatpush1.msra.mxu0 0.0
    %651 = vmatprep.subr.mxu0 0.0
    %652 = vmatpush1.msra.mxu0 0.0
    %653 = vmatprep.subr.mxu0 0.0
    %654 = vmatpush1.msra.mxu0 0.0
    %655 = vmatprep.subr.mxu0 0.0
    %656 = vmatpush1.msra.mxu0 0.0
    %657 = vmatprep.subr.mxu0 0.0
    %658 = vmatpush1.msra.mxu0 0.0
    %659 = vmatprep.subr.mxu0 0.0
    %660 = vmatpush1.msra.mxu0 0.0
    %661 = vmatprep.subr.mxu0 0.0
    %662 = vmatpush1.msra.mxu0 0.0
    %663 = vmatprep.subr.mxu0 0.0
    %664 = vmatpush1.msra.mxu0 %v638
    %665 = vmatprep.subr.mxu0 0.0
    %666 = vmatpush1.msra.mxu0 %v637
    %667 = vmatprep.subr.mxu0 0.0
    %668 = vmatpush1.msra.mxu0 %v636
    %669 = vmatprep.subr.mxu0 0.0
    %670 = vmatpush1.msra.mxu0 %v635
    %671 = vmatprep.subr.mxu0 0.0
    %672 = vmatpush1.msra.mxu0 %v634
    %673 = vmatprep.subr.mxu0 0.0
    %674 = vmatpush1.msra.mxu0 %v633
    %675 = vmatprep.subr.mxu0 0.0
    %676 = vmatpush1.msra.mxu0 %v632
    %677 = vmatprep.subr.mxu0 0.0
    %678 = vmatpush1.msra.mxu0 %v631
    %679 = vmatprep.subr.mxu0 0.0
    %680 = vmatpush2.msra.mxu0 0.0
    %681 = vmatprep.subr.mxu0 0.0
    %682 = vmatpush2.msra.mxu0 0.0
    %683 = vmatprep.subr.mxu0 0.0
    %684 = vmatpush2.msra.mxu0 0.0
    %685 = vmatprep.subr.mxu0 0.0
    %686 = vmatpush2.msra.mxu0 0.0
    %687 = vmatprep.subr.mxu0 0.0
    %688 = vmatpush2.msra.mxu0 0.0
    %689 = vmatprep.subr.mxu0 0.0
    %690 = vmatpush2.msra.mxu0 0.0
    %691 = vmatprep.subr.mxu0 0.0
    %692 = vmatpush2.msra.mxu0 0.0
    %693 = vmatprep.subr.mxu0 0.0
    %694 = vmatpush2.msra.mxu0 0.0
    %695 = vmatprep.subr.mxu0 0.0
    %696 = vmatpush2.msra.mxu0 0.0
    %697 = vmatprep.subr.mxu0 0.0
    %698 = vmatpush2.msra.mxu0 0.0
    %699 = vmatprep.subr.mxu0 0.0
    %700 = vmatpush2.msra.mxu0 0.0
    %701 = vmatprep.subr.mxu0 0.0
    %702 = vmatpush2.msra.mxu0 0.0
    %703 = vmatprep.subr.mxu0 0.0
    %704 = vmatpush2.msra.mxu0 0.0
    %705 = vmatprep.subr.mxu0 0.0
    %706 = vmatpush2.msra.mxu0 0.0
    %707 = vmatprep.subr.mxu0 0.0
    %708 = vmatpush2.msra.mxu0 0.0
    %709 = vmatprep.subr.mxu0 0.0
    %710 = vmatpush2.msra.mxu0 0.0
    %711 = vmatprep.mubr.f32.mxu0 0.0
    %712 = vmatmul.mubr.f32.gmra.mxu0 %v79
    %v713 = vpop.f32.mrf.mxu0
    %v714 = vadd.f32 %v645, %v713
    %v715 = vpop.f32.mrf.mxu0
    %716 = vmatprep.mubr.f32.mxu0 0.0
    %717 = vmatmul.mubr.f32.gmra.mxu0 %v82
    %v718 = vpop.f32.mrf.mxu0
    %v719 = vadd.f32 %v645, %v718
    %v720 = vpop.f32.mrf.mxu0
    %721 = vdwg.mxu0
    %s722 = scalar_lea.vmem %s4, 576
    %v723 = vld [vmem:[%s722] sm:$0xff]
    %v724 = vld [vmem:[%s722 + $0x8] sm:$0xff]
    %v725 = vld [vmem:[%s722 + $0x10] sm:$0xff]
    %v726 = vld [vmem:[%s722 + $0x18] sm:$0xff]
    %v727 = vld [vmem:[%s722 + $0x20] sm:$0xff]
    %v728 = vld [vmem:[%s722 + $0x28] sm:$0xff]
    %v729 = vld [vmem:[%s722 + $0x30] sm:$0xff]
    %v730 = vld [vmem:[%s722 + $0x38] sm:$0xff]
    %s731 = scalar_lea.vmem %s5, 9
    %v732 = vld [vmem:[%s731] sm:$0x1]
    %v734 = vlaneseq
    %v735 = vshrl.u32 %v734, 7
    %v736 = vsub.s32 0, %v735
    %v737 = vrot.slane %v732, %v736
    %739 = vmatprep.subr.mxu0 0.0
    %740 = vmatpush1.msra.mxu0 0.0
    %741 = vmatprep.subr.mxu0 0.0
    %742 = vmatpush1.msra.mxu0 0.0
    %743 = vmatprep.subr.mxu0 0.0
    %744 = vmatpush1.msra.mxu0 0.0
    %745 = vmatprep.subr.mxu0 0.0
    %746 = vmatpush1.msra.mxu0 0.0
    %747 = vmatprep.subr.mxu0 0.0
    %748 = vmatpush1.msra.mxu0 0.0
    %749 = vmatprep.subr.mxu0 0.0
    %750 = vmatpush1.msra.mxu0 0.0
    %751 = vmatprep.subr.mxu0 0.0
    %752 = vmatpush1.msra.mxu0 0.0
    %753 = vmatprep.subr.mxu0 0.0
    %754 = vmatpush1.msra.mxu0 0.0
    %755 = vmatprep.subr.mxu0 0.0
    %756 = vmatpush1.msra.mxu0 %v730
    %757 = vmatprep.subr.mxu0 0.0
    %758 = vmatpush1.msra.mxu0 %v729
    %759 = vmatprep.subr.mxu0 0.0
    %760 = vmatpush1.msra.mxu0 %v728
    %761 = vmatprep.subr.mxu0 0.0
    %762 = vmatpush1.msra.mxu0 %v727
    %763 = vmatprep.subr.mxu0 0.0
    %764 = vmatpush1.msra.mxu0 %v726
    %765 = vmatprep.subr.mxu0 0.0
    %766 = vmatpush1.msra.mxu0 %v725
    %767 = vmatprep.subr.mxu0 0.0
    %768 = vmatpush1.msra.mxu0 %v724
    %769 = vmatprep.subr.mxu0 0.0
    %770 = vmatpush1.msra.mxu0 %v723
    %771 = vmatprep.subr.mxu0 0.0
    %772 = vmatpush2.msra.mxu0 0.0
    %773 = vmatprep.subr.mxu0 0.0
    %774 = vmatpush2.msra.mxu0 0.0
    %775 = vmatprep.subr.mxu0 0.0
    %776 = vmatpush2.msra.mxu0 0.0
    %777 = vmatprep.subr.mxu0 0.0
    %778 = vmatpush2.msra.mxu0 0.0
    %779 = vmatprep.subr.mxu0 0.0
    %780 = vmatpush2.msra.mxu0 0.0
    %781 = vmatprep.subr.mxu0 0.0
    %782 = vmatpush2.msra.mxu0 0.0
    %783 = vmatprep.subr.mxu0 0.0
    %784 = vmatpush2.msra.mxu0 0.0
    %785 = vmatprep.subr.mxu0 0.0
    %786 = vmatpush2.msra.mxu0 0.0
    %787 = vmatprep.subr.mxu0 0.0
    %788 = vmatpush2.msra.mxu0 0.0
    %789 = vmatprep.subr.mxu0 0.0
    %790 = vmatpush2.msra.mxu0 0.0
    %791 = vmatprep.subr.mxu0 0.0
    %792 = vmatpush2.msra.mxu0 0.0
    %793 = vmatprep.subr.mxu0 0.0
    %794 = vmatpush2.msra.mxu0 0.0
    %795 = vmatprep.subr.mxu0 0.0
    %796 = vmatpush2.msra.mxu0 0.0
    %797 = vmatprep.subr.mxu0 0.0
    %798 = vmatpush2.msra.mxu0 0.0
    %799 = vmatprep.subr.mxu0 0.0
    %800 = vmatpush2.msra.mxu0 0.0
    %801 = vmatprep.subr.mxu0 0.0
    %802 = vmatpush2.msra.mxu0 0.0
    %803 = vmatprep.mubr.f32.mxu0 0.0
    %804 = vmatmul.mubr.f32.gmra.mxu0 %v79
    %v805 = vpop.f32.mrf.mxu0
    %v806 = vadd.f32 %v737, %v805
    %v807 = vpop.f32.mrf.mxu0
    %808 = vmatprep.mubr.f32.mxu0 0.0
    %809 = vmatmul.mubr.f32.gmra.mxu0 %v82
    %v810 = vpop.f32.mrf.mxu0
    %v811 = vadd.f32 %v737, %v810
    %v812 = vpop.f32.mrf.mxu0
    %813 = vdwg.mxu0
    %v814 = vmul.f32 %v622, 0.25
    %v815 = vmul.f32 %v627, 0.25
    %v817 = vsel %vm345, %v814, 0
    %v820 = vsel %vm345, %v815, 0
    %v823 = vsel %vm345, %v714, 0
    %v826 = vsel %vm345, %v719, 0
    %828 = vmatprep.subr.mxu0 0.0
    %829 = vmatpush1.xpose.msra.mxu0 0.0
    %830 = vmatprep.subr.mxu0 0.0
    %831 = vmatpush1.xpose.msra.mxu0 0.0
    %832 = vmatprep.subr.mxu0 0.0
    %833 = vmatpush1.xpose.msra.mxu0 0.0
    %834 = vmatprep.subr.mxu0 0.0
    %835 = vmatpush1.xpose.msra.mxu0 0.0
    %836 = vmatprep.subr.mxu0 0.0
    %837 = vmatpush1.xpose.msra.mxu0 0.0
    %838 = vmatprep.subr.mxu0 0.0
    %839 = vmatpush1.xpose.msra.mxu0 0.0
    %840 = vmatprep.subr.mxu0 0.0
    %841 = vmatpush1.xpose.msra.mxu0 0.0
    %842 = vmatprep.subr.mxu0 0.0
    %843 = vmatpush1.xpose.msra.mxu0 0.0
    %844 = vmatprep.subr.mxu0 0.0
    %845 = vmatpush1.xpose.msra.mxu0 0.0
    %846 = vmatprep.subr.mxu0 0.0
    %847 = vmatpush1.xpose.msra.mxu0 0.0
    %848 = vmatprep.subr.mxu0 0.0
    %849 = vmatpush1.xpose.msra.mxu0 0.0
    %850 = vmatprep.subr.mxu0 0.0
    %851 = vmatpush1.xpose.msra.mxu0 0.0
    %852 = vmatprep.subr.mxu0 0.0
    %853 = vmatpush1.xpose.msra.mxu0 0.0
    %854 = vmatprep.subr.mxu0 0.0
    %855 = vmatpush1.xpose.msra.mxu0 0.0
    %856 = vmatprep.subr.mxu0 0.0
    %857 = vmatpush1.xpose.msra.mxu0 %v826
    %858 = vmatprep.subr.mxu0 0.0
    %859 = vmatpush1.xpose.msra.mxu0 %v823
    %860 = vmatprep.subr.mxu0 0.0
    %861 = vmatpush2.xpose.msra.mxu0 0.0
    %862 = vmatprep.subr.mxu0 0.0
    %863 = vmatpush2.xpose.msra.mxu0 0.0
    %864 = vmatprep.subr.mxu0 0.0
    %865 = vmatpush2.xpose.msra.mxu0 0.0
    %866 = vmatprep.subr.mxu0 0.0
    %867 = vmatpush2.xpose.msra.mxu0 0.0
    %868 = vmatprep.subr.mxu0 0.0
    %869 = vmatpush2.xpose.msra.mxu0 0.0
    %870 = vmatprep.subr.mxu0 0.0
    %871 = vmatpush2.xpose.msra.mxu0 0.0
    %872 = vmatprep.subr.mxu0 0.0
    %873 = vmatpush2.xpose.msra.mxu0 0.0
    %874 = vmatprep.subr.mxu0 0.0
    %875 = vmatpush2.xpose.msra.mxu0 0.0
    %876 = vmatprep.subr.mxu0 0.0
    %877 = vmatpush2.xpose.msra.mxu0 0.0
    %878 = vmatprep.subr.mxu0 0.0
    %879 = vmatpush2.xpose.msra.mxu0 0.0
    %880 = vmatprep.subr.mxu0 0.0
    %881 = vmatpush2.xpose.msra.mxu0 0.0
    %882 = vmatprep.subr.mxu0 0.0
    %883 = vmatpush2.xpose.msra.mxu0 0.0
    %884 = vmatprep.subr.mxu0 0.0
    %885 = vmatpush2.xpose.msra.mxu0 0.0
    %886 = vmatprep.subr.mxu0 0.0
    %887 = vmatpush2.xpose.msra.mxu0 0.0
    %888 = vmatprep.subr.mxu0 0.0
    %889 = vmatpush2.xpose.msra.mxu0 0.0
    %890 = vmatprep.subr.mxu0 0.0
    %891 = vmatpush2.xpose.msra.mxu0 0.0
    %892 = vmatprep.mubr.f32.mxu0 0.0
    %893 = vmatmul.mubr.f32.gmra.mxu0 %v817
    %v894 = vpop.f32.mrf.mxu0
    %v895 = vadd.f32 %v60, %v894
    %v896 = vpop.f32.mrf.mxu0
    %897 = vmatprep.mubr.f32.mxu0 0.0
    %898 = vmatmul.mubr.f32.gmra.mxu0 %v820
    %v899 = vpop.f32.mrf.mxu0
    %v900 = vadd.f32 %v61, %v899
    %v901 = vpop.f32.mrf.mxu0
    %902 = vdwg.mxu0
    %v903 = vsel %vm345, %v895, -inf
    %904 = vmax.xlane.f32.xlu0 %v903
    %v905 = vpop.xlane.xlu0 %904
    %v906 = vsel %vm345, %v900, -inf
    %907 = vmax.xlane.f32.xlu0 %v906
    %v908 = vpop.xlane.xlu0 %907
    %v909 = vsub.f32 %v895, %v905
    %v910 = vsub.f32 %v900, %v908
    %v911 = vmul.f32 %v909, 1.442695
    %v912 = vpow.pop %v911
    %v913 = vmul.f32 %v910, 1.442695
    %v914 = vpow.pop %v913
    %v915 = vsel %vm345, %v912, 0.0
    %916 = vadd.xlane.f32.xlu0 %v915
    %v917 = vpop.xlane.xlu0 %916
    %v918 = vsel %vm345, %v914, 0.0
    %919 = vadd.xlane.f32.xlu0 %v918
    %v920 = vpop.xlane.xlu0 %919
    %v921 = vrcp.pop %v917
    %v922 = vrcp.pop %v920
    %v923 = vmul.f32 %v912, %v921
    %v924 = vmul.f32 %v914, %v922
    %v926 = vsel %vm345, %v923, 0
    %v929 = vsel %vm345, %v924, 0
    %931 = vmatprep.subr.mxu0 0.0
    %932 = vmatpush1.msra.mxu0 0.0
    %933 = vmatprep.subr.mxu0 0.0
    %934 = vmatpush1.msra.mxu0 0.0
    %935 = vmatprep.subr.mxu0 0.0
    %936 = vmatpush1.msra.mxu0 0.0
    %937 = vmatprep.subr.mxu0 0.0
    %938 = vmatpush1.msra.mxu0 0.0
    %939 = vmatprep.subr.mxu0 0.0
    %940 = vmatpush1.msra.mxu0 0.0
    %941 = vmatprep.subr.mxu0 0.0
    %942 = vmatpush1.msra.mxu0 0.0
    %943 = vmatprep.subr.mxu0 0.0
    %944 = vmatpush1.msra.mxu0 0.0
    %945 = vmatprep.subr.mxu0 0.0
    %946 = vmatpush1.msra.mxu0 0.0
    %947 = vmatprep.subr.mxu0 0.0
    %948 = vmatpush1.msra.mxu0 0.0
    %949 = vmatprep.subr.mxu0 0.0
    %950 = vmatpush1.msra.mxu0 0.0
    %951 = vmatprep.subr.mxu0 0.0
    %952 = vmatpush1.msra.mxu0 0.0
    %953 = vmatprep.subr.mxu0 0.0
    %954 = vmatpush1.msra.mxu0 0.0
    %955 = vmatprep.subr.mxu0 0.0
    %956 = vmatpush1.msra.mxu0 0.0
    %957 = vmatprep.subr.mxu0 0.0
    %958 = vmatpush1.msra.mxu0 0.0
    %959 = vmatprep.subr.mxu0 0.0
    %960 = vmatpush1.msra.mxu0 %v811
    %961 = vmatprep.subr.mxu0 0.0
    %962 = vmatpush1.msra.mxu0 %v806
    %963 = vmatprep.subr.mxu0 0.0
    %964 = vmatpush2.msra.mxu0 0.0
    %965 = vmatprep.subr.mxu0 0.0
    %966 = vmatpush2.msra.mxu0 0.0
    %967 = vmatprep.subr.mxu0 0.0
    %968 = vmatpush2.msra.mxu0 0.0
    %969 = vmatprep.subr.mxu0 0.0
    %970 = vmatpush2.msra.mxu0 0.0
    %971 = vmatprep.subr.mxu0 0.0
    %972 = vmatpush2.msra.mxu0 0.0
    %973 = vmatprep.subr.mxu0 0.0
    %974 = vmatpush2.msra.mxu0 0.0
    %975 = vmatprep.subr.mxu0 0.0
    %976 = vmatpush2.msra.mxu0 0.0
    %977 = vmatprep.subr.mxu0 0.0
    %978 = vmatpush2.msra.mxu0 0.0
    %979 = vmatprep.subr.mxu0 0.0
    %980 = vmatpush2.msra.mxu0 0.0
    %981 = vmatprep.subr.mxu0 0.0
    %982 = vmatpush2.msra.mxu0 0.0
    %983 = vmatprep.subr.mxu0 0.0
    %984 = vmatpush2.msra.mxu0 0.0
    %985 = vmatprep.subr.mxu0 0.0
    %986 = vmatpush2.msra.mxu0 0.0
    %987 = vmatprep.subr.mxu0 0.0
    %988 = vmatpush2.msra.mxu0 0.0
    %989 = vmatprep.subr.mxu0 0.0
    %990 = vmatpush2.msra.mxu0 0.0
    %991 = vmatprep.subr.mxu0 0.0
    %992 = vmatpush2.msra.mxu0 0.0
    %993 = vmatprep.subr.mxu0 0.0
    %994 = vmatpush2.msra.mxu0 0.0
    %995 = vmatprep.mubr.f32.mxu0 0.0
    %996 = vmatmul.mubr.f32.gmra.mxu0 %v926
    %v997 = vpop.f32.mrf.mxu0
    %v998 = vadd.f32 0.0, %v997
    %v999 = vpop.f32.mrf.mxu0
    %1000 = vmatprep.mubr.f32.mxu0 0.0
    %1001 = vmatmul.mubr.f32.gmra.mxu0 %v929
    %v1002 = vpop.f32.mrf.mxu0
    %v1003 = vadd.f32 0.0, %v1002
    %v1004 = vpop.f32.mrf.mxu0
    %1005 = vdwg.mxu0
    %s1006 = scalar_lea.vmem %s6, 16
    %v1007 = vld [vmem:[%s1006] sm:$0xff]
    %v1008 = vld [vmem:[%s1006 + $0x8] sm:$0xff]
    %v1010 = vsel %vm345, %v998, 0
    %v1013 = vsel %vm345, %v1003, 0
    %1015 = vmatprep.subr.mxu0 0.0
    %1016 = vmatpush1.msra.mxu0 0.0
    %1017 = vmatprep.subr.mxu0 0.0
    %1018 = vmatpush1.msra.mxu0 0.0
    %1019 = vmatprep.subr.mxu0 0.0
    %1020 = vmatpush1.msra.mxu0 0.0
    %1021 = vmatprep.subr.mxu0 0.0
    %1022 = vmatpush1.msra.mxu0 0.0
    %1023 = vmatprep.subr.mxu0 0.0
    %1024 = vmatpush1.msra.mxu0 0.0
    %1025 = vmatprep.subr.mxu0 0.0
    %1026 = vmatpush1.msra.mxu0 0.0
    %1027 = vmatprep.subr.mxu0 0.0
    %1028 = vmatpush1.msra.mxu0 0.0
    %1029 = vmatprep.subr.mxu0 0.0
    %1030 = vmatpush1.msra.mxu0 0.0
    %1031 = vmatprep.subr.mxu0 0.0
    %1032 = vmatpush1.msra.mxu0 0.0
    %1033 = vmatprep.subr.mxu0 0.0
    %1034 = vmatpush1.msra.mxu0 0.0
    %1035 = vmatprep.subr.mxu0 0.0
    %1036 = vmatpush1.msra.mxu0 0.0
    %1037 = vmatprep.subr.mxu0 0.0
    %1038 = vmatpush1.msra.mxu0 0.0
    %1039 = vmatprep.subr.mxu0 0.0
    %1040 = vmatpush1.msra.mxu0 0.0
    %1041 = vmatprep.subr.mxu0 0.0
    %1042 = vmatpush1.msra.mxu0 0.0
    %1043 = vmatprep.subr.mxu0 0.0
    %1044 = vmatpush1.msra.mxu0 %v1008
    %1045 = vmatprep.subr.mxu0 0.0
    %1046 = vmatpush1.msra.mxu0 %v1007
    %1047 = vmatprep.subr.mxu0 0.0
    %1048 = vmatpush2.msra.mxu0 0.0
    %1049 = vmatprep.subr.mxu0 0.0
    %1050 = vmatpush2.msra.mxu0 0.0
    %1051 = vmatprep.subr.mxu0 0.0
    %1052 = vmatpush2.msra.mxu0 0.0
    %1053 = vmatprep.subr.mxu0 0.0
    %1054 = vmatpush2.msra.mxu0 0.0
    %1055 = vmatprep.subr.mxu0 0.0
    %1056 = vmatpush2.msra.mxu0 0.0
    %1057 = vmatprep.subr.mxu0 0.0
    %1058 = vmatpush2.msra.mxu0 0.0
    %1059 = vmatprep.subr.mxu0 0.0
    %1060 = vmatpush2.msra.mxu0 0.0
    %1061 = vmatprep.subr.mxu0 0.0
    %1062 = vmatpush2.msra.mxu0 0.0
    %1063 = vmatprep.subr.mxu0 0.0
    %1064 = vmatpush2.msra.mxu0 0.0
    %1065 = vmatprep.subr.mxu0 0.0
    %1066 = vmatpush2.msra.mxu0 0.0
    %1067 = vmatprep.subr.mxu0 0.0
    %1068 = vmatpush2.msra.mxu0 0.0
    %1069 = vmatprep.subr.mxu0 0.0
    %1070 = vmatpush2.msra.mxu0 0.0
    %1071 = vmatprep.subr.mxu0 0.0
    %1072 = vmatpush2.msra.mxu0 0.0
    %1073 = vmatprep.subr.mxu0 0.0
    %1074 = vmatpush2.msra.mxu0 0.0
    %1075 = vmatprep.subr.mxu0 0.0
    %1076 = vmatpush2.msra.mxu0 0.0
    %1077 = vmatprep.subr.mxu0 0.0
    %1078 = vmatpush2.msra.mxu0 0.0
    %1079 = vmatprep.mubr.f32.mxu0 0.0
    %1080 = vmatmul.mubr.f32.gmra.mxu0 %v1010
    %v1081 = vpop.f32.mrf.mxu0
    %v1082 = vadd.f32 0.0, %v1081
    %v1083 = vpop.f32.mrf.mxu0
    %1084 = vmatprep.mubr.f32.mxu0 0.0
    %1085 = vmatmul.mubr.f32.gmra.mxu0 %v1013
    %v1086 = vpop.f32.mrf.mxu0
    %v1087 = vadd.f32 0.0, %v1086
    %v1088 = vpop.f32.mrf.mxu0
    %1089 = vdwg.mxu0
    %v1091 = vsel %vm345, %v528, 0
    %v1094 = vsel %vm345, %v533, 0
    %1096 = vmatprep.subr.mxu0 0.0
    %1097 = vmatpush1.msra.mxu0 0.0
    %1098 = vmatprep.subr.mxu0 0.0
    %1099 = vmatpush1.msra.mxu0 0.0
    %1100 = vmatprep.subr.mxu0 0.0
    %1101 = vmatpush1.msra.mxu0 0.0
    %1102 = vmatprep.subr.mxu0 0.0
    %1103 = vmatpush1.msra.mxu0 0.0
    %1104 = vmatprep.subr.mxu0 0.0
    %1105 = vmatpush1.msra.mxu0 0.0
    %1106 = vmatprep.subr.mxu0 0.0
    %1107 = vmatpush1.msra.mxu0 0.0
    %1108 = vmatprep.subr.mxu0 0.0
    %1109 = vmatpush1.msra.mxu0 0.0
    %1110 = vmatprep.subr.mxu0 0.0
    %1111 = vmatpush1.msra.mxu0 0.0
    %1112 = vmatprep.subr.mxu0 0.0
    %1113 = vmatpush1.msra.mxu0 0.0
    %1114 = vmatprep.subr.mxu0 0.0
    %1115 = vmatpush1.msra.mxu0 0.0
    %1116 = vmatprep.subr.mxu0 0.0
    %1117 = vmatpush1.msra.mxu0 0.0
    %1118 = vmatprep.subr.mxu0 0.0
    %1119 = vmatpush1.msra.mxu0 0.0
    %1120 = vmatprep.subr.mxu0 0.0
    %1121 = vmatpush1.msra.mxu0 0.0
    %1122 = vmatprep.subr.mxu0 0.0
    %1123 = vmatpush1.msra.mxu0 0.0
    %1124 = vmatprep.subr.mxu0 0.0
    %1125 = vmatpush1.msra.mxu0 %v537
    %1126 = vmatprep.subr.mxu0 0.0
    %1127 = vmatpush1.msra.mxu0 %v536
    %1128 = vmatprep.subr.mxu0 0.0
    %1129 = vmatpush2.msra.mxu0 0.0
    %1130 = vmatprep.subr.mxu0 0.0
    %1131 = vmatpush2.msra.mxu0 0.0
    %1132 = vmatprep.subr.mxu0 0.0
    %1133 = vmatpush2.msra.mxu0 0.0
    %1134 = vmatprep.subr.mxu0 0.0
    %1135 = vmatpush2.msra.mxu0 0.0
    %1136 = vmatprep.subr.mxu0 0.0
    %1137 = vmatpush2.msra.mxu0 0.0
    %1138 = vmatprep.subr.mxu0 0.0
    %1139 = vmatpush2.msra.mxu0 0.0
    %1140 = vmatprep.subr.mxu0 0.0
    %1141 = vmatpush2.msra.mxu0 0.0
    %1142 = vmatprep.subr.mxu0 0.0
    %1143 = vmatpush2.msra.mxu0 0.0
    %1144 = vmatprep.subr.mxu0 0.0
    %1145 = vmatpush2.msra.mxu0 0.0
    %1146 = vmatprep.subr.mxu0 0.0
    %1147 = vmatpush2.msra.mxu0 0.0
    %1148 = vmatprep.subr.mxu0 0.0
    %1149 = vmatpush2.msra.mxu0 0.0
    %1150 = vmatprep.subr.mxu0 0.0
    %1151 = vmatpush2.msra.mxu0 0.0
    %1152 = vmatprep.subr.mxu0 0.0
    %1153 = vmatpush2.msra.mxu0 0.0
    %1154 = vmatprep.subr.mxu0 0.0
    %1155 = vmatpush2.msra.mxu0 0.0
    %1156 = vmatprep.subr.mxu0 0.0
    %1157 = vmatpush2.msra.mxu0 0.0
    %1158 = vmatprep.subr.mxu0 0.0
    %1159 = vmatpush2.msra.mxu0 0.0
    %1160 = vmatprep.mubr.f32.mxu0 0.0
    %1161 = vmatmul.mubr.f32.gmra.mxu0 %v1091
    %v1162 = vpop.f32.mrf.mxu0
    %v1163 = vadd.f32 %v1082, %v1162
    %v1164 = vpop.f32.mrf.mxu0
    %1165 = vmatprep.mubr.f32.mxu0 0.0
    %1166 = vmatmul.mubr.f32.gmra.mxu0 %v1094
    %v1167 = vpop.f32.mrf.mxu0
    %v1168 = vadd.f32 %v1087, %v1167
    %v1169 = vpop.f32.mrf.mxu0
    %1170 = vdwg.mxu0
    %s1171 = scalar_lea.vmem %s4, 128
    %v1172 = vld [vmem:[%s1171] sm:$0xff]
    %v1173 = vld [vmem:[%s1171 + $0x8] sm:$0xff]
    %v1174 = vld [vmem:[%s1171 + $0x10] sm:$0xff]
    %v1175 = vld [vmem:[%s1171 + $0x18] sm:$0xff]
    %v1176 = vld [vmem:[%s1171 + $0x20] sm:$0xff]
    %v1177 = vld [vmem:[%s1171 + $0x28] sm:$0xff]
    %v1178 = vld [vmem:[%s1171 + $0x30] sm:$0xff]
    %v1179 = vld [vmem:[%s1171 + $0x38] sm:$0xff]
    %s1180 = scalar_lea.vmem %s5, 2
    %v1181 = vld [vmem:[%s1180] sm:$0x1]
    %v1183 = vlaneseq
    %v1184 = vshrl.u32 %v1183, 7
    %v1185 = vsub.s32 0, %v1184
    %v1186 = vrot.slane %v1181, %v1185
    %1188 = vmatprep.subr.mxu0 0.0
    %1189 = vmatpush1.msra.mxu0 0.0
    %1190 = vmatprep.subr.mxu0 0.0
    %1191 = vmatpush1.msra.mxu0 0.0
    %1192 = vmatprep.subr.mxu0 0.0
    %1193 = vmatpush1.msra.mxu0 0.0
    %1194 = vmatprep.subr.mxu0 0.0
    %1195 = vmatpush1.msra.mxu0 0.0
    %1196 = vmatprep.subr.mxu0 0.0
    %1197 = vmatpush1.msra.mxu0 0.0
    %1198 = vmatprep.subr.mxu0 0.0
    %1199 = vmatpush1.msra.mxu0 0.0
    %1200 = vmatprep.subr.mxu0 0.0
    %1201 = vmatpush1.msra.mxu0 0.0
    %1202 = vmatprep.subr.mxu0 0.0
    %1203 = vmatpush1.msra.mxu0 0.0
    %1204 = vmatprep.subr.mxu0 0.0
    %1205 = vmatpush1.msra.mxu0 %v1179
    %1206 = vmatprep.subr.mxu0 0.0
    %1207 = vmatpush1.msra.mxu0 %v1178
    %1208 = vmatprep.subr.mxu0 0.0
    %1209 = vmatpush1.msra.mxu0 %v1177
    %1210 = vmatprep.subr.mxu0 0.0
    %1211 = vmatpush1.msra.mxu0 %v1176
    %1212 = vmatprep.subr.mxu0 0.0
    %1213 = vmatpush1.msra.mxu0 %v1175
    %1214 = vmatprep.subr.mxu0 0.0
    %1215 = vmatpush1.msra.mxu0 %v1174
    %1216 = vmatprep.subr.mxu0 0.0
    %1217 = vmatpush1.msra.mxu0 %v1173
    %1218 = vmatprep.subr.mxu0 0.0
    %1219 = vmatpush1.msra.mxu0 %v1172
    %1220 = vmatprep.subr.mxu0 0.0
    %1221 = vmatpush2.msra.mxu0 0.0
    %1222 = vmatprep.subr.mxu0 0.0
    %1223 = vmatpush2.msra.mxu0 0.0
    %1224 = vmatprep.subr.mxu0 0.0
    %1225 = vmatpush2.msra.mxu0 0.0
    %1226 = vmatprep.subr.mxu0 0.0
    %1227 = vmatpush2.msra.mxu0 0.0
    %1228 = vmatprep.subr.mxu0 0.0
    %1229 = vmatpush2.msra.mxu0 0.0
    %1230 = vmatprep.subr.mxu0 0.0
    %1231 = vmatpush2.msra.mxu0 0.0
    %1232 = vmatprep.subr.mxu0 0.0
    %1233 = vmatpush2.msra.mxu0 0.0
    %1234 = vmatprep.subr.mxu0 0.0
    %1235 = vmatpush2.msra.mxu0 0.0
    %1236 = vmatprep.subr.mxu0 0.0
    %1237 = vmatpush2.msra.mxu0 0.0
    %1238 = vmatprep.subr.mxu0 0.0
    %1239 = vmatpush2.msra.mxu0 0.0
    %1240 = vmatprep.subr.mxu0 0.0
    %1241 = vmatpush2.msra.mxu0 0.0
    %1242 = vmatprep.subr.mxu0 0.0
    %1243 = vmatpush2.msra.mxu0 0.0
    %1244 = vmatprep.subr.mxu0 0.0
    %1245 = vmatpush2.msra.mxu0 0.0
    %1246 = vmatprep.subr.mxu0 0.0
    %1247 = vmatpush2.msra.mxu0 0.0
    %1248 = vmatprep.subr.mxu0 0.0
    %1249 = vmatpush2.msra.mxu0 0.0
    %1250 = vmatprep.subr.mxu0 0.0
    %1251 = vmatpush2.msra.mxu0 0.0
    %1252 = vmatprep.mubr.f32.mxu0 0.0
    %1253 = vmatmul.mubr.f32.gmra.mxu0 %v79
    %v1254 = vpop.f32.mrf.mxu0
    %v1255 = vadd.f32 %v1186, %v1254
    %v1256 = vpop.f32.mrf.mxu0
    %1257 = vmatprep.mubr.f32.mxu0 0.0
    %1258 = vmatmul.mubr.f32.gmra.mxu0 %v82
    %v1259 = vpop.f32.mrf.mxu0
    %v1260 = vadd.f32 %v1186, %v1259
    %v1261 = vpop.f32.mrf.mxu0
    %1262 = vdwg.mxu0
    %s1263 = scalar_lea.vmem %s4, 384
    %v1264 = vld [vmem:[%s1263] sm:$0xff]
    %v1265 = vld [vmem:[%s1263 + $0x8] sm:$0xff]
    %v1266 = vld [vmem:[%s1263 + $0x10] sm:$0xff]
    %v1267 = vld [vmem:[%s1263 + $0x18] sm:$0xff]
    %v1268 = vld [vmem:[%s1263 + $0x20] sm:$0xff]
    %v1269 = vld [vmem:[%s1263 + $0x28] sm:$0xff]
    %v1270 = vld [vmem:[%s1263 + $0x30] sm:$0xff]
    %v1271 = vld [vmem:[%s1263 + $0x38] sm:$0xff]
    %s1272 = scalar_lea.vmem %s5, 6
    %v1273 = vld [vmem:[%s1272] sm:$0x1]
    %v1275 = vlaneseq
    %v1276 = vshrl.u32 %v1275, 7
    %v1277 = vsub.s32 0, %v1276
    %v1278 = vrot.slane %v1273, %v1277
    %1280 = vmatprep.subr.mxu0 0.0
    %1281 = vmatpush1.msra.mxu0 0.0
    %1282 = vmatprep.subr.mxu0 0.0
    %1283 = vmatpush1.msra.mxu0 0.0
    %1284 = vmatprep.subr.mxu0 0.0
    %1285 = vmatpush1.msra.mxu0 0.0
    %1286 = vmatprep.subr.mxu0 0.0
    %1287 = vmatpush1.msra.mxu0 0.0
    %1288 = vmatprep.subr.mxu0 0.0
    %1289 = vmatpush1.msra.mxu0 0.0
    %1290 = vmatprep.subr.mxu0 0.0
    %1291 = vmatpush1.msra.mxu0 0.0
    %1292 = vmatprep.subr.mxu0 0.0
    %1293 = vmatpush1.msra.mxu0 0.0
    %1294 = vmatprep.subr.mxu0 0.0
    %1295 = vmatpush1.msra.mxu0 0.0
    %1296 = vmatprep.subr.mxu0 0.0
    %1297 = vmatpush1.msra.mxu0 %v1271
    %1298 = vmatprep.subr.mxu0 0.0
    %1299 = vmatpush1.msra.mxu0 %v1270
    %1300 = vmatprep.subr.mxu0 0.0
    %1301 = vmatpush1.msra.mxu0 %v1269
    %1302 = vmatprep.subr.mxu0 0.0
    %1303 = vmatpush1.msra.mxu0 %v1268
    %1304 = vmatprep.subr.mxu0 0.0
    %1305 = vmatpush1.msra.mxu0 %v1267
    %1306 = vmatprep.subr.mxu0 0.0
    %1307 = vmatpush1.msra.mxu0 %v1266
    %1308 = vmatprep.subr.mxu0 0.0
    %1309 = vmatpush1.msra.mxu0 %v1265
    %1310 = vmatprep.subr.mxu0 0.0
    %1311 = vmatpush1.msra.mxu0 %v1264
    %1312 = vmatprep.subr.mxu0 0.0
    %1313 = vmatpush2.msra.mxu0 0.0
    %1314 = vmatprep.subr.mxu0 0.0
    %1315 = vmatpush2.msra.mxu0 0.0
    %1316 = vmatprep.subr.mxu0 0.0
    %1317 = vmatpush2.msra.mxu0 0.0
    %1318 = vmatprep.subr.mxu0 0.0
    %1319 = vmatpush2.msra.mxu0 0.0
    %1320 = vmatprep.subr.mxu0 0.0
    %1321 = vmatpush2.msra.mxu0 0.0
    %1322 = vmatprep.subr.mxu0 0.0
    %1323 = vmatpush2.msra.mxu0 0.0
    %1324 = vmatprep.subr.mxu0 0.0
    %1325 = vmatpush2.msra.mxu0 0.0
    %1326 = vmatprep.subr.mxu0 0.0
    %1327 = vmatpush2.msra.mxu0 0.0
    %1328 = vmatprep.subr.mxu0 0.0
    %1329 = vmatpush2.msra.mxu0 0.0
    %1330 = vmatprep.subr.mxu0 0.0
    %1331 = vmatpush2.msra.mxu0 0.0
    %1332 = vmatprep.subr.mxu0 0.0
    %1333 = vmatpush2.msra.mxu0 0.0
    %1334 = vmatprep.subr.mxu0 0.0
    %1335 = vmatpush2.msra.mxu0 0.0
    %1336 = vmatprep.subr.mxu0 0.0
    %1337 = vmatpush2.msra.mxu0 0.0
    %1338 = vmatprep.subr.mxu0 0.0
    %1339 = vmatpush2.msra.mxu0 0.0
    %1340 = vmatprep.subr.mxu0 0.0
    %1341 = vmatpush2.msra.mxu0 0.0
    %1342 = vmatprep.subr.mxu0 0.0
    %1343 = vmatpush2.msra.mxu0 0.0
    %1344 = vmatprep.mubr.f32.mxu0 0.0
    %1345 = vmatmul.mubr.f32.gmra.mxu0 %v79
    %v1346 = vpop.f32.mrf.mxu0
    %v1347 = vadd.f32 %v1278, %v1346
    %v1348 = vpop.f32.mrf.mxu0
    %1349 = vmatprep.mubr.f32.mxu0 0.0
    %1350 = vmatmul.mubr.f32.gmra.mxu0 %v82
    %v1351 = vpop.f32.mrf.mxu0
    %v1352 = vadd.f32 %v1278, %v1351
    %v1353 = vpop.f32.mrf.mxu0
    %1354 = vdwg.mxu0
    %s1355 = scalar_lea.vmem %s4, 640
    %v1356 = vld [vmem:[%s1355] sm:$0xff]
    %v1357 = vld [vmem:[%s1355 + $0x8] sm:$0xff]
    %v1358 = vld [vmem:[%s1355 + $0x10] sm:$0xff]
    %v1359 = vld [vmem:[%s1355 + $0x18] sm:$0xff]
    %v1360 = vld [vmem:[%s1355 + $0x20] sm:$0xff]
    %v1361 = vld [vmem:[%s1355 + $0x28] sm:$0xff]
    %v1362 = vld [vmem:[%s1355 + $0x30] sm:$0xff]
    %v1363 = vld [vmem:[%s1355 + $0x38] sm:$0xff]
    %s1364 = scalar_lea.vmem %s5, 10
    %v1365 = vld [vmem:[%s1364] sm:$0x1]
    %v1367 = vlaneseq
    %v1368 = vshrl.u32 %v1367, 7
    %v1369 = vsub.s32 0, %v1368
    %v1370 = vrot.slane %v1365, %v1369
    %1372 = vmatprep.subr.mxu0 0.0
    %1373 = vmatpush1.msra.mxu0 0.0
    %1374 = vmatprep.subr.mxu0 0.0
    %1375 = vmatpush1.msra.mxu0 0.0
    %1376 = vmatprep.subr.mxu0 0.0
    %1377 = vmatpush1.msra.mxu0 0.0
    %1378 = vmatprep.subr.mxu0 0.0
    %1379 = vmatpush1.msra.mxu0 0.0
    %1380 = vmatprep.subr.mxu0 0.0
    %1381 = vmatpush1.msra.mxu0 0.0
    %1382 = vmatprep.subr.mxu0 0.0
    %1383 = vmatpush1.msra.mxu0 0.0
    %1384 = vmatprep.subr.mxu0 0.0
    %1385 = vmatpush1.msra.mxu0 0.0
    %1386 = vmatprep.subr.mxu0 0.0
    %1387 = vmatpush1.msra.mxu0 0.0
    %1388 = vmatprep.subr.mxu0 0.0
    %1389 = vmatpush1.msra.mxu0 %v1363
    %1390 = vmatprep.subr.mxu0 0.0
    %1391 = vmatpush1.msra.mxu0 %v1362
    %1392 = vmatprep.subr.mxu0 0.0
    %1393 = vmatpush1.msra.mxu0 %v1361
    %1394 = vmatprep.subr.mxu0 0.0
    %1395 = vmatpush1.msra.mxu0 %v1360
    %1396 = vmatprep.subr.mxu0 0.0
    %1397 = vmatpush1.msra.mxu0 %v1359
    %1398 = vmatprep.subr.mxu0 0.0
    %1399 = vmatpush1.msra.mxu0 %v1358
    %1400 = vmatprep.subr.mxu0 0.0
    %1401 = vmatpush1.msra.mxu0 %v1357
    %1402 = vmatprep.subr.mxu0 0.0
    %1403 = vmatpush1.msra.mxu0 %v1356
    %1404 = vmatprep.subr.mxu0 0.0
    %1405 = vmatpush2.msra.mxu0 0.0
    %1406 = vmatprep.subr.mxu0 0.0
    %1407 = vmatpush2.msra.mxu0 0.0
    %1408 = vmatprep.subr.mxu0 0.0
    %1409 = vmatpush2.msra.mxu0 0.0
    %1410 = vmatprep.subr.mxu0 0.0
    %1411 = vmatpush2.msra.mxu0 0.0
    %1412 = vmatprep.subr.mxu0 0.0
    %1413 = vmatpush2.msra.mxu0 0.0
    %1414 = vmatprep.subr.mxu0 0.0
    %1415 = vmatpush2.msra.mxu0 0.0
    %1416 = vmatprep.subr.mxu0 0.0
    %1417 = vmatpush2.msra.mxu0 0.0
    %1418 = vmatprep.subr.mxu0 0.0
    %1419 = vmatpush2.msra.mxu0 0.0
    %1420 = vmatprep.subr.mxu0 0.0
    %1421 = vmatpush2.msra.mxu0 0.0
    %1422 = vmatprep.subr.mxu0 0.0
    %1423 = vmatpush2.msra.mxu0 0.0
    %1424 = vmatprep.subr.mxu0 0.0
    %1425 = vmatpush2.msra.mxu0 0.0
    %1426 = vmatprep.subr.mxu0 0.0
    %1427 = vmatpush2.msra.mxu0 0.0
    %1428 = vmatprep.subr.mxu0 0.0
    %1429 = vmatpush2.msra.mxu0 0.0
    %1430 = vmatprep.subr.mxu0 0.0
    %1431 = vmatpush2.msra.mxu0 0.0
    %1432 = vmatprep.subr.mxu0 0.0
    %1433 = vmatpush2.msra.mxu0 0.0
    %1434 = vmatprep.subr.mxu0 0.0
    %1435 = vmatpush2.msra.mxu0 0.0
    %1436 = vmatprep.mubr.f32.mxu0 0.0
    %1437 = vmatmul.mubr.f32.gmra.mxu0 %v79
    %v1438 = vpop.f32.mrf.mxu0
    %v1439 = vadd.f32 %v1370, %v1438
    %v1440 = vpop.f32.mrf.mxu0
    %1441 = vmatprep.mubr.f32.mxu0 0.0
    %1442 = vmatmul.mubr.f32.gmra.mxu0 %v82
    %v1443 = vpop.f32.mrf.mxu0
    %v1444 = vadd.f32 %v1370, %v1443
    %v1445 = vpop.f32.mrf.mxu0
    %1446 = vdwg.mxu0
    %v1447 = vmul.f32 %v1255, 0.25
    %v1448 = vmul.f32 %v1260, 0.25
    %v1450 = vsel %vm345, %v1447, 0
    %v1453 = vsel %vm345, %v1448, 0
    %v1456 = vsel %vm345, %v1347, 0
    %v1459 = vsel %vm345, %v1352, 0
    %1461 = vmatprep.subr.mxu0 0.0
    %1462 = vmatpush1.xpose.msra.mxu0 0.0
    %1463 = vmatprep.subr.mxu0 0.0
    %1464 = vmatpush1.xpose.msra.mxu0 0.0
    %1465 = vmatprep.subr.mxu0 0.0
    %1466 = vmatpush1.xpose.msra.mxu0 0.0
    %1467 = vmatprep.subr.mxu0 0.0
    %1468 = vmatpush1.xpose.msra.mxu0 0.0
    %1469 = vmatprep.subr.mxu0 0.0
    %1470 = vmatpush1.xpose.msra.mxu0 0.0
    %1471 = vmatprep.subr.mxu0 0.0
    %1472 = vmatpush1.xpose.msra.mxu0 0.0
    %1473 = vmatprep.subr.mxu0 0.0
    %1474 = vmatpush1.xpose.msra.mxu0 0.0
    %1475 = vmatprep.subr.mxu0 0.0
    %1476 = vmatpush1.xpose.msra.mxu0 0.0
    %1477 = vmatprep.subr.mxu0 0.0
    %1478 = vmatpush1.xpose.msra.mxu0 0.0
    %1479 = vmatprep.subr.mxu0 0.0
    %1480 = vmatpush1.xpose.msra.mxu0 0.0
    %1481 = vmatprep.subr.mxu0 0.0
    %1482 = vmatpush1.xpose.msra.mxu0 0.0
    %1483 = vmatprep.subr.mxu0 0.0
    %1484 = vmatpush1.xpose.msra.mxu0 0.0
    %1485 = vmatprep.subr.mxu0 0.0
    %1486 = vmatpush1.xpose.msra.mxu0 0.0
    %1487 = vmatprep.subr.mxu0 0.0
    %1488 = vmatpush1.xpose.msra.mxu0 0.0
    %1489 = vmatprep.subr.mxu0 0.0
    %1490 = vmatpush1.xpose.msra.mxu0 %v1459
    %1491 = vmatprep.subr.mxu0 0.0
    %1492 = vmatpush1.xpose.msra.mxu0 %v1456
    %1493 = vmatprep.subr.mxu0 0.0
    %1494 = vmatpush2.xpose.msra.mxu0 0.0
    %1495 = vmatprep.subr.mxu0 0.0
    %1496 = vmatpush2.xpose.msra.mxu0 0.0
    %1497 = vmatprep.subr.mxu0 0.0
    %1498 = vmatpush2.xpose.msra.mxu0 0.0
    %1499 = vmatprep.subr.mxu0 0.0
    %1500 = vmatpush2.xpose.msra.mxu0 0.0
    %1501 = vmatprep.subr.mxu0 0.0
    %1502 = vmatpush2.xpose.msra.mxu0 0.0
    %1503 = vmatprep.subr.mxu0 0.0
    %1504 = vmatpush2.xpose.msra.mxu0 0.0
    %1505 = vmatprep.subr.mxu0 0.0
    %1506 = vmatpush2.xpose.msra.mxu0 0.0
    %1507 = vmatprep.subr.mxu0 0.0
    %1508 = vmatpush2.xpose.msra.mxu0 0.0
    %1509 = vmatprep.subr.mxu0 0.0
    %1510 = vmatpush2.xpose.msra.mxu0 0.0
    %1511 = vmatprep.subr.mxu0 0.0
    %1512 = vmatpush2.xpose.msra.mxu0 0.0
    %1513 = vmatprep.subr.mxu0 0.0
    %1514 = vmatpush2.xpose.msra.mxu0 0.0
    %1515 = vmatprep.subr.mxu0 0.0
    %1516 = vmatpush2.xpose.msra.mxu0 0.0
    %1517 = vmatprep.subr.mxu0 0.0
    %1518 = vmatpush2.xpose.msra.mxu0 0.0
    %1519 = vmatprep.subr.mxu0 0.0
    %1520 = vmatpush2.xpose.msra.mxu0 0.0
    %1521 = vmatprep.subr.mxu0 0.0
    %1522 = vmatpush2.xpose.msra.mxu0 0.0
    %1523 = vmatprep.subr.mxu0 0.0
    %1524 = vmatpush2.xpose.msra.mxu0 0.0
    %1525 = vmatprep.mubr.f32.mxu0 0.0
    %1526 = vmatmul.mubr.f32.gmra.mxu0 %v1450
    %v1527 = vpop.f32.mrf.mxu0
    %v1528 = vadd.f32 %v60, %v1527
    %v1529 = vpop.f32.mrf.mxu0
    %1530 = vmatprep.mubr.f32.mxu0 0.0
    %1531 = vmatmul.mubr.f32.gmra.mxu0 %v1453
    %v1532 = vpop.f32.mrf.mxu0
    %v1533 = vadd.f32 %v61, %v1532
    %v1534 = vpop.f32.mrf.mxu0
    %1535 = vdwg.mxu0
    %v1536 = vsel %vm345, %v1528, -inf
    %1537 = vmax.xlane.f32.xlu0 %v1536
    %v1538 = vpop.xlane.xlu0 %1537
    %v1539 = vsel %vm345, %v1533, -inf
    %1540 = vmax.xlane.f32.xlu0 %v1539
    %v1541 = vpop.xlane.xlu0 %1540
    %v1542 = vsub.f32 %v1528, %v1538
    %v1543 = vsub.f32 %v1533, %v1541
    %v1544 = vmul.f32 %v1542, 1.442695
    %v1545 = vpow.pop %v1544
    %v1546 = vmul.f32 %v1543, 1.442695
    %v1547 = vpow.pop %v1546
    %v1548 = vsel %vm345, %v1545, 0.0
    %1549 = vadd.xlane.f32.xlu0 %v1548
    %v1550 = vpop.xlane.xlu0 %1549
    %v1551 = vsel %vm345, %v1547, 0.0
    %1552 = vadd.xlane.f32.xlu0 %v1551
    %v1553 = vpop.xlane.xlu0 %1552
    %v1554 = vrcp.pop %v1550
    %v1555 = vrcp.pop %v1553
    %v1556 = vmul.f32 %v1545, %v1554
    %v1557 = vmul.f32 %v1547, %v1555
    %v1559 = vsel %vm345, %v1556, 0
    %v1562 = vsel %vm345, %v1557, 0
    %1564 = vmatprep.subr.mxu0 0.0
    %1565 = vmatpush1.msra.mxu0 0.0
    %1566 = vmatprep.subr.mxu0 0.0
    %1567 = vmatpush1.msra.mxu0 0.0
    %1568 = vmatprep.subr.mxu0 0.0
    %1569 = vmatpush1.msra.mxu0 0.0
    %1570 = vmatprep.subr.mxu0 0.0
    %1571 = vmatpush1.msra.mxu0 0.0
    %1572 = vmatprep.subr.mxu0 0.0
    %1573 = vmatpush1.msra.mxu0 0.0
    %1574 = vmatprep.subr.mxu0 0.0
    %1575 = vmatpush1.msra.mxu0 0.0
    %1576 = vmatprep.subr.mxu0 0.0
    %1577 = vmatpush1.msra.mxu0 0.0
    %1578 = vmatprep.subr.mxu0 0.0
    %1579 = vmatpush1.msra.mxu0 0.0
    %1580 = vmatprep.subr.mxu0 0.0
    %1581 = vmatpush1.msra.mxu0 0.0
    %1582 = vmatprep.subr.mxu0 0.0
    %1583 = vmatpush1.msra.mxu0 0.0
    %1584 = vmatprep.subr.mxu0 0.0
    %1585 = vmatpush1.msra.mxu0 0.0
    %1586 = vmatprep.subr.mxu0 0.0
    %1587 = vmatpush1.msra.mxu0 0.0
    %1588 = vmatprep.subr.mxu0 0.0
    %1589 = vmatpush1.msra.mxu0 0.0
    %1590 = vmatprep.subr.mxu0 0.0
    %1591 = vmatpush1.msra.mxu0 0.0
    %1592 = vmatprep.subr.mxu0 0.0
    %1593 = vmatpush1.msra.mxu0 %v1444
    %1594 = vmatprep.subr.mxu0 0.0
    %1595 = vmatpush1.msra.mxu0 %v1439
    %1596 = vmatprep.subr.mxu0 0.0
    %1597 = vmatpush2.msra.mxu0 0.0
    %1598 = vmatprep.subr.mxu0 0.0
    %1599 = vmatpush2.msra.mxu0 0.0
    %1600 = vmatprep.subr.mxu0 0.0
    %1601 = vmatpush2.msra.mxu0 0.0
    %1602 = vmatprep.subr.mxu0 0.0
    %1603 = vmatpush2.msra.mxu0 0.0
    %1604 = vmatprep.subr.mxu0 0.0
    %1605 = vmatpush2.msra.mxu0 0.0
    %1606 = vmatprep.subr.mxu0 0.0
    %1607 = vmatpush2.msra.mxu0 0.0
    %1608 = vmatprep.subr.mxu0 0.0
    %1609 = vmatpush2.msra.mxu0 0.0
    %1610 = vmatprep.subr.mxu0 0.0
    %1611 = vmatpush2.msra.mxu0 0.0
    %1612 = vmatprep.subr.mxu0 0.0
    %1613 = vmatpush2.msra.mxu0 0.0
    %1614 = vmatprep.subr.mxu0 0.0
    %1615 = vmatpush2.msra.mxu0 0.0
    %1616 = vmatprep.subr.mxu0 0.0
    %1617 = vmatpush2.msra.mxu0 0.0
    %1618 = vmatprep.subr.mxu0 0.0
    %1619 = vmatpush2.msra.mxu0 0.0
    %1620 = vmatprep.subr.mxu0 0.0
    %1621 = vmatpush2.msra.mxu0 0.0
    %1622 = vmatprep.subr.mxu0 0.0
    %1623 = vmatpush2.msra.mxu0 0.0
    %1624 = vmatprep.subr.mxu0 0.0
    %1625 = vmatpush2.msra.mxu0 0.0
    %1626 = vmatprep.subr.mxu0 0.0
    %1627 = vmatpush2.msra.mxu0 0.0
    %1628 = vmatprep.mubr.f32.mxu0 0.0
    %1629 = vmatmul.mubr.f32.gmra.mxu0 %v1559
    %v1630 = vpop.f32.mrf.mxu0
    %v1631 = vadd.f32 0.0, %v1630
    %v1632 = vpop.f32.mrf.mxu0
    %1633 = vmatprep.mubr.f32.mxu0 0.0
    %1634 = vmatmul.mubr.f32.gmra.mxu0 %v1562
    %v1635 = vpop.f32.mrf.mxu0
    %v1636 = vadd.f32 0.0, %v1635
    %v1637 = vpop.f32.mrf.mxu0
    %1638 = vdwg.mxu0
    %s1639 = scalar_lea.vmem %s6, 32
    %v1640 = vld [vmem:[%s1639] sm:$0xff]
    %v1641 = vld [vmem:[%s1639 + $0x8] sm:$0xff]
    %v1643 = vsel %vm345, %v1631, 0
    %v1646 = vsel %vm345, %v1636, 0
    %1648 = vmatprep.subr.mxu0 0.0
    %1649 = vmatpush1.msra.mxu0 0.0
    %1650 = vmatprep.subr.mxu0 0.0
    %1651 = vmatpush1.msra.mxu0 0.0
    %1652 = vmatprep.subr.mxu0 0.0
    %1653 = vmatpush1.msra.mxu0 0.0
    %1654 = vmatprep.subr.mxu0 0.0
    %1655 = vmatpush1.msra.mxu0 0.0
    %1656 = vmatprep.subr.mxu0 0.0
    %1657 = vmatpush1.msra.mxu0 0.0
    %1658 = vmatprep.subr.mxu0 0.0
    %1659 = vmatpush1.msra.mxu0 0.0
    %1660 = vmatprep.subr.mxu0 0.0
    %1661 = vmatpush1.msra.mxu0 0.0
    %1662 = vmatprep.subr.mxu0 0.0
    %1663 = vmatpush1.msra.mxu0 0.0
    %1664 = vmatprep.subr.mxu0 0.0
    %1665 = vmatpush1.msra.mxu0 0.0
    %1666 = vmatprep.subr.mxu0 0.0
    %1667 = vmatpush1.msra.mxu0 0.0
    %1668 = vmatprep.subr.mxu0 0.0
    %1669 = vmatpush1.msra.mxu0 0.0
    %1670 = vmatprep.subr.mxu0 0.0
    %1671 = vmatpush1.msra.mxu0 0.0
    %1672 = vmatprep.subr.mxu0 0.0
    %1673 = vmatpush1.msra.mxu0 0.0
    %1674 = vmatprep.subr.mxu0 0.0
    %1675 = vmatpush1.msra.mxu0 0.0
    %1676 = vmatprep.subr.mxu0 0.0
    %1677 = vmatpush1.msra.mxu0 %v1641
    %1678 = vmatprep.subr.mxu0 0.0
    %1679 = vmatpush1.msra.mxu0 %v1640
    %1680 = vmatprep.subr.mxu0 0.0
    %1681 = vmatpush2.msra.mxu0 0.0
    %1682 = vmatprep.subr.mxu0 0.0
    %1683 = vmatpush2.msra.mxu0 0.0
    %1684 = vmatprep.subr.mxu0 0.0
    %1685 = vmatpush2.msra.mxu0 0.0
    %1686 = vmatprep.subr.mxu0 0.0
    %1687 = vmatpush2.msra.mxu0 0.0
    %1688 = vmatprep.subr.mxu0 0.0
    %1689 = vmatpush2.msra.mxu0 0.0
    %1690 = vmatprep.subr.mxu0 0.0
    %1691 = vmatpush2.msra.mxu0 0.0
    %1692 = vmatprep.subr.mxu0 0.0
    %1693 = vmatpush2.msra.mxu0 0.0
    %1694 = vmatprep.subr.mxu0 0.0
    %1695 = vmatpush2.msra.mxu0 0.0
    %1696 = vmatprep.subr.mxu0 0.0
    %1697 = vmatpush2.msra.mxu0 0.0
    %1698 = vmatprep.subr.mxu0 0.0
    %1699 = vmatpush2.msra.mxu0 0.0
    %1700 = vmatprep.subr.mxu0 0.0
    %1701 = vmatpush2.msra.mxu0 0.0
    %1702 = vmatprep.subr.mxu0 0.0
    %1703 = vmatpush2.msra.mxu0 0.0
    %1704 = vmatprep.subr.mxu0 0.0
    %1705 = vmatpush2.msra.mxu0 0.0
    %1706 = vmatprep.subr.mxu0 0.0
    %1707 = vmatpush2.msra.mxu0 0.0
    %1708 = vmatprep.subr.mxu0 0.0
    %1709 = vmatpush2.msra.mxu0 0.0
    %1710 = vmatprep.subr.mxu0 0.0
    %1711 = vmatpush2.msra.mxu0 0.0
    %1712 = vmatprep.mubr.f32.mxu0 0.0
    %1713 = vmatmul.mubr.f32.gmra.mxu0 %v1643
    %v1714 = vpop.f32.mrf.mxu0
    %v1715 = vadd.f32 0.0, %v1714
    %v1716 = vpop.f32.mrf.mxu0
    %1717 = vmatprep.mubr.f32.mxu0 0.0
    %1718 = vmatmul.mubr.f32.gmra.mxu0 %v1646
    %v1719 = vpop.f32.mrf.mxu0
    %v1720 = vadd.f32 0.0, %v1719
    %v1721 = vpop.f32.mrf.mxu0
    %1722 = vdwg.mxu0
    %v1723 = vadd.f32 %v1163, %v1715
    %v1724 = vadd.f32 %v1168, %v1720
    %s1725 = scalar_lea.vmem %s4, 192
    %v1726 = vld [vmem:[%s1725] sm:$0xff]
    %v1727 = vld [vmem:[%s1725 + $0x8] sm:$0xff]
    %v1728 = vld [vmem:[%s1725 + $0x10] sm:$0xff]
    %v1729 = vld [vmem:[%s1725 + $0x18] sm:$0xff]
    %v1730 = vld [vmem:[%s1725 + $0x20] sm:$0xff]
    %v1731 = vld [vmem:[%s1725 + $0x28] sm:$0xff]
    %v1732 = vld [vmem:[%s1725 + $0x30] sm:$0xff]
    %v1733 = vld [vmem:[%s1725 + $0x38] sm:$0xff]
    %s1734 = scalar_lea.vmem %s5, 3
    %v1735 = vld [vmem:[%s1734] sm:$0x1]
    %v1737 = vlaneseq
    %v1738 = vshrl.u32 %v1737, 7
    %v1739 = vsub.s32 0, %v1738
    %v1740 = vrot.slane %v1735, %v1739
    %1742 = vmatprep.subr.mxu0 0.0
    %1743 = vmatpush1.msra.mxu0 0.0
    %1744 = vmatprep.subr.mxu0 0.0
    %1745 = vmatpush1.msra.mxu0 0.0
    %1746 = vmatprep.subr.mxu0 0.0
    %1747 = vmatpush1.msra.mxu0 0.0
    %1748 = vmatprep.subr.mxu0 0.0
    %1749 = vmatpush1.msra.mxu0 0.0
    %1750 = vmatprep.subr.mxu0 0.0
    %1751 = vmatpush1.msra.mxu0 0.0
    %1752 = vmatprep.subr.mxu0 0.0
    %1753 = vmatpush1.msra.mxu0 0.0
    %1754 = vmatprep.subr.mxu0 0.0
    %1755 = vmatpush1.msra.mxu0 0.0
    %1756 = vmatprep.subr.mxu0 0.0
    %1757 = vmatpush1.msra.mxu0 0.0
    %1758 = vmatprep.subr.mxu0 0.0
    %1759 = vmatpush1.msra.mxu0 %v1733
    %1760 = vmatprep.subr.mxu0 0.0
    %1761 = vmatpush1.msra.mxu0 %v1732
    %1762 = vmatprep.subr.mxu0 0.0
    %1763 = vmatpush1.msra.mxu0 %v1731
    %1764 = vmatprep.subr.mxu0 0.0
    %1765 = vmatpush1.msra.mxu0 %v1730
    %1766 = vmatprep.subr.mxu0 0.0
    %1767 = vmatpush1.msra.mxu0 %v1729
    %1768 = vmatprep.subr.mxu0 0.0
    %1769 = vmatpush1.msra.mxu0 %v1728
    %1770 = vmatprep.subr.mxu0 0.0
    %1771 = vmatpush1.msra.mxu0 %v1727
    %1772 = vmatprep.subr.mxu0 0.0
    %1773 = vmatpush1.msra.mxu0 %v1726
    %1774 = vmatprep.subr.mxu0 0.0
    %1775 = vmatpush2.msra.mxu0 0.0
    %1776 = vmatprep.subr.mxu0 0.0
    %1777 = vmatpush2.msra.mxu0 0.0
    %1778 = vmatprep.subr.mxu0 0.0
    %1779 = vmatpush2.msra.mxu0 0.0
    %1780 = vmatprep.subr.mxu0 0.0
    %1781 = vmatpush2.msra.mxu0 0.0
    %1782 = vmatprep.subr.mxu0 0.0
    %1783 = vmatpush2.msra.mxu0 0.0
    %1784 = vmatprep.subr.mxu0 0.0
    %1785 = vmatpush2.msra.mxu0 0.0
    %1786 = vmatprep.subr.mxu0 0.0
    %1787 = vmatpush2.msra.mxu0 0.0
    %1788 = vmatprep.subr.mxu0 0.0
    %1789 = vmatpush2.msra.mxu0 0.0
    %1790 = vmatprep.subr.mxu0 0.0
    %1791 = vmatpush2.msra.mxu0 0.0
    %1792 = vmatprep.subr.mxu0 0.0
    %1793 = vmatpush2.msra.mxu0 0.0
    %1794 = vmatprep.subr.mxu0 0.0
    %1795 = vmatpush2.msra.mxu0 0.0
    %1796 = vmatprep.subr.mxu0 0.0
    %1797 = vmatpush2.msra.mxu0 0.0
    %1798 = vmatprep.subr.mxu0 0.0
    %1799 = vmatpush2.msra.mxu0 0.0
    %1800 = vmatprep.subr.mxu0 0.0
    %1801 = vmatpush2.msra.mxu0 0.0
    %1802 = vmatprep.subr.mxu0 0.0
    %1803 = vmatpush2.msra.mxu0 0.0
    %1804 = vmatprep.subr.mxu0 0.0
    %1805 = vmatpush2.msra.mxu0 0.0
    %1806 = vmatprep.mubr.f32.mxu0 0.0
    %1807 = vmatmul.mubr.f32.gmra.mxu0 %v79
    %v1808 = vpop.f32.mrf.mxu0
    %v1809 = vadd.f32 %v1740, %v1808
    %v1810 = vpop.f32.mrf.mxu0
    %1811 = vmatprep.mubr.f32.mxu0 0.0
    %1812 = vmatmul.mubr.f32.gmra.mxu0 %v82
    %v1813 = vpop.f32.mrf.mxu0
    %v1814 = vadd.f32 %v1740, %v1813
    %v1815 = vpop.f32.mrf.mxu0
    %1816 = vdwg.mxu0
    %s1817 = scalar_lea.vmem %s4, 448
    %v1818 = vld [vmem:[%s1817] sm:$0xff]
    %v1819 = vld [vmem:[%s1817 + $0x8] sm:$0xff]
    %v1820 = vld [vmem:[%s1817 + $0x10] sm:$0xff]
    %v1821 = vld [vmem:[%s1817 + $0x18] sm:$0xff]
    %v1822 = vld [vmem:[%s1817 + $0x20] sm:$0xff]
    %v1823 = vld [vmem:[%s1817 + $0x28] sm:$0xff]
    %v1824 = vld [vmem:[%s1817 + $0x30] sm:$0xff]
    %v1825 = vld [vmem:[%s1817 + $0x38] sm:$0xff]
    %s1826 = scalar_lea.vmem %s5, 7
    %v1827 = vld [vmem:[%s1826] sm:$0x1]
    %v1829 = vlaneseq
    %v1830 = vshrl.u32 %v1829, 7
    %v1831 = vsub.s32 0, %v1830
    %v1832 = vrot.slane %v1827, %v1831
    %1834 = vmatprep.subr.mxu0 0.0
    %1835 = vmatpush1.msra.mxu0 0.0
    %1836 = vmatprep.subr.mxu0 0.0
    %1837 = vmatpush1.msra.mxu0 0.0
    %1838 = vmatprep.subr.mxu0 0.0
    %1839 = vmatpush1.msra.mxu0 0.0
    %1840 = vmatprep.subr.mxu0 0.0
    %1841 = vmatpush1.msra.mxu0 0.0
    %1842 = vmatprep.subr.mxu0 0.0
    %1843 = vmatpush1.msra.mxu0 0.0
    %1844 = vmatprep.subr.mxu0 0.0
    %1845 = vmatpush1.msra.mxu0 0.0
    %1846 = vmatprep.subr.mxu0 0.0
    %1847 = vmatpush1.msra.mxu0 0.0
    %1848 = vmatprep.subr.mxu0 0.0
    %1849 = vmatpush1.msra.mxu0 0.0
    %1850 = vmatprep.subr.mxu0 0.0
    %1851 = vmatpush1.msra.mxu0 %v1825
    %1852 = vmatprep.subr.mxu0 0.0
    %1853 = vmatpush1.msra.mxu0 %v1824
    %1854 = vmatprep.subr.mxu0 0.0
    %1855 = vmatpush1.msra.mxu0 %v1823
    %1856 = vmatprep.subr.mxu0 0.0
    %1857 = vmatpush1.msra.mxu0 %v1822
    %1858 = vmatprep.subr.mxu0 0.0
    %1859 = vmatpush1.msra.mxu0 %v1821
    %1860 = vmatprep.subr.mxu0 0.0
    %1861 = vmatpush1.msra.mxu0 %v1820
    %1862 = vmatprep.subr.mxu0 0.0
    %1863 = vmatpush1.msra.mxu0 %v1819
    %1864 = vmatprep.subr.mxu0 0.0
    %1865 = vmatpush1.msra.mxu0 %v1818
    %1866 = vmatprep.subr.mxu0 0.0
    %1867 = vmatpush2.msra.mxu0 0.0
    %1868 = vmatprep.subr.mxu0 0.0
    %1869 = vmatpush2.msra.mxu0 0.0
    %1870 = vmatprep.subr.mxu0 0.0
    %1871 = vmatpush2.msra.mxu0 0.0
    %1872 = vmatprep.subr.mxu0 0.0
    %1873 = vmatpush2.msra.mxu0 0.0
    %1874 = vmatprep.subr.mxu0 0.0
    %1875 = vmatpush2.msra.mxu0 0.0
    %1876 = vmatprep.subr.mxu0 0.0
    %1877 = vmatpush2.msra.mxu0 0.0
    %1878 = vmatprep.subr.mxu0 0.0
    %1879 = vmatpush2.msra.mxu0 0.0
    %1880 = vmatprep.subr.mxu0 0.0
    %1881 = vmatpush2.msra.mxu0 0.0
    %1882 = vmatprep.subr.mxu0 0.0
    %1883 = vmatpush2.msra.mxu0 0.0
    %1884 = vmatprep.subr.mxu0 0.0
    %1885 = vmatpush2.msra.mxu0 0.0
    %1886 = vmatprep.subr.mxu0 0.0
    %1887 = vmatpush2.msra.mxu0 0.0
    %1888 = vmatprep.subr.mxu0 0.0
    %1889 = vmatpush2.msra.mxu0 0.0
    %1890 = vmatprep.subr.mxu0 0.0
    %1891 = vmatpush2.msra.mxu0 0.0
    %1892 = vmatprep.subr.mxu0 0.0
    %1893 = vmatpush2.msra.mxu0 0.0
    %1894 = vmatprep.subr.mxu0 0.0
    %1895 = vmatpush2.msra.mxu0 0.0
    %1896 = vmatprep.subr.mxu0 0.0
    %1897 = vmatpush2.msra.mxu0 0.0
    %1898 = vmatprep.mubr.f32.mxu0 0.0
    %1899 = vmatmul.mubr.f32.gmra.mxu0 %v79
    %v1900 = vpop.f32.mrf.mxu0
    %v1901 = vadd.f32 %v1832, %v1900
    %v1902 = vpop.f32.mrf.mxu0
    %1903 = vmatprep.mubr.f32.mxu0 0.0
    %1904 = vmatmul.mubr.f32.gmra.mxu0 %v82
    %v1905 = vpop.f32.mrf.mxu0
    %v1906 = vadd.f32 %v1832, %v1905
    %v1907 = vpop.f32.mrf.mxu0
    %1908 = vdwg.mxu0
    %s1909 = scalar_lea.vmem %s4, 704
    %v1910 = vld [vmem:[%s1909] sm:$0xff]
    %v1911 = vld [vmem:[%s1909 + $0x8] sm:$0xff]
    %v1912 = vld [vmem:[%s1909 + $0x10] sm:$0xff]
    %v1913 = vld [vmem:[%s1909 + $0x18] sm:$0xff]
    %v1914 = vld [vmem:[%s1909 + $0x20] sm:$0xff]
    %v1915 = vld [vmem:[%s1909 + $0x28] sm:$0xff]
    %v1916 = vld [vmem:[%s1909 + $0x30] sm:$0xff]
    %v1917 = vld [vmem:[%s1909 + $0x38] sm:$0xff]
    %s1918 = scalar_lea.vmem %s5, 11
    %v1919 = vld [vmem:[%s1918] sm:$0x1]
    %v1921 = vlaneseq
    %v1922 = vshrl.u32 %v1921, 7
    %v1923 = vsub.s32 0, %v1922
    %v1924 = vrot.slane %v1919, %v1923
    %1926 = vmatprep.subr.mxu0 0.0
    %1927 = vmatpush1.msra.mxu0 0.0
    %1928 = vmatprep.subr.mxu0 0.0
    %1929 = vmatpush1.msra.mxu0 0.0
    %1930 = vmatprep.subr.mxu0 0.0
    %1931 = vmatpush1.msra.mxu0 0.0
    %1932 = vmatprep.subr.mxu0 0.0
    %1933 = vmatpush1.msra.mxu0 0.0
    %1934 = vmatprep.subr.mxu0 0.0
    %1935 = vmatpush1.msra.mxu0 0.0
    %1936 = vmatprep.subr.mxu0 0.0
    %1937 = vmatpush1.msra.mxu0 0.0
    %1938 = vmatprep.subr.mxu0 0.0
    %1939 = vmatpush1.msra.mxu0 0.0
    %1940 = vmatprep.subr.mxu0 0.0
    %1941 = vmatpush1.msra.mxu0 0.0
    %1942 = vmatprep.subr.mxu0 0.0
    %1943 = vmatpush1.msra.mxu0 %v1917
    %1944 = vmatprep.subr.mxu0 0.0
    %1945 = vmatpush1.msra.mxu0 %v1916
    %1946 = vmatprep.subr.mxu0 0.0
    %1947 = vmatpush1.msra.mxu0 %v1915
    %1948 = vmatprep.subr.mxu0 0.0
    %1949 = vmatpush1.msra.mxu0 %v1914
    %1950 = vmatprep.subr.mxu0 0.0
    %1951 = vmatpush1.msra.mxu0 %v1913
    %1952 = vmatprep.subr.mxu0 0.0
    %1953 = vmatpush1.msra.mxu0 %v1912
    %1954 = vmatprep.subr.mxu0 0.0
    %1955 = vmatpush1.msra.mxu0 %v1911
    %1956 = vmatprep.subr.mxu0 0.0
    %1957 = vmatpush1.msra.mxu0 %v1910
    %1958 = vmatprep.subr.mxu0 0.0
    %1959 = vmatpush2.msra.mxu0 0.0
    %1960 = vmatprep.subr.mxu0 0.0
    %1961 = vmatpush2.msra.mxu0 0.0
    %1962 = vmatprep.subr.mxu0 0.0
    %1963 = vmatpush2.msra.mxu0 0.0
    %1964 = vmatprep.subr.mxu0 0.0
    %1965 = vmatpush2.msra.mxu0 0.0
    %1966 = vmatprep.subr.mxu0 0.0
    %1967 = vmatpush2.msra.mxu0 0.0
    %1968 = vmatprep.subr.mxu0 0.0
    %1969 = vmatpush2.msra.mxu0 0.0
    %1970 = vmatprep.subr.mxu0 0.0
    %1971 = vmatpush2.msra.mxu0 0.0
    %1972 = vmatprep.subr.mxu0 0.0
    %1973 = vmatpush2.msra.mxu0 0.0
    %1974 = vmatprep.subr.mxu0 0.0
    %1975 = vmatpush2.msra.mxu0 0.0
    %1976 = vmatprep.subr.mxu0 0.0
    %1977 = vmatpush2.msra.mxu0 0.0
    %1978 = vmatprep.subr.mxu0 0.0
    %1979 = vmatpush2.msra.mxu0 0.0
    %1980 = vmatprep.subr.mxu0 0.0
    %1981 = vmatpush2.msra.mxu0 0.0
    %1982 = vmatprep.subr.mxu0 0.0
    %1983 = vmatpush2.msra.mxu0 0.0
    %1984 = vmatprep.subr.mxu0 0.0
    %1985 = vmatpush2.msra.mxu0 0.0
    %1986 = vmatprep.subr.mxu0 0.0
    %1987 = vmatpush2.msra.mxu0 0.0
    %1988 = vmatprep.subr.mxu0 0.0
    %1989 = vmatpush2.msra.mxu0 0.0
    %1990 = vmatprep.mubr.f32.mxu0 0.0
    %1991 = vmatmul.mubr.f32.gmra.mxu0 %v79
    %v1992 = vpop.f32.mrf.mxu0
    %v1993 = vadd.f32 %v1924, %v1992
    %v1994 = vpop.f32.mrf.mxu0
    %1995 = vmatprep.mubr.f32.mxu0 0.0
    %1996 = vmatmul.mubr.f32.gmra.mxu0 %v82
    %v1997 = vpop.f32.mrf.mxu0
    %v1998 = vadd.f32 %v1924, %v1997
    %v1999 = vpop.f32.mrf.mxu0
    %2000 = vdwg.mxu0
    %v2001 = vmul.f32 %v1809, 0.25
    %v2002 = vmul.f32 %v1814, 0.25
    %v2004 = vsel %vm345, %v2001, 0
    %v2007 = vsel %vm345, %v2002, 0
    %v2010 = vsel %vm345, %v1901, 0
    %v2013 = vsel %vm345, %v1906, 0
    %2015 = vmatprep.subr.mxu0 0.0
    %2016 = vmatpush1.xpose.msra.mxu0 0.0
    %2017 = vmatprep.subr.mxu0 0.0
    %2018 = vmatpush1.xpose.msra.mxu0 0.0
    %2019 = vmatprep.subr.mxu0 0.0
    %2020 = vmatpush1.xpose.msra.mxu0 0.0
    %2021 = vmatprep.subr.mxu0 0.0
    %2022 = vmatpush1.xpose.msra.mxu0 0.0
    %2023 = vmatprep.subr.mxu0 0.0
    %2024 = vmatpush1.xpose.msra.mxu0 0.0
    %2025 = vmatprep.subr.mxu0 0.0
    %2026 = vmatpush1.xpose.msra.mxu0 0.0
    %2027 = vmatprep.subr.mxu0 0.0
    %2028 = vmatpush1.xpose.msra.mxu0 0.0
    %2029 = vmatprep.subr.mxu0 0.0
    %2030 = vmatpush1.xpose.msra.mxu0 0.0
    %2031 = vmatprep.subr.mxu0 0.0
    %2032 = vmatpush1.xpose.msra.mxu0 0.0
    %2033 = vmatprep.subr.mxu0 0.0
    %2034 = vmatpush1.xpose.msra.mxu0 0.0
    %2035 = vmatprep.subr.mxu0 0.0
    %2036 = vmatpush1.xpose.msra.mxu0 0.0
    %2037 = vmatprep.subr.mxu0 0.0
    %2038 = vmatpush1.xpose.msra.mxu0 0.0
    %2039 = vmatprep.subr.mxu0 0.0
    %2040 = vmatpush1.xpose.msra.mxu0 0.0
    %2041 = vmatprep.subr.mxu0 0.0
    %2042 = vmatpush1.xpose.msra.mxu0 0.0
    %2043 = vmatprep.subr.mxu0 0.0
    %2044 = vmatpush1.xpose.msra.mxu0 %v2013
    %2045 = vmatprep.subr.mxu0 0.0
    %2046 = vmatpush1.xpose.msra.mxu0 %v2010
    %2047 = vmatprep.subr.mxu0 0.0
    %2048 = vmatpush2.xpose.msra.mxu0 0.0
    %2049 = vmatprep.subr.mxu0 0.0
    %2050 = vmatpush2.xpose.msra.mxu0 0.0
    %2051 = vmatprep.subr.mxu0 0.0
    %2052 = vmatpush2.xpose.msra.mxu0 0.0
    %2053 = vmatprep.subr.mxu0 0.0
    %2054 = vmatpush2.xpose.msra.mxu0 0.0
    %2055 = vmatprep.subr.mxu0 0.0
    %2056 = vmatpush2.xpose.msra.mxu0 0.0
    %2057 = vmatprep.subr.mxu0 0.0
    %2058 = vmatpush2.xpose.msra.mxu0 0.0
    %2059 = vmatprep.subr.mxu0 0.0
    %2060 = vmatpush2.xpose.msra.mxu0 0.0
    %2061 = vmatprep.subr.mxu0 0.0
    %2062 = vmatpush2.xpose.msra.mxu0 0.0
    %2063 = vmatprep.subr.mxu0 0.0
    %2064 = vmatpush2.xpose.msra.mxu0 0.0
    %2065 = vmatprep.subr.mxu0 0.0
    %2066 = vmatpush2.xpose.msra.mxu0 0.0
    %2067 = vmatprep.subr.mxu0 0.0
    %2068 = vmatpush2.xpose.msra.mxu0 0.0
    %2069 = vmatprep.subr.mxu0 0.0
    %2070 = vmatpush2.xpose.msra.mxu0 0.0
    %2071 = vmatprep.subr.mxu0 0.0
    %2072 = vmatpush2.xpose.msra.mxu0 0.0
    %2073 = vmatprep.subr.mxu0 0.0
    %2074 = vmatpush2.xpose.msra.mxu0 0.0
    %2075 = vmatprep.subr.mxu0 0.0
    %2076 = vmatpush2.xpose.msra.mxu0 0.0
    %2077 = vmatprep.subr.mxu0 0.0
    %2078 = vmatpush2.xpose.msra.mxu0 0.0
    %2079 = vmatprep.mubr.f32.mxu0 0.0
    %2080 = vmatmul.mubr.f32.gmra.mxu0 %v2004
    %v2081 = vpop.f32.mrf.mxu0
    %v2082 = vadd.f32 %v60, %v2081
    %v2083 = vpop.f32.mrf.mxu0
    %2084 = vmatprep.mubr.f32.mxu0 0.0
    %2085 = vmatmul.mubr.f32.gmra.mxu0 %v2007
    %v2086 = vpop.f32.mrf.mxu0
    %v2087 = vadd.f32 %v61, %v2086
    %v2088 = vpop.f32.mrf.mxu0
    %2089 = vdwg.mxu0
    %v2090 = vsel %vm345, %v2082, -inf
    %2091 = vmax.xlane.f32.xlu0 %v2090
    %v2092 = vpop.xlane.xlu0 %2091
    %v2093 = vsel %vm345, %v2087, -inf
    %2094 = vmax.xlane.f32.xlu0 %v2093
    %v2095 = vpop.xlane.xlu0 %2094
    %v2096 = vsub.f32 %v2082, %v2092
    %v2097 = vsub.f32 %v2087, %v2095
    %v2098 = vmul.f32 %v2096, 1.442695
    %v2099 = vpow.pop %v2098
    %v2100 = vmul.f32 %v2097, 1.442695
    %v2101 = vpow.pop %v2100
    %v2102 = vsel %vm345, %v2099, 0.0
    %2103 = vadd.xlane.f32.xlu0 %v2102
    %v2104 = vpop.xlane.xlu0 %2103
    %v2105 = vsel %vm345, %v2101, 0.0
    %2106 = vadd.xlane.f32.xlu0 %v2105
    %v2107 = vpop.xlane.xlu0 %2106
    %v2108 = vrcp.pop %v2104
    %v2109 = vrcp.pop %v2107
    %v2110 = vmul.f32 %v2099, %v2108
    %v2111 = vmul.f32 %v2101, %v2109
    %v2113 = vsel %vm345, %v2110, 0
    %v2116 = vsel %vm345, %v2111, 0
    %2118 = vmatprep.subr.mxu0 0.0
    %2119 = vmatpush1.msra.mxu0 0.0
    %2120 = vmatprep.subr.mxu0 0.0
    %2121 = vmatpush1.msra.mxu0 0.0
    %2122 = vmatprep.subr.mxu0 0.0
    %2123 = vmatpush1.msra.mxu0 0.0
    %2124 = vmatprep.subr.mxu0 0.0
    %2125 = vmatpush1.msra.mxu0 0.0
    %2126 = vmatprep.subr.mxu0 0.0
    %2127 = vmatpush1.msra.mxu0 0.0
    %2128 = vmatprep.subr.mxu0 0.0
    %2129 = vmatpush1.msra.mxu0 0.0
    %2130 = vmatprep.subr.mxu0 0.0
    %2131 = vmatpush1.msra.mxu0 0.0
    %2132 = vmatprep.subr.mxu0 0.0
    %2133 = vmatpush1.msra.mxu0 0.0
    %2134 = vmatprep.subr.mxu0 0.0
    %2135 = vmatpush1.msra.mxu0 0.0
    %2136 = vmatprep.subr.mxu0 0.0
    %2137 = vmatpush1.msra.mxu0 0.0
    %2138 = vmatprep.subr.mxu0 0.0
    %2139 = vmatpush1.msra.mxu0 0.0
    %2140 = vmatprep.subr.mxu0 0.0
    %2141 = vmatpush1.msra.mxu0 0.0
    %2142 = vmatprep.subr.mxu0 0.0
    %2143 = vmatpush1.msra.mxu0 0.0
    %2144 = vmatprep.subr.mxu0 0.0
    %2145 = vmatpush1.msra.mxu0 0.0
    %2146 = vmatprep.subr.mxu0 0.0
    %2147 = vmatpush1.msra.mxu0 %v1998
    %2148 = vmatprep.subr.mxu0 0.0
    %2149 = vmatpush1.msra.mxu0 %v1993
    %2150 = vmatprep.subr.mxu0 0.0
    %2151 = vmatpush2.msra.mxu0 0.0
    %2152 = vmatprep.subr.mxu0 0.0
    %2153 = vmatpush2.msra.mxu0 0.0
    %2154 = vmatprep.subr.mxu0 0.0
    %2155 = vmatpush2.msra.mxu0 0.0
    %2156 = vmatprep.subr.mxu0 0.0
    %2157 = vmatpush2.msra.mxu0 0.0
    %2158 = vmatprep.subr.mxu0 0.0
    %2159 = vmatpush2.msra.mxu0 0.0
    %2160 = vmatprep.subr.mxu0 0.0
    %2161 = vmatpush2.msra.mxu0 0.0
    %2162 = vmatprep.subr.mxu0 0.0
    %2163 = vmatpush2.msra.mxu0 0.0
    %2164 = vmatprep.subr.mxu0 0.0
    %2165 = vmatpush2.msra.mxu0 0.0
    %2166 = vmatprep.subr.mxu0 0.0
    %2167 = vmatpush2.msra.mxu0 0.0
    %2168 = vmatprep.subr.mxu0 0.0
    %2169 = vmatpush2.msra.mxu0 0.0
    %2170 = vmatprep.subr.mxu0 0.0
    %2171 = vmatpush2.msra.mxu0 0.0
    %2172 = vmatprep.subr.mxu0 0.0
    %2173 = vmatpush2.msra.mxu0 0.0
    %2174 = vmatprep.subr.mxu0 0.0
    %2175 = vmatpush2.msra.mxu0 0.0
    %2176 = vmatprep.subr.mxu0 0.0
    %2177 = vmatpush2.msra.mxu0 0.0
    %2178 = vmatprep.subr.mxu0 0.0
    %2179 = vmatpush2.msra.mxu0 0.0
    %2180 = vmatprep.subr.mxu0 0.0
    %2181 = vmatpush2.msra.mxu0 0.0
    %2182 = vmatprep.mubr.f32.mxu0 0.0
    %2183 = vmatmul.mubr.f32.gmra.mxu0 %v2113
    %v2184 = vpop.f32.mrf.mxu0
    %v2185 = vadd.f32 0.0, %v2184
    %v2186 = vpop.f32.mrf.mxu0
    %2187 = vmatprep.mubr.f32.mxu0 0.0
    %2188 = vmatmul.mubr.f32.gmra.mxu0 %v2116
    %v2189 = vpop.f32.mrf.mxu0
    %v2190 = vadd.f32 0.0, %v2189
    %v2191 = vpop.f32.mrf.mxu0
    %2192 = vdwg.mxu0
    %s2193 = scalar_lea.vmem %s6, 48
    %v2194 = vld [vmem:[%s2193] sm:$0xff]
    %v2195 = vld [vmem:[%s2193 + $0x8] sm:$0xff]
    %v2197 = vsel %vm345, %v2185, 0
    %v2200 = vsel %vm345, %v2190, 0
    %2202 = vmatprep.subr.mxu0 0.0
    %2203 = vmatpush1.msra.mxu0 0.0
    %2204 = vmatprep.subr.mxu0 0.0
    %2205 = vmatpush1.msra.mxu0 0.0
    %2206 = vmatprep.subr.mxu0 0.0
    %2207 = vmatpush1.msra.mxu0 0.0
    %2208 = vmatprep.subr.mxu0 0.0
    %2209 = vmatpush1.msra.mxu0 0.0
    %2210 = vmatprep.subr.mxu0 0.0
    %2211 = vmatpush1.msra.mxu0 0.0
    %2212 = vmatprep.subr.mxu0 0.0
    %2213 = vmatpush1.msra.mxu0 0.0
    %2214 = vmatprep.subr.mxu0 0.0
    %2215 = vmatpush1.msra.mxu0 0.0
    %2216 = vmatprep.subr.mxu0 0.0
    %2217 = vmatpush1.msra.mxu0 0.0
    %2218 = vmatprep.subr.mxu0 0.0
    %2219 = vmatpush1.msra.mxu0 0.0
    %2220 = vmatprep.subr.mxu0 0.0
    %2221 = vmatpush1.msra.mxu0 0.0
    %2222 = vmatprep.subr.mxu0 0.0
    %2223 = vmatpush1.msra.mxu0 0.0
    %2224 = vmatprep.subr.mxu0 0.0
    %2225 = vmatpush1.msra.mxu0 0.0
    %2226 = vmatprep.subr.mxu0 0.0
    %2227 = vmatpush1.msra.mxu0 0.0
    %2228 = vmatprep.subr.mxu0 0.0
    %2229 = vmatpush1.msra.mxu0 0.0
    %2230 = vmatprep.subr.mxu0 0.0
    %2231 = vmatpush1.msra.mxu0 %v2195
    %2232 = vmatprep.subr.mxu0 0.0
    %2233 = vmatpush1.msra.mxu0 %v2194
    %2234 = vmatprep.subr.mxu0 0.0
    %2235 = vmatpush2.msra.mxu0 0.0
    %2236 = vmatprep.subr.mxu0 0.0
    %2237 = vmatpush2.msra.mxu0 0.0
    %2238 = vmatprep.subr.mxu0 0.0
    %2239 = vmatpush2.msra.mxu0 0.0
    %2240 = vmatprep.subr.mxu0 0.0
    %2241 = vmatpush2.msra.mxu0 0.0
    %2242 = vmatprep.subr.mxu0 0.0
    %2243 = vmatpush2.msra.mxu0 0.0
    %2244 = vmatprep.subr.mxu0 0.0
    %2245 = vmatpush2.msra.mxu0 0.0
    %2246 = vmatprep.subr.mxu0 0.0
    %2247 = vmatpush2.msra.mxu0 0.0
    %2248 = vmatprep.subr.mxu0 0.0
    %2249 = vmatpush2.msra.mxu0 0.0
    %2250 = vmatprep.subr.mxu0 0.0
    %2251 = vmatpush2.msra.mxu0 0.0
    %2252 = vmatprep.subr.mxu0 0.0
    %2253 = vmatpush2.msra.mxu0 0.0
    %2254 = vmatprep.subr.mxu0 0.0
    %2255 = vmatpush2.msra.mxu0 0.0
    %2256 = vmatprep.subr.mxu0 0.0
    %2257 = vmatpush2.msra.mxu0 0.0
    %2258 = vmatprep.subr.mxu0 0.0
    %2259 = vmatpush2.msra.mxu0 0.0
    %2260 = vmatprep.subr.mxu0 0.0
    %2261 = vmatpush2.msra.mxu0 0.0
    %2262 = vmatprep.subr.mxu0 0.0
    %2263 = vmatpush2.msra.mxu0 0.0
    %2264 = vmatprep.subr.mxu0 0.0
    %2265 = vmatpush2.msra.mxu0 0.0
    %2266 = vmatprep.mubr.f32.mxu0 0.0
    %2267 = vmatmul.mubr.f32.gmra.mxu0 %v2197
    %v2268 = vpop.f32.mrf.mxu0
    %v2269 = vadd.f32 0.0, %v2268
    %v2270 = vpop.f32.mrf.mxu0
    %2271 = vmatprep.mubr.f32.mxu0 0.0
    %2272 = vmatmul.mubr.f32.gmra.mxu0 %v2200
    %v2273 = vpop.f32.mrf.mxu0
    %v2274 = vadd.f32 0.0, %v2273
    %v2275 = vpop.f32.mrf.mxu0
    %2276 = vdwg.mxu0
    %v2277 = vadd.f32 %v1723, %v2269
    %v2278 = vadd.f32 %v1724, %v2274
    %v2279 = vlaneseq
    %v2280 = vshrl.u32 %v2279, 7
    %v2281 = vsub.s32 1, %v2280
    %v2282 = vrot.slane %v37, %v2281
    %v2283 = vadd.f32 %v2277, %v2282
    %v2284 = vadd.f32 %v2278, %v2282
    %v2285 = vadd.f32 %v58, %v2283
    %v2286 = vadd.f32 %v59, %v2284
    %v2287 = vsel %vm77, %v2285, 0.0
    %2288 = vadd.xlane.f32.xlu0 %v2287
    %v2289 = vpop.xlane.xlu0 %2288
    %v2290 = vsel %vm77, %v2286, 0.0
    %2291 = vadd.xlane.f32.xlu0 %v2290
    %v2292 = vpop.xlane.xlu0 %2291
    %v2293 = vrcp.pop 64.0
    %v2294 = vmul.f32 %v2289, %v2293
    %v2295 = vmul.f32 %v2292, %v2293
    %v2296 = vsub.f32 %v2285, %v2294
    %v2297 = vsub.f32 %v2286, %v2295
    %v2298 = vmul.f32 %v2296, %v2296
    %v2299 = vmul.f32 %v2297, %v2297
    %v2300 = vsel %vm77, %v2298, 0.0
    %2301 = vadd.xlane.f32.xlu0 %v2300
    %v2302 = vpop.xlane.xlu0 %2301
    %v2303 = vsel %vm77, %v2299, 0.0
    %2304 = vadd.xlane.f32.xlu0 %v2303
    %v2305 = vpop.xlane.xlu0 %2304
    %v2306 = vmul.f32 %v2302, %v2293
    %v2307 = vmul.f32 %v2305, %v2293
    %v2308 = vadd.f32 %v2306, 1e-05
    %v2309 = vadd.f32 %v2307, 1e-05
    %v2310 = vrsqrt.pop %v2308
    %v2311 = vrsqrt.pop %v2309
    %v2312 = vmul.f32 %v2296, %v2310
    %v2313 = vmul.f32 %v2297, %v2311
    %v2314 = vlaneseq
    %v2315 = vshrl.u32 %v2314, 7
    %v2316 = vsub.s32 2, %v2315
    %v2317 = vrot.slane %v37, %v2316
    %v2318 = vmul.f32 %v2312, %v2317
    %v2319 = vmul.f32 %v2313, %v2317
    %v2320 = vlaneseq
    %v2321 = vshrl.u32 %v2320, 7
    %v2322 = vsub.s32 3, %v2321
    %v2323 = vrot.slane %v37, %v2322
    %v2324 = vadd.f32 %v2318, %v2323
    %v2325 = vadd.f32 %v2319, %v2323
    %v2326 = vpack.c.bf16 %v2325, %v2324
    %v2327 = vld [vmem:[%s7] sm:$0xff]
    %v2328 = vld [vmem:[%s7 + $0x8] sm:$0xff]
    %v2329 = vld [vmem:[%s7 + $0x10] sm:$0xff]
    %v2330 = vld [vmem:[%s7 + $0x18] sm:$0xff]
    %v2331 = vld [vmem:[%s7 + $0x20] sm:$0xff]
    %v2332 = vld [vmem:[%s7 + $0x28] sm:$0xff]
    %v2333 = vld [vmem:[%s7 + $0x30] sm:$0xff]
    %v2334 = vld [vmem:[%s7 + $0x38] sm:$0xff]
    %v2335 = vld [vmem:[%s7 + $0x40] sm:$0xff]
    %v2336 = vld [vmem:[%s7 + $0x48] sm:$0xff]
    %v2337 = vld [vmem:[%s7 + $0x50] sm:$0xff]
    %v2338 = vld [vmem:[%s7 + $0x58] sm:$0xff]
    %v2339 = vld [vmem:[%s7 + $0x60] sm:$0xff]
    %v2340 = vld [vmem:[%s7 + $0x68] sm:$0xff]
    %v2341 = vld [vmem:[%s7 + $0x70] sm:$0xff]
    %v2342 = vld [vmem:[%s7 + $0x78] sm:$0xff]
    %v2343 = vld [vmem:[%s7 + $0x80] sm:$0xff]
    %v2344 = vld [vmem:[%s7 + $0x88] sm:$0xff]
    %v2345 = vld [vmem:[%s7 + $0x90] sm:$0xff]
    %v2346 = vld [vmem:[%s7 + $0x98] sm:$0xff]
    %v2347 = vld [vmem:[%s7 + $0xa0] sm:$0xff]
    %v2348 = vld [vmem:[%s7 + $0xa8] sm:$0xff]
    %v2349 = vld [vmem:[%s7 + $0xb0] sm:$0xff]
    %v2350 = vld [vmem:[%s7 + $0xb8] sm:$0xff]
    %v2351 = vld [vmem:[%s7 + $0xc0] sm:$0xff]
    %v2352 = vld [vmem:[%s7 + $0xc8] sm:$0xff]
    %v2353 = vld [vmem:[%s7 + $0xd0] sm:$0xff]
    %v2354 = vld [vmem:[%s7 + $0xd8] sm:$0xff]
    %v2355 = vld [vmem:[%s7 + $0xe0] sm:$0xff]
    %v2356 = vld [vmem:[%s7 + $0xe8] sm:$0xff]
    %v2357 = vld [vmem:[%s7 + $0xf0] sm:$0xff]
    %v2358 = vld [vmem:[%s7 + $0xf8] sm:$0xff]
    %v2359 = vld [vmem:[%s7 + $0x100] sm:$0xff]
    %v2360 = vld [vmem:[%s7 + $0x108] sm:$0xff]
    %v2361 = vld [vmem:[%s7 + $0x110] sm:$0xff]
    %v2362 = vld [vmem:[%s7 + $0x118] sm:$0xff]
    %v2363 = vld [vmem:[%s7 + $0x120] sm:$0xff]
    %v2364 = vld [vmem:[%s7 + $0x128] sm:$0xff]
    %v2365 = vld [vmem:[%s7 + $0x130] sm:$0xff]
    %v2366 = vld [vmem:[%s7 + $0x138] sm:$0xff]
    %v2367 = vld [vmem:[%s7 + $0x140] sm:$0xff]
    %v2368 = vld [vmem:[%s7 + $0x148] sm:$0xff]
    %v2369 = vld [vmem:[%s7 + $0x150] sm:$0xff]
    %v2370 = vld [vmem:[%s7 + $0x158] sm:$0xff]
    %v2371 = vld [vmem:[%s7 + $0x160] sm:$0xff]
    %v2372 = vld [vmem:[%s7 + $0x168] sm:$0xff]
    %v2373 = vld [vmem:[%s7 + $0x170] sm:$0xff]
    %v2374 = vld [vmem:[%s7 + $0x178] sm:$0xff]
    %v2375 = vld [vmem:[%s7 + $0x180] sm:$0xff]
    %v2376 = vld [vmem:[%s7 + $0x188] sm:$0xff]
    %v2377 = vld [vmem:[%s7 + $0x190] sm:$0xff]
    %v2378 = vld [vmem:[%s7 + $0x198] sm:$0xff]
    %v2379 = vld [vmem:[%s7 + $0x1a0] sm:$0xff]
    %v2380 = vld [vmem:[%s7 + $0x1a8] sm:$0xff]
    %v2381 = vld [vmem:[%s7 + $0x1b0] sm:$0xff]
    %v2382 = vld [vmem:[%s7 + $0x1b8] sm:$0xff]
    %v2383 = vld [vmem:[%s7 + $0x1c0] sm:$0xff]
    %v2384 = vld [vmem:[%s7 + $0x1c8] sm:$0xff]
    %v2385 = vld [vmem:[%s7 + $0x1d0] sm:$0xff]
    %v2386 = vld [vmem:[%s7 + $0x1d8] sm:$0xff]
    %v2387 = vld [vmem:[%s7 + $0x1e0] sm:$0xff]
    %v2388 = vld [vmem:[%s7 + $0x1e8] sm:$0xff]
    %v2389 = vld [vmem:[%s7 + $0x1f0] sm:$0xff]
    %v2390 = vld [vmem:[%s7 + $0x1f8] sm:$0xff]
    %v2391 = vld [vmem:[%s8] sm:$0xff]
    %v2392 = vld [vmem:[%s8 + $0x8] sm:$0xff]
    %v2395 = vlaneseq
    %v2396 = vshrl.u32 %v2395, 7
    %v2397 = vsub.s32 0, %v2396
    %v2398 = vrot.slane %v2391, %v2397
    %v2399 = vlaneseq
    %v2400 = vshrl.u32 %v2399, 7
    %v2401 = vsub.s32 1, %v2400
    %v2402 = vrot.slane %v2391, %v2401
    %v2403 = vlaneseq
    %v2404 = vshrl.u32 %v2403, 7
    %v2405 = vsub.s32 2, %v2404
    %v2406 = vrot.slane %v2391, %v2405
    %v2407 = vlaneseq
    %v2408 = vshrl.u32 %v2407, 7
    %v2409 = vsub.s32 3, %v2408
    %v2410 = vrot.slane %v2391, %v2409
    %v2411 = vlaneseq
    %v2412 = vshrl.u32 %v2411, 7
    %v2413 = vsub.s32 4, %v2412
    %v2414 = vrot.slane %v2391, %v2413
    %v2415 = vlaneseq
    %v2416 = vshrl.u32 %v2415, 7
    %v2417 = vsub.s32 5, %v2416
    %v2418 = vrot.slane %v2391, %v2417
    %v2419 = vlaneseq
    %v2420 = vshrl.u32 %v2419, 7
    %v2421 = vsub.s32 6, %v2420
    %v2422 = vrot.slane %v2391, %v2421
    %v2423 = vlaneseq
    %v2424 = vshrl.u32 %v2423, 7
    %v2425 = vsub.s32 7, %v2424
    %v2426 = vrot.slane %v2391, %v2425
    %v2427 = vlaneseq
    %v2428 = vshrl.u32 %v2427, 7
    %v2429 = vsub.s32 0, %v2428
    %v2430 = vrot.slane %v2392, %v2429
    %v2431 = vlaneseq
    %v2432 = vshrl.u32 %v2431, 7
    %v2433 = vsub.s32 1, %v2432
    %v2434 = vrot.slane %v2392, %v2433
    %v2435 = vlaneseq
    %v2436 = vshrl.u32 %v2435, 7
    %v2437 = vsub.s32 2, %v2436
    %v2438 = vrot.slane %v2392, %v2437
    %v2439 = vlaneseq
    %v2440 = vshrl.u32 %v2439, 7
    %v2441 = vsub.s32 3, %v2440
    %v2442 = vrot.slane %v2392, %v2441
    %v2443 = vlaneseq
    %v2444 = vshrl.u32 %v2443, 7
    %v2445 = vsub.s32 4, %v2444
    %v2446 = vrot.slane %v2392, %v2445
    %v2447 = vlaneseq
    %v2448 = vshrl.u32 %v2447, 7
    %v2449 = vsub.s32 5, %v2448
    %v2450 = vrot.slane %v2392, %v2449
    %v2451 = vlaneseq
    %v2452 = vshrl.u32 %v2451, 7
    %v2453 = vsub.s32 6, %v2452
    %v2454 = vrot.slane %v2392, %v2453
    %v2455 = vlaneseq
    %v2456 = vshrl.u32 %v2455, 7
    %v2457 = vsub.s32 7, %v2456
    %v2458 = vrot.slane %v2392, %v2457
    %v2539 = vunpack.c.l.b16 %v2327
    %v2540 = vunpack.c.h.b16 %v2327
    %v2541 = vunpack.c.l.b16 %v2328
    %v2542 = vunpack.c.h.b16 %v2328
    %v2543 = vunpack.c.l.b16 %v2329
    %v2544 = vunpack.c.h.b16 %v2329
    %v2545 = vunpack.c.l.b16 %v2330
    %v2546 = vunpack.c.h.b16 %v2330
    %v2547 = vunpack.c.l.b16 %v2331
    %v2548 = vunpack.c.h.b16 %v2331
    %v2549 = vunpack.c.l.b16 %v2332
    %v2550 = vunpack.c.h.b16 %v2332
    %v2551 = vunpack.c.l.b16 %v2333
    %v2552 = vunpack.c.h.b16 %v2333
    %v2553 = vunpack.c.l.b16 %v2334
    %v2554 = vunpack.c.h.b16 %v2334
    %v2555 = vunpack.c.l.b16 %v2335
    %v2556 = vunpack.c.h.b16 %v2335
    %v2557 = vunpack.c.l.b16 %v2336
    %v2558 = vunpack.c.h.b16 %v2336
    %v2559 = vunpack.c.l.b16 %v2337
    %v2560 = vunpack.c.h.b16 %v2337
    %v2561 = vunpack.c.l.b16 %v2338
    %v2562 = vunpack.c.h.b16 %v2338
    %v2563 = vunpack.c.l.b16 %v2339
    %v2564 = vunpack.c.h.b16 %v2339
    %v2565 = vunpack.c.l.b16 %v2340
    %v2566 = vunpack.c.h.b16 %v2340
    %v2567 = vunpack.c.l.b16 %v2341
    %v2568 = vunpack.c.h.b16 %v2341
    %v2569 = vunpack.c.l.b16 %v2342
    %v2570 = vunpack.c.h.b16 %v2342
    %v2571 = vunpack.c.l.b16 %v2343
    %v2572 = vunpack.c.h.b16 %v2343
    %v2573 = vunpack.c.l.b16 %v2344
    %v2574 = vunpack.c.h.b16 %v2344
    %v2575 = vunpack.c.l.b16 %v2345
    %v2576 = vunpack.c.h.b16 %v2345
    %v2577 = vunpack.c.l.b16 %v2346
    %v2578 = vunpack.c.h.b16 %v2346
    %v2579 = vunpack.c.l.b16 %v2347
    %v2580 = vunpack.c.h.b16 %v2347
    %v2581 = vunpack.c.l.b16 %v2348
    %v2582 = vunpack.c.h.b16 %v2348
    %v2583 = vunpack.c.l.b16 %v2349
    %v2584 = vunpack.c.h.b16 %v2349
    %v2585 = vunpack.c.l.b16 %v2350
    %v2586 = vunpack.c.h.b16 %v2350
    %v2587 = vunpack.c.l.b16 %v2351
    %v2588 = vunpack.c.h.b16 %v2351
    %v2589 = vunpack.c.l.b16 %v2352
    %v2590 = vunpack.c.h.b16 %v2352
    %v2591 = vunpack.c.l.b16 %v2353
    %v2592 = vunpack.c.h.b16 %v2353
    %v2593 = vunpack.c.l.b16 %v2354
    %v2594 = vunpack.c.h.b16 %v2354
    %v2595 = vunpack.c.l.b16 %v2355
    %v2596 = vunpack.c.h.b16 %v2355
    %v2597 = vunpack.c.l.b16 %v2356
    %v2598 = vunpack.c.h.b16 %v2356
    %v2599 = vunpack.c.l.b16 %v2357
    %v2600 = vunpack.c.h.b16 %v2357
    %v2601 = vunpack.c.l.b16 %v2358
    %v2602 = vunpack.c.h.b16 %v2358
    %v2603 = vunpack.c.l.b16 %v2359
    %v2604 = vunpack.c.h.b16 %v2359
    %v2605 = vunpack.c.l.b16 %v2360
    %v2606 = vunpack.c.h.b16 %v2360
    %v2607 = vunpack.c.l.b16 %v2361
    %v2608 = vunpack.c.h.b16 %v2361
    %v2609 = vunpack.c.l.b16 %v2362
    %v2610 = vunpack.c.h.b16 %v2362
    %v2611 = vunpack.c.l.b16 %v2363
    %v2612 = vunpack.c.h.b16 %v2363
    %v2613 = vunpack.c.l.b16 %v2364
    %v2614 = vunpack.c.h.b16 %v2364
    %v2615 = vunpack.c.l.b16 %v2365
    %v2616 = vunpack.c.h.b16 %v2365
    %v2617 = vunpack.c.l.b16 %v2366
    %v2618 = vunpack.c.h.b16 %v2366
    %v2619 = vunpack.c.l.b16 %v2367
    %v2620 = vunpack.c.h.b16 %v2367
    %v2621 = vunpack.c.l.b16 %v2368
    %v2622 = vunpack.c.h.b16 %v2368
    %v2623 = vunpack.c.l.b16 %v2369
    %v2624 = vunpack.c.h.b16 %v2369
    %v2625 = vunpack.c.l.b16 %v2370
    %v2626 = vunpack.c.h.b16 %v2370
    %v2627 = vunpack.c.l.b16 %v2371
    %v2628 = vunpack.c.h.b16 %v2371
    %v2629 = vunpack.c.l.b16 %v2372
    %v2630 = vunpack.c.h.b16 %v2372
    %v2631 = vunpack.c.l.b16 %v2373
    %v2632 = vunpack.c.h.b16 %v2373
    %v2633 = vunpack.c.l.b16 %v2374
    %v2634 = vunpack.c.h.b16 %v2374
    %v2635 = vunpack.c.l.b16 %v2375
    %v2636 = vunpack.c.h.b16 %v2375
    %v2637 = vunpack.c.l.b16 %v2376
    %v2638 = vunpack.c.h.b16 %v2376
    %v2639 = vunpack.c.l.b16 %v2377
    %v2640 = vunpack.c.h.b16 %v2377
    %v2641 = vunpack.c.l.b16 %v2378
    %v2642 = vunpack.c.h.b16 %v2378
    %v2643 = vunpack.c.l.b16 %v2379
    %v2644 = vunpack.c.h.b16 %v2379
    %v2645 = vunpack.c.l.b16 %v2380
    %v2646 = vunpack.c.h.b16 %v2380
    %v2647 = vunpack.c.l.b16 %v2381
    %v2648 = vunpack.c.h.b16 %v2381
    %v2649 = vunpack.c.l.b16 %v2382
    %v2650 = vunpack.c.h.b16 %v2382
    %v2651 = vunpack.c.l.b16 %v2383
    %v2652 = vunpack.c.h.b16 %v2383
    %v2653 = vunpack.c.l.b16 %v2384
    %v2654 = vunpack.c.h.b16 %v2384
    %v2655 = vunpack.c.l.b16 %v2385
    %v2656 = vunpack.c.h.b16 %v2385
    %v2657 = vunpack.c.l.b16 %v2386
    %v2658 = vunpack.c.h.b16 %v2386
    %v2659 = vunpack.c.l.b16 %v2387
    %v2660 = vunpack.c.h.b16 %v2387
    %v2661 = vunpack.c.l.b16 %v2388
    %v2662 = vunpack.c.h.b16 %v2388
    %v2663 = vunpack.c.l.b16 %v2389
    %v2664 = vunpack.c.h.b16 %v2389
    %v2665 = vunpack.c.l.b16 %v2390
    %v2666 = vunpack.c.h.b16 %v2390
    %v2667 = vpack.c.b16 %v2555, %v2539
    %v2668 = vpack.c.b16 %v2556, %v2540
    %v2669 = vpack.c.b16 %v2557, %v2541
    %v2670 = vpack.c.b16 %v2558, %v2542
    %v2671 = vpack.c.b16 %v2559, %v2543
    %v2672 = vpack.c.b16 %v2560, %v2544
    %v2673 = vpack.c.b16 %v2561, %v2545
    %v2674 = vpack.c.b16 %v2562, %v2546
    %v2675 = vpack.c.b16 %v2563, %v2547
    %v2676 = vpack.c.b16 %v2564, %v2548
    %v2677 = vpack.c.b16 %v2565, %v2549
    %v2678 = vpack.c.b16 %v2566, %v2550
    %v2679 = vpack.c.b16 %v2567, %v2551
    %v2680 = vpack.c.b16 %v2568, %v2552
    %v2681 = vpack.c.b16 %v2569, %v2553
    %v2682 = vpack.c.b16 %v2570, %v2554
    %v2683 = vpack.c.b16 %v2587, %v2571
    %v2684 = vpack.c.b16 %v2588, %v2572
    %v2685 = vpack.c.b16 %v2589, %v2573
    %v2686 = vpack.c.b16 %v2590, %v2574
    %v2687 = vpack.c.b16 %v2591, %v2575
    %v2688 = vpack.c.b16 %v2592, %v2576
    %v2689 = vpack.c.b16 %v2593, %v2577
    %v2690 = vpack.c.b16 %v2594, %v2578
    %v2691 = vpack.c.b16 %v2595, %v2579
    %v2692 = vpack.c.b16 %v2596, %v2580
    %v2693 = vpack.c.b16 %v2597, %v2581
    %v2694 = vpack.c.b16 %v2598, %v2582
    %v2695 = vpack.c.b16 %v2599, %v2583
    %v2696 = vpack.c.b16 %v2600, %v2584
    %v2697 = vpack.c.b16 %v2601, %v2585
    %v2698 = vpack.c.b16 %v2602, %v2586
    %v2699 = vpack.c.b16 %v2619, %v2603
    %v2700 = vpack.c.b16 %v2620, %v2604
    %v2701 = vpack.c.b16 %v2621, %v2605
    %v2702 = vpack.c.b16 %v2622, %v2606
    %v2703 = vpack.c.b16 %v2623, %v2607
    %v2704 = vpack.c.b16 %v2624, %v2608
    %v2705 = vpack.c.b16 %v2625, %v2609
    %v2706 = vpack.c.b16 %v2626, %v2610
    %v2707 = vpack.c.b16 %v2627, %v2611
    %v2708 = vpack.c.b16 %v2628, %v2612
    %v2709 = vpack.c.b16 %v2629, %v2613
    %v2710 = vpack.c.b16 %v2630, %v2614
    %v2711 = vpack.c.b16 %v2631, %v2615
    %v2712 = vpack.c.b16 %v2632, %v2616
    %v2713 = vpack.c.b16 %v2633, %v2617
    %v2714 = vpack.c.b16 %v2634, %v2618
    %v2715 = vpack.c.b16 %v2651, %v2635
    %v2716 = vpack.c.b16 %v2652, %v2636
    %v2717 = vpack.c.b16 %v2653, %v2637
    %v2718 = vpack.c.b16 %v2654, %v2638
    %v2719 = vpack.c.b16 %v2655, %v2639
    %v2720 = vpack.c.b16 %v2656, %v2640
    %v2721 = vpack.c.b16 %v2657, %v2641
    %v2722 = vpack.c.b16 %v2658, %v2642
    %v2723 = vpack.c.b16 %v2659, %v2643
    %v2724 = vpack.c.b16 %v2660, %v2644
    %v2725 = vpack.c.b16 %v2661, %v2645
    %v2726 = vpack.c.b16 %v2662, %v2646
    %v2727 = vpack.c.b16 %v2663, %v2647
    %v2728 = vpack.c.b16 %v2664, %v2648
    %v2729 = vpack.c.b16 %v2665, %v2649
    %v2730 = vpack.c.b16 %v2666, %v2650
    %v2796 = vsel %vm77, %v2326, 0
    %2798 = vmatprep.subr.bf16.mxu0 0
    %2799 = vmatpush1.bf16.msra.mxu0 0
    %2800 = vmatprep.subr.bf16.mxu0 0
    %2801 = vmatpush1.bf16.msra.mxu0 0
    %2802 = vmatprep.subr.bf16.mxu0 0
    %2803 = vmatpush1.bf16.msra.mxu0 0
    %2804 = vmatprep.subr.bf16.mxu0 0
    %2805 = vmatpush1.bf16.msra.mxu0 0
    %2806 = vmatprep.subr.bf16.mxu0 %v2716
    %2807 = vmatpush1.bf16.msra.mxu0 %v2715
    %2808 = vmatprep.subr.bf16.mxu0 %v2700
    %2809 = vmatpush1.bf16.msra.mxu0 %v2699
    %2810 = vmatprep.subr.bf16.mxu0 %v2684
    %2811 = vmatpush1.bf16.msra.mxu0 %v2683
    %2812 = vmatprep.subr.bf16.mxu0 %v2668
    %2813 = vmatpush1.bf16.msra.mxu0 %v2667
    %2814 = vmatprep.subr.bf16.mxu0 0
    %2815 = vmatpush2.bf16.msra.mxu0 0
    %2816 = vmatprep.subr.bf16.mxu0 0
    %2817 = vmatpush2.bf16.msra.mxu0 0
    %2818 = vmatprep.subr.bf16.mxu0 0
    %2819 = vmatpush2.bf16.msra.mxu0 0
    %2820 = vmatprep.subr.bf16.mxu0 0
    %2821 = vmatpush2.bf16.msra.mxu0 0
    %2822 = vmatprep.subr.bf16.mxu0 0
    %2823 = vmatpush2.bf16.msra.mxu0 0
    %2824 = vmatprep.subr.bf16.mxu0 0
    %2825 = vmatpush2.bf16.msra.mxu0 0
    %2826 = vmatprep.subr.bf16.mxu0 0
    %2827 = vmatpush2.bf16.msra.mxu0 0
    %2828 = vmatprep.subr.bf16.mxu0 0
    %2829 = vmatpush2.bf16.msra.mxu0 0
    %2830 = vmatprep.mubr.bf16.mxu0 0
    %2831 = vmatmul.mubr.bf16.gmra.mxu0 %v2796
    %v2832 = vpop.f32.mrf.mxu0
    %v2833 = vadd.f32 %v2398, %v2832
    %v2834 = vpop.f32.mrf.mxu0
    %v2835 = vadd.f32 %v2402, %v2834
    %v2836 = vpop.f32.mrf.mxu0
    %v2837 = vadd.f32 %v2398, %v2836
    %v2838 = vpop.f32.mrf.mxu0
    %v2839 = vadd.f32 %v2402, %v2838
    %2840 = vdwg.mxu0
    %2841 = vmatprep.subr.bf16.mxu0 0
    %2842 = vmatpush1.bf16.msra.mxu0 0
    %2843 = vmatprep.subr.bf16.mxu0 0
    %2844 = vmatpush1.bf16.msra.mxu0 0
    %2845 = vmatprep.subr.bf16.mxu0 0
    %2846 = vmatpush1.bf16.msra.mxu0 0
    %2847 = vmatprep.subr.bf16.mxu0 0
    %2848 = vmatpush1.bf16.msra.mxu0 0
    %2849 = vmatprep.subr.bf16.mxu0 %v2718
    %2850 = vmatpush1.bf16.msra.mxu0 %v2717
    %2851 = vmatprep.subr.bf16.mxu0 %v2702
    %2852 = vmatpush1.bf16.msra.mxu0 %v2701
    %2853 = vmatprep.subr.bf16.mxu0 %v2686
    %2854 = vmatpush1.bf16.msra.mxu0 %v2685
    %2855 = vmatprep.subr.bf16.mxu0 %v2670
    %2856 = vmatpush1.bf16.msra.mxu0 %v2669
    %2857 = vmatprep.subr.bf16.mxu0 0
    %2858 = vmatpush2.bf16.msra.mxu0 0
    %2859 = vmatprep.subr.bf16.mxu0 0
    %2860 = vmatpush2.bf16.msra.mxu0 0
    %2861 = vmatprep.subr.bf16.mxu0 0
    %2862 = vmatpush2.bf16.msra.mxu0 0
    %2863 = vmatprep.subr.bf16.mxu0 0
    %2864 = vmatpush2.bf16.msra.mxu0 0
    %2865 = vmatprep.subr.bf16.mxu0 0
    %2866 = vmatpush2.bf16.msra.mxu0 0
    %2867 = vmatprep.subr.bf16.mxu0 0
    %2868 = vmatpush2.bf16.msra.mxu0 0
    %2869 = vmatprep.subr.bf16.mxu0 0
    %2870 = vmatpush2.bf16.msra.mxu0 0
    %2871 = vmatprep.subr.bf16.mxu0 0
    %2872 = vmatpush2.bf16.msra.mxu0 0
    %2873 = vmatprep.mubr.bf16.mxu0 0
    %2874 = vmatmul.mubr.bf16.gmra.mxu0 %v2796
    %v2875 = vpop.f32.mrf.mxu0
    %v2876 = vadd.f32 %v2406, %v2875
    %v2877 = vpop.f32.mrf.mxu0
    %v2878 = vadd.f32 %v2410, %v2877
    %v2879 = vpop.f32.mrf.mxu0
    %v2880 = vadd.f32 %v2406, %v2879
    %v2881 = vpop.f32.mrf.mxu0
    %v2882 = vadd.f32 %v2410, %v2881
    %2883 = vdwg.mxu0
    %2884 = vmatprep.subr.bf16.mxu0 0
    %2885 = vmatpush1.bf16.msra.mxu0 0
    %2886 = vmatprep.subr.bf16.mxu0 0
    %2887 = vmatpush1.bf16.msra.mxu0 0
    %2888 = vmatprep.subr.bf16.mxu0 0
    %2889 = vmatpush1.bf16.msra.mxu0 0
    %2890 = vmatprep.subr.bf16.mxu0 0
    %2891 = vmatpush1.bf16.msra.mxu0 0
    %2892 = vmatprep.subr.bf16.mxu0 %v2720
    %2893 = vmatpush1.bf16.msra.mxu0 %v2719
    %2894 = vmatprep.subr.bf16.mxu0 %v2704
    %2895 = vmatpush1.bf16.msra.mxu0 %v2703
    %2896 = vmatprep.subr.bf16.mxu0 %v2688
    %2897 = vmatpush1.bf16.msra.mxu0 %v2687
    %2898 = vmatprep.subr.bf16.mxu0 %v2672
    %2899 = vmatpush1.bf16.msra.mxu0 %v2671
    %2900 = vmatprep.subr.bf16.mxu0 0
    %2901 = vmatpush2.bf16.msra.mxu0 0
    %2902 = vmatprep.subr.bf16.mxu0 0
    %2903 = vmatpush2.bf16.msra.mxu0 0
    %2904 = vmatprep.subr.bf16.mxu0 0
    %2905 = vmatpush2.bf16.msra.mxu0 0
    %2906 = vmatprep.subr.bf16.mxu0 0
    %2907 = vmatpush2.bf16.msra.mxu0 0
    %2908 = vmatprep.subr.bf16.mxu0 0
    %2909 = vmatpush2.bf16.msra.mxu0 0
    %2910 = vmatprep.subr.bf16.mxu0 0
    %2911 = vmatpush2.bf16.msra.mxu0 0
    %2912 = vmatprep.subr.bf16.mxu0 0
    %2913 = vmatpush2.bf16.msra.mxu0 0
    %2914 = vmatprep.subr.bf16.mxu0 0
    %2915 = vmatpush2.bf16.msra.mxu0 0
    %2916 = vmatprep.mubr.bf16.mxu0 0
    %2917 = vmatmul.mubr.bf16.gmra.mxu0 %v2796
    %v2918 = vpop.f32.mrf.mxu0
    %v2919 = vadd.f32 %v2414, %v2918
    %v2920 = vpop.f32.mrf.mxu0
    %v2921 = vadd.f32 %v2418, %v2920
    %v2922 = vpop.f32.mrf.mxu0
    %v2923 = vadd.f32 %v2414, %v2922
    %v2924 = vpop.f32.mrf.mxu0
    %v2925 = vadd.f32 %v2418, %v2924
    %2926 = vdwg.mxu0
    %2927 = vmatprep.subr.bf16.mxu0 0
    %2928 = vmatpush1.bf16.msra.mxu0 0
    %2929 = vmatprep.subr.bf16.mxu0 0
    %2930 = vmatpush1.bf16.msra.mxu0 0
    %2931 = vmatprep.subr.bf16.mxu0 0
    %2932 = vmatpush1.bf16.msra.mxu0 0
    %2933 = vmatprep.subr.bf16.mxu0 0
    %2934 = vmatpush1.bf16.msra.mxu0 0
    %2935 = vmatprep.subr.bf16.mxu0 %v2722
    %2936 = vmatpush1.bf16.msra.mxu0 %v2721
    %2937 = vmatprep.subr.bf16.mxu0 %v2706
    %2938 = vmatpush1.bf16.msra.mxu0 %v2705
    %2939 = vmatprep.subr.bf16.mxu0 %v2690
    %2940 = vmatpush1.bf16.msra.mxu0 %v2689
    %2941 = vmatprep.subr.bf16.mxu0 %v2674
    %2942 = vmatpush1.bf16.msra.mxu0 %v2673
    %2943 = vmatprep.subr.bf16.mxu0 0
    %2944 = vmatpush2.bf16.msra.mxu0 0
    %2945 = vmatprep.subr.bf16.mxu0 0
    %2946 = vmatpush2.bf16.msra.mxu0 0
    %2947 = vmatprep.subr.bf16.mxu0 0
    %2948 = vmatpush2.bf16.msra.mxu0 0
    %2949 = vmatprep.subr.bf16.mxu0 0
    %2950 = vmatpush2.bf16.msra.mxu0 0
    %2951 = vmatprep.subr.bf16.mxu0 0
    %2952 = vmatpush2.bf16.msra.mxu0 0
    %2953 = vmatprep.subr.bf16.mxu0 0
    %2954 = vmatpush2.bf16.msra.mxu0 0
    %2955 = vmatprep.subr.bf16.mxu0 0
    %2956 = vmatpush2.bf16.msra.mxu0 0
    %2957 = vmatprep.subr.bf16.mxu0 0
    %2958 = vmatpush2.bf16.msra.mxu0 0
    %2959 = vmatprep.mubr.bf16.mxu0 0
    %2960 = vmatmul.mubr.bf16.gmra.mxu0 %v2796
    %v2961 = vpop.f32.mrf.mxu0
    %v2962 = vadd.f32 %v2422, %v2961
    %v2963 = vpop.f32.mrf.mxu0
    %v2964 = vadd.f32 %v2426, %v2963
    %v2965 = vpop.f32.mrf.mxu0
    %v2966 = vadd.f32 %v2422, %v2965
    %v2967 = vpop.f32.mrf.mxu0
    %v2968 = vadd.f32 %v2426, %v2967
    %2969 = vdwg.mxu0
    %2970 = vmatprep.subr.bf16.mxu0 0
    %2971 = vmatpush1.bf16.msra.mxu0 0
    %2972 = vmatprep.subr.bf16.mxu0 0
    %2973 = vmatpush1.bf16.msra.mxu0 0
    %2974 = vmatprep.subr.bf16.mxu0 0
    %2975 = vmatpush1.bf16.msra.mxu0 0
    %2976 = vmatprep.subr.bf16.mxu0 0
    %2977 = vmatpush1.bf16.msra.mxu0 0
    %2978 = vmatprep.subr.bf16.mxu0 %v2724
    %2979 = vmatpush1.bf16.msra.mxu0 %v2723
    %2980 = vmatprep.subr.bf16.mxu0 %v2708
    %2981 = vmatpush1.bf16.msra.mxu0 %v2707
    %2982 = vmatprep.subr.bf16.mxu0 %v2692
    %2983 = vmatpush1.bf16.msra.mxu0 %v2691
    %2984 = vmatprep.subr.bf16.mxu0 %v2676
    %2985 = vmatpush1.bf16.msra.mxu0 %v2675
    %2986 = vmatprep.subr.bf16.mxu0 0
    %2987 = vmatpush2.bf16.msra.mxu0 0
    %2988 = vmatprep.subr.bf16.mxu0 0
    %2989 = vmatpush2.bf16.msra.mxu0 0
    %2990 = vmatprep.subr.bf16.mxu0 0
    %2991 = vmatpush2.bf16.msra.mxu0 0
    %2992 = vmatprep.subr.bf16.mxu0 0
    %2993 = vmatpush2.bf16.msra.mxu0 0
    %2994 = vmatprep.subr.bf16.mxu0 0
    %2995 = vmatpush2.bf16.msra.mxu0 0
    %2996 = vmatprep.subr.bf16.mxu0 0
    %2997 = vmatpush2.bf16.msra.mxu0 0
    %2998 = vmatprep.subr.bf16.mxu0 0
    %2999 = vmatpush2.bf16.msra.mxu0 0
    %3000 = vmatprep.subr.bf16.mxu0 0
    %3001 = vmatpush2.bf16.msra.mxu0 0
    %3002 = vmatprep.mubr.bf16.mxu0 0
    %3003 = vmatmul.mubr.bf16.gmra.mxu0 %v2796
    %v3004 = vpop.f32.mrf.mxu0
    %v3005 = vadd.f32 %v2430, %v3004
    %v3006 = vpop.f32.mrf.mxu0
    %v3007 = vadd.f32 %v2434, %v3006
    %v3008 = vpop.f32.mrf.mxu0
    %v3009 = vadd.f32 %v2430, %v3008
    %v3010 = vpop.f32.mrf.mxu0
    %v3011 = vadd.f32 %v2434, %v3010
    %3012 = vdwg.mxu0
    %3013 = vmatprep.subr.bf16.mxu0 0
    %3014 = vmatpush1.bf16.msra.mxu0 0
    %3015 = vmatprep.subr.bf16.mxu0 0
    %3016 = vmatpush1.bf16.msra.mxu0 0
    %3017 = vmatprep.subr.bf16.mxu0 0
    %3018 = vmatpush1.bf16.msra.mxu0 0
    %3019 = vmatprep.subr.bf16.mxu0 0
    %3020 = vmatpush1.bf16.msra.mxu0 0
    %3021 = vmatprep.subr.bf16.mxu0 %v2726
    %3022 = vmatpush1.bf16.msra.mxu0 %v2725
    %3023 = vmatprep.subr.bf16.mxu0 %v2710
    %3024 = vmatpush1.bf16.msra.mxu0 %v2709
    %3025 = vmatprep.subr.bf16.mxu0 %v2694
    %3026 = vmatpush1.bf16.msra.mxu0 %v2693
    %3027 = vmatprep.subr.bf16.mxu0 %v2678
    %3028 = vmatpush1.bf16.msra.mxu0 %v2677
    %3029 = vmatprep.subr.bf16.mxu0 0
    %3030 = vmatpush2.bf16.msra.mxu0 0
    %3031 = vmatprep.subr.bf16.mxu0 0
    %3032 = vmatpush2.bf16.msra.mxu0 0
    %3033 = vmatprep.subr.bf16.mxu0 0
    %3034 = vmatpush2.bf16.msra.mxu0 0
    %3035 = vmatprep.subr.bf16.mxu0 0
    %3036 = vmatpush2.bf16.msra.mxu0 0
    %3037 = vmatprep.subr.bf16.mxu0 0
    %3038 = vmatpush2.bf16.msra.mxu0 0
    %3039 = vmatprep.subr.bf16.mxu0 0
    %3040 = vmatpush2.bf16.msra.mxu0 0
    %3041 = vmatprep.subr.bf16.mxu0 0
    %3042 = vmatpush2.bf16.msra.mxu0 0
    %3043 = vmatprep.subr.bf16.mxu0 0
    %3044 = vmatpush2.bf16.msra.mxu0 0
    %3045 = vmatprep.mubr.bf16.mxu0 0
    %3046 = vmatmul.mubr.bf16.gmra.mxu0 %v2796
    %v3047 = vpop.f32.mrf.mxu0
    %v3048 = vadd.f32 %v2438, %v3047
    %v3049 = vpop.f32.mrf.mxu0
    %v3050 = vadd.f32 %v2442, %v3049
    %v3051 = vpop.f32.mrf.mxu0
    %v3052 = vadd.f32 %v2438, %v3051
    %v3053 = vpop.f32.mrf.mxu0
    %v3054 = vadd.f32 %v2442, %v3053
    %3055 = vdwg.mxu0
    %3056 = vmatprep.subr.bf16.mxu0 0
    %3057 = vmatpush1.bf16.msra.mxu0 0
    %3058 = vmatprep.subr.bf16.mxu0 0
    %3059 = vmatpush1.bf16.msra.mxu0 0
    %3060 = vmatprep.subr.bf16.mxu0 0
    %3061 = vmatpush1.bf16.msra.mxu0 0
    %3062 = vmatprep.subr.bf16.mxu0 0
    %3063 = vmatpush1.bf16.msra.mxu0 0
    %3064 = vmatprep.subr.bf16.mxu0 %v2728
    %3065 = vmatpush1.bf16.msra.mxu0 %v2727
    %3066 = vmatprep.subr.bf16.mxu0 %v2712
    %3067 = vmatpush1.bf16.msra.mxu0 %v2711
    %3068 = vmatprep.subr.bf16.mxu0 %v2696
    %3069 = vmatpush1.bf16.msra.mxu0 %v2695
    %3070 = vmatprep.subr.bf16.mxu0 %v2680
    %3071 = vmatpush1.bf16.msra.mxu0 %v2679
    %3072 = vmatprep.subr.bf16.mxu0 0
    %3073 = vmatpush2.bf16.msra.mxu0 0
    %3074 = vmatprep.subr.bf16.mxu0 0
    %3075 = vmatpush2.bf16.msra.mxu0 0
    %3076 = vmatprep.subr.bf16.mxu0 0
    %3077 = vmatpush2.bf16.msra.mxu0 0
    %3078 = vmatprep.subr.bf16.mxu0 0
    %3079 = vmatpush2.bf16.msra.mxu0 0
    %3080 = vmatprep.subr.bf16.mxu0 0
    %3081 = vmatpush2.bf16.msra.mxu0 0
    %3082 = vmatprep.subr.bf16.mxu0 0
    %3083 = vmatpush2.bf16.msra.mxu0 0
    %3084 = vmatprep.subr.bf16.mxu0 0
    %3085 = vmatpush2.bf16.msra.mxu0 0
    %3086 = vmatprep.subr.bf16.mxu0 0
    %3087 = vmatpush2.bf16.msra.mxu0 0
    %3088 = vmatprep.mubr.bf16.mxu0 0
    %3089 = vmatmul.mubr.bf16.gmra.mxu0 %v2796
    %v3090 = vpop.f32.mrf.mxu0
    %v3091 = vadd.f32 %v2446, %v3090
    %v3092 = vpop.f32.mrf.mxu0
    %v3093 = vadd.f32 %v2450, %v3092
    %v3094 = vpop.f32.mrf.mxu0
    %v3095 = vadd.f32 %v2446, %v3094
    %v3096 = vpop.f32.mrf.mxu0
    %v3097 = vadd.f32 %v2450, %v3096
    %3098 = vdwg.mxu0
    %3099 = vmatprep.subr.bf16.mxu0 0
    %3100 = vmatpush1.bf16.msra.mxu0 0
    %3101 = vmatprep.subr.bf16.mxu0 0
    %3102 = vmatpush1.bf16.msra.mxu0 0
    %3103 = vmatprep.subr.bf16.mxu0 0
    %3104 = vmatpush1.bf16.msra.mxu0 0
    %3105 = vmatprep.subr.bf16.mxu0 0
    %3106 = vmatpush1.bf16.msra.mxu0 0
    %3107 = vmatprep.subr.bf16.mxu0 %v2730
    %3108 = vmatpush1.bf16.msra.mxu0 %v2729
    %3109 = vmatprep.subr.bf16.mxu0 %v2714
    %3110 = vmatpush1.bf16.msra.mxu0 %v2713
    %3111 = vmatprep.subr.bf16.mxu0 %v2698
    %3112 = vmatpush1.bf16.msra.mxu0 %v2697
    %3113 = vmatprep.subr.bf16.mxu0 %v2682
    %3114 = vmatpush1.bf16.msra.mxu0 %v2681
    %3115 = vmatprep.subr.bf16.mxu0 0
    %3116 = vmatpush2.bf16.msra.mxu0 0
    %3117 = vmatprep.subr.bf16.mxu0 0
    %3118 = vmatpush2.bf16.msra.mxu0 0
    %3119 = vmatprep.subr.bf16.mxu0 0
    %3120 = vmatpush2.bf16.msra.mxu0 0
    %3121 = vmatprep.subr.bf16.mxu0 0
    %3122 = vmatpush2.bf16.msra.mxu0 0
    %3123 = vmatprep.subr.bf16.mxu0 0
    %3124 = vmatpush2.bf16.msra.mxu0 0
    %3125 = vmatprep.subr.bf16.mxu0 0
    %3126 = vmatpush2.bf16.msra.mxu0 0
    %3127 = vmatprep.subr.bf16.mxu0 0
    %3128 = vmatpush2.bf16.msra.mxu0 0
    %3129 = vmatprep.subr.bf16.mxu0 0
    %3130 = vmatpush2.bf16.msra.mxu0 0
    %3131 = vmatprep.mubr.bf16.mxu0 0
    %3132 = vmatmul.mubr.bf16.gmra.mxu0 %v2796
    %v3133 = vpop.f32.mrf.mxu0
    %v3134 = vadd.f32 %v2454, %v3133
    %v3135 = vpop.f32.mrf.mxu0
    %v3136 = vadd.f32 %v2458, %v3135
    %v3137 = vpop.f32.mrf.mxu0
    %v3138 = vadd.f32 %v2454, %v3137
    %v3139 = vpop.f32.mrf.mxu0
    %v3140 = vadd.f32 %v2458, %v3139
    %3141 = vdwg.mxu0
    %v3142 = vmax.f32 %v2833, 0.0
    %v3143 = vmax.f32 %v2835, 0.0
    %v3144 = vmax.f32 %v2876, 0.0
    %v3145 = vmax.f32 %v2878, 0.0
    %v3146 = vmax.f32 %v2919, 0.0
    %v3147 = vmax.f32 %v2921, 0.0
    %v3148 = vmax.f32 %v2962, 0.0
    %v3149 = vmax.f32 %v2964, 0.0
    %v3150 = vmax.f32 %v3005, 0.0
    %v3151 = vmax.f32 %v3007, 0.0
    %v3152 = vmax.f32 %v3048, 0.0
    %v3153 = vmax.f32 %v3050, 0.0
    %v3154 = vmax.f32 %v3091, 0.0
    %v3155 = vmax.f32 %v3093, 0.0
    %v3156 = vmax.f32 %v3134, 0.0
    %v3157 = vmax.f32 %v3136, 0.0
    %v3158 = vmax.f32 %v2837, 0.0
    %v3159 = vmax.f32 %v2839, 0.0
    %v3160 = vmax.f32 %v2880, 0.0
    %v3161 = vmax.f32 %v2882, 0.0
    %v3162 = vmax.f32 %v2923, 0.0
    %v3163 = vmax.f32 %v2925, 0.0
    %v3164 = vmax.f32 %v2966, 0.0
    %v3165 = vmax.f32 %v2968, 0.0
    %v3166 = vmax.f32 %v3009, 0.0
    %v3167 = vmax.f32 %v3011, 0.0
    %v3168 = vmax.f32 %v3052, 0.0
    %v3169 = vmax.f32 %v3054, 0.0
    %v3170 = vmax.f32 %v3095, 0.0
    %v3171 = vmax.f32 %v3097, 0.0
    %v3172 = vmax.f32 %v3138, 0.0
    %v3173 = vmax.f32 %v3140, 0.0
    %v3174 = vpack.c.bf16 %v3158, %v3142
    %v3175 = vpack.c.bf16 %v3159, %v3143
    %v3176 = vpack.c.bf16 %v3160, %v3144
    %v3177 = vpack.c.bf16 %v3161, %v3145
    %v3178 = vpack.c.bf16 %v3162, %v3146
    %v3179 = vpack.c.bf16 %v3163, %v3147
    %v3180 = vpack.c.bf16 %v3164, %v3148
    %v3181 = vpack.c.bf16 %v3165, %v3149
    %v3182 = vpack.c.bf16 %v3166, %v3150
    %v3183 = vpack.c.bf16 %v3167, %v3151
    %v3184 = vpack.c.bf16 %v3168, %v3152
    %v3185 = vpack.c.bf16 %v3169, %v3153
    %v3186 = vpack.c.bf16 %v3170, %v3154
    %v3187 = vpack.c.bf16 %v3171, %v3155
    %v3188 = vpack.c.bf16 %v3172, %v3156
    %v3189 = vpack.c.bf16 %v3173, %v3157
    %v3190 = vld [vmem:[%s9] sm:$0xf]
    %v3191 = vld [vmem:[%s9 + $0x4] sm:$0xf]
    %v3192 = vld [vmem:[%s9 + $0x8] sm:$0xf]
    %v3193 = vld [vmem:[%s9 + $0xc] sm:$0xf]
    %v3194 = vld [vmem:[%s9 + $0x10] sm:$0xf]
    %v3195 = vld [vmem:[%s9 + $0x14] sm:$0xf]
    %v3196 = vld [vmem:[%s9 + $0x18] sm:$0xf]
    %v3197 = vld [vmem:[%s9 + $0x1c] sm:$0xf]
    %v3198 = vld [vmem:[%s9 + $0x20] sm:$0xf]
    %v3199 = vld [vmem:[%s9 + $0x24] sm:$0xf]
    %v3200 = vld [vmem:[%s9 + $0x28] sm:$0xf]
    %v3201 = vld [vmem:[%s9 + $0x2c] sm:$0xf]
    %v3202 = vld [vmem:[%s9 + $0x30] sm:$0xf]
    %v3203 = vld [vmem:[%s9 + $0x34] sm:$0xf]
    %v3204 = vld [vmem:[%s9 + $0x38] sm:$0xf]
    %v3205 = vld [vmem:[%s9 + $0x3c] sm:$0xf]
    %v3206 = vld [vmem:[%s9 + $0x40] sm:$0xf]
    %v3207 = vld [vmem:[%s9 + $0x44] sm:$0xf]
    %v3208 = vld [vmem:[%s9 + $0x48] sm:$0xf]
    %v3209 = vld [vmem:[%s9 + $0x4c] sm:$0xf]
    %v3210 = vld [vmem:[%s9 + $0x50] sm:$0xf]
    %v3211 = vld [vmem:[%s9 + $0x54] sm:$0xf]
    %v3212 = vld [vmem:[%s9 + $0x58] sm:$0xf]
    %v3213 = vld [vmem:[%s9 + $0x5c] sm:$0xf]
    %v3214 = vld [vmem:[%s9 + $0x60] sm:$0xf]
    %v3215 = vld [vmem:[%s9 + $0x64] sm:$0xf]
    %v3216 = vld [vmem:[%s9 + $0x68] sm:$0xf]
    %v3217 = vld [vmem:[%s9 + $0x6c] sm:$0xf]
    %v3218 = vld [vmem:[%s9 + $0x70] sm:$0xf]
    %v3219 = vld [vmem:[%s9 + $0x74] sm:$0xf]
    %v3220 = vld [vmem:[%s9 + $0x78] sm:$0xf]
    %v3221 = vld [vmem:[%s9 + $0x7c] sm:$0xf]
    %v3222 = vld [vmem:[%s9 + $0x80] sm:$0xf]
    %v3223 = vld [vmem:[%s9 + $0x84] sm:$0xf]
    %v3224 = vld [vmem:[%s9 + $0x88] sm:$0xf]
    %v3225 = vld [vmem:[%s9 + $0x8c] sm:$0xf]
    %v3226 = vld [vmem:[%s9 + $0x90] sm:$0xf]
    %v3227 = vld [vmem:[%s9 + $0x94] sm:$0xf]
    %v3228 = vld [vmem:[%s9 + $0x98] sm:$0xf]
    %v3229 = vld [vmem:[%s9 + $0x9c] sm:$0xf]
    %v3230 = vld [vmem:[%s9 + $0xa0] sm:$0xf]
    %v3231 = vld [vmem:[%s9 + $0xa4] sm:$0xf]
    %v3232 = vld [vmem:[%s9 + $0xa8] sm:$0xf]
    %v3233 = vld [vmem:[%s9 + $0xac] sm:$0xf]
    %v3234 = vld [vmem:[%s9 + $0xb0] sm:$0xf]
    %v3235 = vld [vmem:[%s9 + $0xb4] sm:$0xf]
    %v3236 = vld [vmem:[%s9 + $0xb8] sm:$0xf]
    %v3237 = vld [vmem:[%s9 + $0xbc] sm:$0xf]
    %v3238 = vld [vmem:[%s9 + $0xc0] sm:$0xf]
    %v3239 = vld [vmem:[%s9 + $0xc4] sm:$0xf]
    %v3240 = vld [vmem:[%s9 + $0xc8] sm:$0xf]
    %v3241 = vld [vmem:[%s9 + $0xcc] sm:$0xf]
    %v3242 = vld [vmem:[%s9 + $0xd0] sm:$0xf]
    %v3243 = vld [vmem:[%s9 + $0xd4] sm:$0xf]
    %v3244 = vld [vmem:[%s9 + $0xd8] sm:$0xf]
    %v3245 = vld [vmem:[%s9 + $0xdc] sm:$0xf]
    %v3246 = vld [vmem:[%s9 + $0xe0] sm:$0xf]
    %v3247 = vld [vmem:[%s9 + $0xe4] sm:$0xf]
    %v3248 = vld [vmem:[%s9 + $0xe8] sm:$0xf]
    %v3249 = vld [vmem:[%s9 + $0xec] sm:$0xf]
    %v3250 = vld [vmem:[%s9 + $0xf0] sm:$0xf]
    %v3251 = vld [vmem:[%s9 + $0xf4] sm:$0xf]
    %v3252 = vld [vmem:[%s9 + $0xf8] sm:$0xf]
    %v3253 = vld [vmem:[%s9 + $0xfc] sm:$0xf]
    %v3254 = vld [vmem:[%s9 + $0x100] sm:$0xf]
    %v3255 = vld [vmem:[%s9 + $0x104] sm:$0xf]
    %v3256 = vld [vmem:[%s9 + $0x108] sm:$0xf]
    %v3257 = vld [vmem:[%s9 + $0x10c] sm:$0xf]
    %v3258 = vld [vmem:[%s9 + $0x110] sm:$0xf]
    %v3259 = vld [vmem:[%s9 + $0x114] sm:$0xf]
    %v3260 = vld [vmem:[%s9 + $0x118] sm:$0xf]
    %v3261 = vld [vmem:[%s9 + $0x11c] sm:$0xf]
    %v3262 = vld [vmem:[%s9 + $0x120] sm:$0xf]
    %v3263 = vld [vmem:[%s9 + $0x124] sm:$0xf]
    %v3264 = vld [vmem:[%s9 + $0x128] sm:$0xf]
    %v3265 = vld [vmem:[%s9 + $0x12c] sm:$0xf]
    %v3266 = vld [vmem:[%s9 + $0x130] sm:$0xf]
    %v3267 = vld [vmem:[%s9 + $0x134] sm:$0xf]
    %v3268 = vld [vmem:[%s9 + $0x138] sm:$0xf]
    %v3269 = vld [vmem:[%s9 + $0x13c] sm:$0xf]
    %v3270 = vld [vmem:[%s9 + $0x140] sm:$0xf]
    %v3271 = vld [vmem:[%s9 + $0x144] sm:$0xf]
    %v3272 = vld [vmem:[%s9 + $0x148] sm:$0xf]
    %v3273 = vld [vmem:[%s9 + $0x14c] sm:$0xf]
    %v3274 = vld [vmem:[%s9 + $0x150] sm:$0xf]
    %v3275 = vld [vmem:[%s9 + $0x154] sm:$0xf]
    %v3276 = vld [vmem:[%s9 + $0x158] sm:$0xf]
    %v3277 = vld [vmem:[%s9 + $0x15c] sm:$0xf]
    %v3278 = vld [vmem:[%s9 + $0x160] sm:$0xf]
    %v3279 = vld [vmem:[%s9 + $0x164] sm:$0xf]
    %v3280 = vld [vmem:[%s9 + $0x168] sm:$0xf]
    %v3281 = vld [vmem:[%s9 + $0x16c] sm:$0xf]
    %v3282 = vld [vmem:[%s9 + $0x170] sm:$0xf]
    %v3283 = vld [vmem:[%s9 + $0x174] sm:$0xf]
    %v3284 = vld [vmem:[%s9 + $0x178] sm:$0xf]
    %v3285 = vld [vmem:[%s9 + $0x17c] sm:$0xf]
    %v3286 = vld [vmem:[%s9 + $0x180] sm:$0xf]
    %v3287 = vld [vmem:[%s9 + $0x184] sm:$0xf]
    %v3288 = vld [vmem:[%s9 + $0x188] sm:$0xf]
    %v3289 = vld [vmem:[%s9 + $0x18c] sm:$0xf]
    %v3290 = vld [vmem:[%s9 + $0x190] sm:$0xf]
    %v3291 = vld [vmem:[%s9 + $0x194] sm:$0xf]
    %v3292 = vld [vmem:[%s9 + $0x198] sm:$0xf]
    %v3293 = vld [vmem:[%s9 + $0x19c] sm:$0xf]
    %v3294 = vld [vmem:[%s9 + $0x1a0] sm:$0xf]
    %v3295 = vld [vmem:[%s9 + $0x1a4] sm:$0xf]
    %v3296 = vld [vmem:[%s9 + $0x1a8] sm:$0xf]
    %v3297 = vld [vmem:[%s9 + $0x1ac] sm:$0xf]
    %v3298 = vld [vmem:[%s9 + $0x1b0] sm:$0xf]
    %v3299 = vld [vmem:[%s9 + $0x1b4] sm:$0xf]
    %v3300 = vld [vmem:[%s9 + $0x1b8] sm:$0xf]
    %v3301 = vld [vmem:[%s9 + $0x1bc] sm:$0xf]
    %v3302 = vld [vmem:[%s9 + $0x1c0] sm:$0xf]
    %v3303 = vld [vmem:[%s9 + $0x1c4] sm:$0xf]
    %v3304 = vld [vmem:[%s9 + $0x1c8] sm:$0xf]
    %v3305 = vld [vmem:[%s9 + $0x1cc] sm:$0xf]
    %v3306 = vld [vmem:[%s9 + $0x1d0] sm:$0xf]
    %v3307 = vld [vmem:[%s9 + $0x1d4] sm:$0xf]
    %v3308 = vld [vmem:[%s9 + $0x1d8] sm:$0xf]
    %v3309 = vld [vmem:[%s9 + $0x1dc] sm:$0xf]
    %v3310 = vld [vmem:[%s9 + $0x1e0] sm:$0xf]
    %v3311 = vld [vmem:[%s9 + $0x1e4] sm:$0xf]
    %v3312 = vld [vmem:[%s9 + $0x1e8] sm:$0xf]
    %v3313 = vld [vmem:[%s9 + $0x1ec] sm:$0xf]
    %v3314 = vld [vmem:[%s9 + $0x1f0] sm:$0xf]
    %v3315 = vld [vmem:[%s9 + $0x1f4] sm:$0xf]
    %v3316 = vld [vmem:[%s9 + $0x1f8] sm:$0xf]
    %v3317 = vld [vmem:[%s9 + $0x1fc] sm:$0xf]
    %v3318 = vld [vmem:[%s9 + $0x200] sm:$0xf]
    %v3319 = vld [vmem:[%s9 + $0x204] sm:$0xf]
    %v3320 = vld [vmem:[%s9 + $0x208] sm:$0xf]
    %v3321 = vld [vmem:[%s9 + $0x20c] sm:$0xf]
    %v3322 = vld [vmem:[%s9 + $0x210] sm:$0xf]
    %v3323 = vld [vmem:[%s9 + $0x214] sm:$0xf]
    %v3324 = vld [vmem:[%s9 + $0x218] sm:$0xf]
    %v3325 = vld [vmem:[%s9 + $0x21c] sm:$0xf]
    %v3326 = vld [vmem:[%s9 + $0x220] sm:$0xf]
    %v3327 = vld [vmem:[%s9 + $0x224] sm:$0xf]
    %v3328 = vld [vmem:[%s9 + $0x228] sm:$0xf]
    %v3329 = vld [vmem:[%s9 + $0x22c] sm:$0xf]
    %v3330 = vld [vmem:[%s9 + $0x230] sm:$0xf]
    %v3331 = vld [vmem:[%s9 + $0x234] sm:$0xf]
    %v3332 = vld [vmem:[%s9 + $0x238] sm:$0xf]
    %v3333 = vld [vmem:[%s9 + $0x23c] sm:$0xf]
    %v3334 = vld [vmem:[%s9 + $0x240] sm:$0xf]
    %v3335 = vld [vmem:[%s9 + $0x244] sm:$0xf]
    %v3336 = vld [vmem:[%s9 + $0x248] sm:$0xf]
    %v3337 = vld [vmem:[%s9 + $0x24c] sm:$0xf]
    %v3338 = vld [vmem:[%s9 + $0x250] sm:$0xf]
    %v3339 = vld [vmem:[%s9 + $0x254] sm:$0xf]
    %v3340 = vld [vmem:[%s9 + $0x258] sm:$0xf]
    %v3341 = vld [vmem:[%s9 + $0x25c] sm:$0xf]
    %v3342 = vld [vmem:[%s9 + $0x260] sm:$0xf]
    %v3343 = vld [vmem:[%s9 + $0x264] sm:$0xf]
    %v3344 = vld [vmem:[%s9 + $0x268] sm:$0xf]
    %v3345 = vld [vmem:[%s9 + $0x26c] sm:$0xf]
    %v3346 = vld [vmem:[%s9 + $0x270] sm:$0xf]
    %v3347 = vld [vmem:[%s9 + $0x274] sm:$0xf]
    %v3348 = vld [vmem:[%s9 + $0x278] sm:$0xf]
    %v3349 = vld [vmem:[%s9 + $0x27c] sm:$0xf]
    %v3350 = vld [vmem:[%s9 + $0x280] sm:$0xf]
    %v3351 = vld [vmem:[%s9 + $0x284] sm:$0xf]
    %v3352 = vld [vmem:[%s9 + $0x288] sm:$0xf]
    %v3353 = vld [vmem:[%s9 + $0x28c] sm:$0xf]
    %v3354 = vld [vmem:[%s9 + $0x290] sm:$0xf]
    %v3355 = vld [vmem:[%s9 + $0x294] sm:$0xf]
    %v3356 = vld [vmem:[%s9 + $0x298] sm:$0xf]
    %v3357 = vld [vmem:[%s9 + $0x29c] sm:$0xf]
    %v3358 = vld [vmem:[%s9 + $0x2a0] sm:$0xf]
    %v3359 = vld [vmem:[%s9 + $0x2a4] sm:$0xf]
    %v3360 = vld [vmem:[%s9 + $0x2a8] sm:$0xf]
    %v3361 = vld [vmem:[%s9 + $0x2ac] sm:$0xf]
    %v3362 = vld [vmem:[%s9 + $0x2b0] sm:$0xf]
    %v3363 = vld [vmem:[%s9 + $0x2b4] sm:$0xf]
    %v3364 = vld [vmem:[%s9 + $0x2b8] sm:$0xf]
    %v3365 = vld [vmem:[%s9 + $0x2bc] sm:$0xf]
    %v3366 = vld [vmem:[%s9 + $0x2c0] sm:$0xf]
    %v3367 = vld [vmem:[%s9 + $0x2c4] sm:$0xf]
    %v3368 = vld [vmem:[%s9 + $0x2c8] sm:$0xf]
    %v3369 = vld [vmem:[%s9 + $0x2cc] sm:$0xf]
    %v3370 = vld [vmem:[%s9 + $0x2d0] sm:$0xf]
    %v3371 = vld [vmem:[%s9 + $0x2d4] sm:$0xf]
    %v3372 = vld [vmem:[%s9 + $0x2d8] sm:$0xf]
    %v3373 = vld [vmem:[%s9 + $0x2dc] sm:$0xf]
    %v3374 = vld [vmem:[%s9 + $0x2e0] sm:$0xf]
    %v3375 = vld [vmem:[%s9 + $0x2e4] sm:$0xf]
    %v3376 = vld [vmem:[%s9 + $0x2e8] sm:$0xf]
    %v3377 = vld [vmem:[%s9 + $0x2ec] sm:$0xf]
    %v3378 = vld [vmem:[%s9 + $0x2f0] sm:$0xf]
    %v3379 = vld [vmem:[%s9 + $0x2f4] sm:$0xf]
    %v3380 = vld [vmem:[%s9 + $0x2f8] sm:$0xf]
    %v3381 = vld [vmem:[%s9 + $0x2fc] sm:$0xf]
    %v3382 = vld [vmem:[%s9 + $0x300] sm:$0xf]
    %v3383 = vld [vmem:[%s9 + $0x304] sm:$0xf]
    %v3384 = vld [vmem:[%s9 + $0x308] sm:$0xf]
    %v3385 = vld [vmem:[%s9 + $0x30c] sm:$0xf]
    %v3386 = vld [vmem:[%s9 + $0x310] sm:$0xf]
    %v3387 = vld [vmem:[%s9 + $0x314] sm:$0xf]
    %v3388 = vld [vmem:[%s9 + $0x318] sm:$0xf]
    %v3389 = vld [vmem:[%s9 + $0x31c] sm:$0xf]
    %v3390 = vld [vmem:[%s9 + $0x320] sm:$0xf]
    %v3391 = vld [vmem:[%s9 + $0x324] sm:$0xf]
    %v3392 = vld [vmem:[%s9 + $0x328] sm:$0xf]
    %v3393 = vld [vmem:[%s9 + $0x32c] sm:$0xf]
    %v3394 = vld [vmem:[%s9 + $0x330] sm:$0xf]
    %v3395 = vld [vmem:[%s9 + $0x334] sm:$0xf]
    %v3396 = vld [vmem:[%s9 + $0x338] sm:$0xf]
    %v3397 = vld [vmem:[%s9 + $0x33c] sm:$0xf]
    %v3398 = vld [vmem:[%s9 + $0x340] sm:$0xf]
    %v3399 = vld [vmem:[%s9 + $0x344] sm:$0xf]
    %v3400 = vld [vmem:[%s9 + $0x348] sm:$0xf]
    %v3401 = vld [vmem:[%s9 + $0x34c] sm:$0xf]
    %v3402 = vld [vmem:[%s9 + $0x350] sm:$0xf]
    %v3403 = vld [vmem:[%s9 + $0x354] sm:$0xf]
    %v3404 = vld [vmem:[%s9 + $0x358] sm:$0xf]
    %v3405 = vld [vmem:[%s9 + $0x35c] sm:$0xf]
    %v3406 = vld [vmem:[%s9 + $0x360] sm:$0xf]
    %v3407 = vld [vmem:[%s9 + $0x364] sm:$0xf]
    %v3408 = vld [vmem:[%s9 + $0x368] sm:$0xf]
    %v3409 = vld [vmem:[%s9 + $0x36c] sm:$0xf]
    %v3410 = vld [vmem:[%s9 + $0x370] sm:$0xf]
    %v3411 = vld [vmem:[%s9 + $0x374] sm:$0xf]
    %v3412 = vld [vmem:[%s9 + $0x378] sm:$0xf]
    %v3413 = vld [vmem:[%s9 + $0x37c] sm:$0xf]
    %v3414 = vld [vmem:[%s9 + $0x380] sm:$0xf]
    %v3415 = vld [vmem:[%s9 + $0x384] sm:$0xf]
    %v3416 = vld [vmem:[%s9 + $0x388] sm:$0xf]
    %v3417 = vld [vmem:[%s9 + $0x38c] sm:$0xf]
    %v3418 = vld [vmem:[%s9 + $0x390] sm:$0xf]
    %v3419 = vld [vmem:[%s9 + $0x394] sm:$0xf]
    %v3420 = vld [vmem:[%s9 + $0x398] sm:$0xf]
    %v3421 = vld [vmem:[%s9 + $0x39c] sm:$0xf]
    %v3422 = vld [vmem:[%s9 + $0x3a0] sm:$0xf]
    %v3423 = vld [vmem:[%s9 + $0x3a4] sm:$0xf]
    %v3424 = vld [vmem:[%s9 + $0x3a8] sm:$0xf]
    %v3425 = vld [vmem:[%s9 + $0x3ac] sm:$0xf]
    %v3426 = vld [vmem:[%s9 + $0x3b0] sm:$0xf]
    %v3427 = vld [vmem:[%s9 + $0x3b4] sm:$0xf]
    %v3428 = vld [vmem:[%s9 + $0x3b8] sm:$0xf]
    %v3429 = vld [vmem:[%s9 + $0x3bc] sm:$0xf]
    %v3430 = vld [vmem:[%s9 + $0x3c0] sm:$0xf]
    %v3431 = vld [vmem:[%s9 + $0x3c4] sm:$0xf]
    %v3432 = vld [vmem:[%s9 + $0x3c8] sm:$0xf]
    %v3433 = vld [vmem:[%s9 + $0x3cc] sm:$0xf]
    %v3434 = vld [vmem:[%s9 + $0x3d0] sm:$0xf]
    %v3435 = vld [vmem:[%s9 + $0x3d4] sm:$0xf]
    %v3436 = vld [vmem:[%s9 + $0x3d8] sm:$0xf]
    %v3437 = vld [vmem:[%s9 + $0x3dc] sm:$0xf]
    %v3438 = vld [vmem:[%s9 + $0x3e0] sm:$0xf]
    %v3439 = vld [vmem:[%s9 + $0x3e4] sm:$0xf]
    %v3440 = vld [vmem:[%s9 + $0x3e8] sm:$0xf]
    %v3441 = vld [vmem:[%s9 + $0x3ec] sm:$0xf]
    %v3442 = vld [vmem:[%s9 + $0x3f0] sm:$0xf]
    %v3443 = vld [vmem:[%s9 + $0x3f4] sm:$0xf]
    %v3444 = vld [vmem:[%s9 + $0x3f8] sm:$0xf]
    %v3445 = vld [vmem:[%s9 + $0x3fc] sm:$0xf]
    %v3446 = vlaneseq
    %v3447 = vshrl.u32 %v3446, 7
    %v3448 = vsub.s32 6, %v3447
    %v3449 = vrot.slane %v37, %v3448
    %v3706 = vunpack.c.l.b16 %v3190
    %v3707 = vunpack.c.l.b16 %v3191
    %v3708 = vunpack.c.l.b16 %v3192
    %v3709 = vunpack.c.l.b16 %v3193
    %v3710 = vunpack.c.l.b16 %v3194
    %v3711 = vunpack.c.l.b16 %v3195
    %v3712 = vunpack.c.l.b16 %v3196
    %v3713 = vunpack.c.l.b16 %v3197
    %v3714 = vunpack.c.l.b16 %v3198
    %v3715 = vunpack.c.l.b16 %v3199
    %v3716 = vunpack.c.l.b16 %v3200
    %v3717 = vunpack.c.l.b16 %v3201
    %v3718 = vunpack.c.l.b16 %v3202
    %v3719 = vunpack.c.l.b16 %v3203
    %v3720 = vunpack.c.l.b16 %v3204
    %v3721 = vunpack.c.l.b16 %v3205
    %v3722 = vunpack.c.l.b16 %v3206
    %v3723 = vunpack.c.l.b16 %v3207
    %v3724 = vunpack.c.l.b16 %v3208
    %v3725 = vunpack.c.l.b16 %v3209
    %v3726 = vunpack.c.l.b16 %v3210
    %v3727 = vunpack.c.l.b16 %v3211
    %v3728 = vunpack.c.l.b16 %v3212
    %v3729 = vunpack.c.l.b16 %v3213
    %v3730 = vunpack.c.l.b16 %v3214
    %v3731 = vunpack.c.l.b16 %v3215
    %v3732 = vunpack.c.l.b16 %v3216
    %v3733 = vunpack.c.l.b16 %v3217
    %v3734 = vunpack.c.l.b16 %v3218
    %v3735 = vunpack.c.l.b16 %v3219
    %v3736 = vunpack.c.l.b16 %v3220
    %v3737 = vunpack.c.l.b16 %v3221
    %v3738 = vunpack.c.l.b16 %v3222
    %v3739 = vunpack.c.l.b16 %v3223
    %v3740 = vunpack.c.l.b16 %v3224
    %v3741 = vunpack.c.l.b16 %v3225
    %v3742 = vunpack.c.l.b16 %v3226
    %v3743 = vunpack.c.l.b16 %v3227
    %v3744 = vunpack.c.l.b16 %v3228
    %v3745 = vunpack.c.l.b16 %v3229
    %v3746 = vunpack.c.l.b16 %v3230
    %v3747 = vunpack.c.l.b16 %v3231
    %v3748 = vunpack.c.l.b16 %v3232
    %v3749 = vunpack.c.l.b16 %v3233
    %v3750 = vunpack.c.l.b16 %v3234
    %v3751 = vunpack.c.l.b16 %v3235
    %v3752 = vunpack.c.l.b16 %v3236
    %v3753 = vunpack.c.l.b16 %v3237
    %v3754 = vunpack.c.l.b16 %v3238
    %v3755 = vunpack.c.l.b16 %v3239
    %v3756 = vunpack.c.l.b16 %v3240
    %v3757 = vunpack.c.l.b16 %v3241
    %v3758 = vunpack.c.l.b16 %v3242
    %v3759 = vunpack.c.l.b16 %v3243
    %v3760 = vunpack.c.l.b16 %v3244
    %v3761 = vunpack.c.l.b16 %v3245
    %v3762 = vunpack.c.l.b16 %v3246
    %v3763 = vunpack.c.l.b16 %v3247
    %v3764 = vunpack.c.l.b16 %v3248
    %v3765 = vunpack.c.l.b16 %v3249
    %v3766 = vunpack.c.l.b16 %v3250
    %v3767 = vunpack.c.l.b16 %v3251
    %v3768 = vunpack.c.l.b16 %v3252
    %v3769 = vunpack.c.l.b16 %v3253
    %v3770 = vunpack.c.l.b16 %v3254
    %v3771 = vunpack.c.l.b16 %v3255
    %v3772 = vunpack.c.l.b16 %v3256
    %v3773 = vunpack.c.l.b16 %v3257
    %v3774 = vunpack.c.l.b16 %v3258
    %v3775 = vunpack.c.l.b16 %v3259
    %v3776 = vunpack.c.l.b16 %v3260
    %v3777 = vunpack.c.l.b16 %v3261
    %v3778 = vunpack.c.l.b16 %v3262
    %v3779 = vunpack.c.l.b16 %v3263
    %v3780 = vunpack.c.l.b16 %v3264
    %v3781 = vunpack.c.l.b16 %v3265
    %v3782 = vunpack.c.l.b16 %v3266
    %v3783 = vunpack.c.l.b16 %v3267
    %v3784 = vunpack.c.l.b16 %v3268
    %v3785 = vunpack.c.l.b16 %v3269
    %v3786 = vunpack.c.l.b16 %v3270
    %v3787 = vunpack.c.l.b16 %v3271
    %v3788 = vunpack.c.l.b16 %v3272
    %v3789 = vunpack.c.l.b16 %v3273
    %v3790 = vunpack.c.l.b16 %v3274
    %v3791 = vunpack.c.l.b16 %v3275
    %v3792 = vunpack.c.l.b16 %v3276
    %v3793 = vunpack.c.l.b16 %v3277
    %v3794 = vunpack.c.l.b16 %v3278
    %v3795 = vunpack.c.l.b16 %v3279
    %v3796 = vunpack.c.l.b16 %v3280
    %v3797 = vunpack.c.l.b16 %v3281
    %v3798 = vunpack.c.l.b16 %v3282
    %v3799 = vunpack.c.l.b16 %v3283
    %v3800 = vunpack.c.l.b16 %v3284
    %v3801 = vunpack.c.l.b16 %v3285
    %v3802 = vunpack.c.l.b16 %v3286
    %v3803 = vunpack.c.l.b16 %v3287
    %v3804 = vunpack.c.l.b16 %v3288
    %v3805 = vunpack.c.l.b16 %v3289
    %v3806 = vunpack.c.l.b16 %v3290
    %v3807 = vunpack.c.l.b16 %v3291
    %v3808 = vunpack.c.l.b16 %v3292
    %v3809 = vunpack.c.l.b16 %v3293
    %v3810 = vunpack.c.l.b16 %v3294
    %v3811 = vunpack.c.l.b16 %v3295
    %v3812 = vunpack.c.l.b16 %v3296
    %v3813 = vunpack.c.l.b16 %v3297
    %v3814 = vunpack.c.l.b16 %v3298
    %v3815 = vunpack.c.l.b16 %v3299
    %v3816 = vunpack.c.l.b16 %v3300
    %v3817 = vunpack.c.l.b16 %v3301
    %v3818 = vunpack.c.l.b16 %v3302
    %v3819 = vunpack.c.l.b16 %v3303
    %v3820 = vunpack.c.l.b16 %v3304
    %v3821 = vunpack.c.l.b16 %v3305
    %v3822 = vunpack.c.l.b16 %v3306
    %v3823 = vunpack.c.l.b16 %v3307
    %v3824 = vunpack.c.l.b16 %v3308
    %v3825 = vunpack.c.l.b16 %v3309
    %v3826 = vunpack.c.l.b16 %v3310
    %v3827 = vunpack.c.l.b16 %v3311
    %v3828 = vunpack.c.l.b16 %v3312
    %v3829 = vunpack.c.l.b16 %v3313
    %v3830 = vunpack.c.l.b16 %v3314
    %v3831 = vunpack.c.l.b16 %v3315
    %v3832 = vunpack.c.l.b16 %v3316
    %v3833 = vunpack.c.l.b16 %v3317
    %v3834 = vunpack.c.l.b16 %v3318
    %v3835 = vunpack.c.l.b16 %v3319
    %v3836 = vunpack.c.l.b16 %v3320
    %v3837 = vunpack.c.l.b16 %v3321
    %v3838 = vunpack.c.l.b16 %v3322
    %v3839 = vunpack.c.l.b16 %v3323
    %v3840 = vunpack.c.l.b16 %v3324
    %v3841 = vunpack.c.l.b16 %v3325
    %v3842 = vunpack.c.l.b16 %v3326
    %v3843 = vunpack.c.l.b16 %v3327
    %v3844 = vunpack.c.l.b16 %v3328
    %v3845 = vunpack.c.l.b16 %v3329
    %v3846 = vunpack.c.l.b16 %v3330
    %v3847 = vunpack.c.l.b16 %v3331
    %v3848 = vunpack.c.l.b16 %v3332
    %v3849 = vunpack.c.l.b16 %v3333
    %v3850 = vunpack.c.l.b16 %v3334
    %v3851 = vunpack.c.l.b16 %v3335
    %v3852 = vunpack.c.l.b16 %v3336
    %v3853 = vunpack.c.l.b16 %v3337
    %v3854 = vunpack.c.l.b16 %v3338
    %v3855 = vunpack.c.l.b16 %v3339
    %v3856 = vunpack.c.l.b16 %v3340
    %v3857 = vunpack.c.l.b16 %v3341
    %v3858 = vunpack.c.l.b16 %v3342
    %v3859 = vunpack.c.l.b16 %v3343
    %v3860 = vunpack.c.l.b16 %v3344
    %v3861 = vunpack.c.l.b16 %v3345
    %v3862 = vunpack.c.l.b16 %v3346
    %v3863 = vunpack.c.l.b16 %v3347
    %v3864 = vunpack.c.l.b16 %v3348
    %v3865 = vunpack.c.l.b16 %v3349
    %v3866 = vunpack.c.l.b16 %v3350
    %v3867 = vunpack.c.l.b16 %v3351
    %v3868 = vunpack.c.l.b16 %v3352
    %v3869 = vunpack.c.l.b16 %v3353
    %v3870 = vunpack.c.l.b16 %v3354
    %v3871 = vunpack.c.l.b16 %v3355
    %v3872 = vunpack.c.l.b16 %v3356
    %v3873 = vunpack.c.l.b16 %v3357
    %v3874 = vunpack.c.l.b16 %v3358
    %v3875 = vunpack.c.l.b16 %v3359
    %v3876 = vunpack.c.l.b16 %v3360
    %v3877 = vunpack.c.l.b16 %v3361
    %v3878 = vunpack.c.l.b16 %v3362
    %v3879 = vunpack.c.l.b16 %v3363
    %v3880 = vunpack.c.l.b16 %v3364
    %v3881 = vunpack.c.l.b16 %v3365
    %v3882 = vunpack.c.l.b16 %v3366
    %v3883 = vunpack.c.l.b16 %v3367
    %v3884 = vunpack.c.l.b16 %v3368
    %v3885 = vunpack.c.l.b16 %v3369
    %v3886 = vunpack.c.l.b16 %v3370
    %v3887 = vunpack.c.l.b16 %v3371
    %v3888 = vunpack.c.l.b16 %v3372
    %v3889 = vunpack.c.l.b16 %v3373
    %v3890 = vunpack.c.l.b16 %v3374
    %v3891 = vunpack.c.l.b16 %v3375
    %v3892 = vunpack.c.l.b16 %v3376
    %v3893 = vunpack.c.l.b16 %v3377
    %v3894 = vunpack.c.l.b16 %v3378
    %v3895 = vunpack.c.l.b16 %v3379
    %v3896 = vunpack.c.l.b16 %v3380
    %v3897 = vunpack.c.l.b16 %v3381
    %v3898 = vunpack.c.l.b16 %v3382
    %v3899 = vunpack.c.l.b16 %v3383
    %v3900 = vunpack.c.l.b16 %v3384
    %v3901 = vunpack.c.l.b16 %v3385
    %v3902 = vunpack.c.l.b16 %v3386
    %v3903 = vunpack.c.l.b16 %v3387
    %v3904 = vunpack.c.l.b16 %v3388
    %v3905 = vunpack.c.l.b16 %v3389
    %v3906 = vunpack.c.l.b16 %v3390
    %v3907 = vunpack.c.l.b16 %v3391
    %v3908 = vunpack.c.l.b16 %v3392
    %v3909 = vunpack.c.l.b16 %v3393
    %v3910 = vunpack.c.l.b16 %v3394
    %v3911 = vunpack.c.l.b16 %v3395
    %v3912 = vunpack.c.l.b16 %v3396
    %v3913 = vunpack.c.l.b16 %v3397
    %v3914 = vunpack.c.l.b16 %v3398
    %v3915 = vunpack.c.l.b16 %v3399
    %v3916 = vunpack.c.l.b16 %v3400
    %v3917 = vunpack.c.l.b16 %v3401
    %v3918 = vunpack.c.l.b16 %v3402
    %v3919 = vunpack.c.l.b16 %v3403
    %v3920 = vunpack.c.l.b16 %v3404
    %v3921 = vunpack.c.l.b16 %v3405
    %v3922 = vunpack.c.l.b16 %v3406
    %v3923 = vunpack.c.l.b16 %v3407
    %v3924 = vunpack.c.l.b16 %v3408
    %v3925 = vunpack.c.l.b16 %v3409
    %v3926 = vunpack.c.l.b16 %v3410
    %v3927 = vunpack.c.l.b16 %v3411
    %v3928 = vunpack.c.l.b16 %v3412
    %v3929 = vunpack.c.l.b16 %v3413
    %v3930 = vunpack.c.l.b16 %v3414
    %v3931 = vunpack.c.l.b16 %v3415
    %v3932 = vunpack.c.l.b16 %v3416
    %v3933 = vunpack.c.l.b16 %v3417
    %v3934 = vunpack.c.l.b16 %v3418
    %v3935 = vunpack.c.l.b16 %v3419
    %v3936 = vunpack.c.l.b16 %v3420
    %v3937 = vunpack.c.l.b16 %v3421
    %v3938 = vunpack.c.l.b16 %v3422
    %v3939 = vunpack.c.l.b16 %v3423
    %v3940 = vunpack.c.l.b16 %v3424
    %v3941 = vunpack.c.l.b16 %v3425
    %v3942 = vunpack.c.l.b16 %v3426
    %v3943 = vunpack.c.l.b16 %v3427
    %v3944 = vunpack.c.l.b16 %v3428
    %v3945 = vunpack.c.l.b16 %v3429
    %v3946 = vunpack.c.l.b16 %v3430
    %v3947 = vunpack.c.l.b16 %v3431
    %v3948 = vunpack.c.l.b16 %v3432
    %v3949 = vunpack.c.l.b16 %v3433
    %v3950 = vunpack.c.l.b16 %v3434
    %v3951 = vunpack.c.l.b16 %v3435
    %v3952 = vunpack.c.l.b16 %v3436
    %v3953 = vunpack.c.l.b16 %v3437
    %v3954 = vunpack.c.l.b16 %v3438
    %v3955 = vunpack.c.l.b16 %v3439
    %v3956 = vunpack.c.l.b16 %v3440
    %v3957 = vunpack.c.l.b16 %v3441
    %v3958 = vunpack.c.l.b16 %v3442
    %v3959 = vunpack.c.l.b16 %v3443
    %v3960 = vunpack.c.l.b16 %v3444
    %v3961 = vunpack.c.l.b16 %v3445
    %v3962 = vpack.c.b16 %v3707, %v3706
    %v3963 = vpack.c.b16 %v3709, %v3708
    %v3964 = vpack.c.b16 %v3711, %v3710
    %v3965 = vpack.c.b16 %v3713, %v3712
    %v3966 = vpack.c.b16 %v3715, %v3714
    %v3967 = vpack.c.b16 %v3717, %v3716
    %v3968 = vpack.c.b16 %v3719, %v3718
    %v3969 = vpack.c.b16 %v3721, %v3720
    %v3970 = vpack.c.b16 %v3723, %v3722
    %v3971 = vpack.c.b16 %v3725, %v3724
    %v3972 = vpack.c.b16 %v3727, %v3726
    %v3973 = vpack.c.b16 %v3729, %v3728
    %v3974 = vpack.c.b16 %v3731, %v3730
    %v3975 = vpack.c.b16 %v3733, %v3732
    %v3976 = vpack.c.b16 %v3735, %v3734
    %v3977 = vpack.c.b16 %v3737, %v3736
    %v3978 = vpack.c.b16 %v3739, %v3738
    %v3979 = vpack.c.b16 %v3741, %v3740
    %v3980 = vpack.c.b16 %v3743, %v3742
    %v3981 = vpack.c.b16 %v3745, %v3744
    %v3982 = vpack.c.b16 %v3747, %v3746
    %v3983 = vpack.c.b16 %v3749, %v3748
    %v3984 = vpack.c.b16 %v3751, %v3750
    %v3985 = vpack.c.b16 %v3753, %v3752
    %v3986 = vpack.c.b16 %v3755, %v3754
    %v3987 = vpack.c.b16 %v3757, %v3756
    %v3988 = vpack.c.b16 %v3759, %v3758
    %v3989 = vpack.c.b16 %v3761, %v3760
    %v3990 = vpack.c.b16 %v3763, %v3762
    %v3991 = vpack.c.b16 %v3765, %v3764
    %v3992 = vpack.c.b16 %v3767, %v3766
    %v3993 = vpack.c.b16 %v3769, %v3768
    %v3994 = vpack.c.b16 %v3771, %v3770
    %v3995 = vpack.c.b16 %v3773, %v3772
    %v3996 = vpack.c.b16 %v3775, %v3774
    %v3997 = vpack.c.b16 %v3777, %v3776
    %v3998 = vpack.c.b16 %v3779, %v3778
    %v3999 = vpack.c.b16 %v3781, %v3780
    %v4000 = vpack.c.b16 %v3783, %v3782
    %v4001 = vpack.c.b16 %v3785, %v3784
    %v4002 = vpack.c.b16 %v3787, %v3786
    %v4003 = vpack.c.b16 %v3789, %v3788
    %v4004 = vpack.c.b16 %v3791, %v3790
    %v4005 = vpack.c.b16 %v3793, %v3792
    %v4006 = vpack.c.b16 %v3795, %v3794
    %v4007 = vpack.c.b16 %v3797, %v3796
    %v4008 = vpack.c.b16 %v3799, %v3798
    %v4009 = vpack.c.b16 %v3801, %v3800
    %v4010 = vpack.c.b16 %v3803, %v3802
    %v4011 = vpack.c.b16 %v3805, %v3804
    %v4012 = vpack.c.b16 %v3807, %v3806
    %v4013 = vpack.c.b16 %v3809, %v3808
    %v4014 = vpack.c.b16 %v3811, %v3810
    %v4015 = vpack.c.b16 %v3813, %v3812
    %v4016 = vpack.c.b16 %v3815, %v3814
    %v4017 = vpack.c.b16 %v3817, %v3816
    %v4018 = vpack.c.b16 %v3819, %v3818
    %v4019 = vpack.c.b16 %v3821, %v3820
    %v4020 = vpack.c.b16 %v3823, %v3822
    %v4021 = vpack.c.b16 %v3825, %v3824
    %v4022 = vpack.c.b16 %v3827, %v3826
    %v4023 = vpack.c.b16 %v3829, %v3828
    %v4024 = vpack.c.b16 %v3831, %v3830
    %v4025 = vpack.c.b16 %v3833, %v3832
    %v4026 = vpack.c.b16 %v3835, %v3834
    %v4027 = vpack.c.b16 %v3837, %v3836
    %v4028 = vpack.c.b16 %v3839, %v3838
    %v4029 = vpack.c.b16 %v3841, %v3840
    %v4030 = vpack.c.b16 %v3843, %v3842
    %v4031 = vpack.c.b16 %v3845, %v3844
    %v4032 = vpack.c.b16 %v3847, %v3846
    %v4033 = vpack.c.b16 %v3849, %v3848
    %v4034 = vpack.c.b16 %v3851, %v3850
    %v4035 = vpack.c.b16 %v3853, %v3852
    %v4036 = vpack.c.b16 %v3855, %v3854
    %v4037 = vpack.c.b16 %v3857, %v3856
    %v4038 = vpack.c.b16 %v3859, %v3858
    %v4039 = vpack.c.b16 %v3861, %v3860
    %v4040 = vpack.c.b16 %v3863, %v3862
    %v4041 = vpack.c.b16 %v3865, %v3864
    %v4042 = vpack.c.b16 %v3867, %v3866
    %v4043 = vpack.c.b16 %v3869, %v3868
    %v4044 = vpack.c.b16 %v3871, %v3870
    %v4045 = vpack.c.b16 %v3873, %v3872
    %v4046 = vpack.c.b16 %v3875, %v3874
    %v4047 = vpack.c.b16 %v3877, %v3876
    %v4048 = vpack.c.b16 %v3879, %v3878
    %v4049 = vpack.c.b16 %v3881, %v3880
    %v4050 = vpack.c.b16 %v3883, %v3882
    %v4051 = vpack.c.b16 %v3885, %v3884
    %v4052 = vpack.c.b16 %v3887, %v3886
    %v4053 = vpack.c.b16 %v3889, %v3888
    %v4054 = vpack.c.b16 %v3891, %v3890
    %v4055 = vpack.c.b16 %v3893, %v3892
    %v4056 = vpack.c.b16 %v3895, %v3894
    %v4057 = vpack.c.b16 %v3897, %v3896
    %v4058 = vpack.c.b16 %v3899, %v3898
    %v4059 = vpack.c.b16 %v3901, %v3900
    %v4060 = vpack.c.b16 %v3903, %v3902
    %v4061 = vpack.c.b16 %v3905, %v3904
    %v4062 = vpack.c.b16 %v3907, %v3906
    %v4063 = vpack.c.b16 %v3909, %v3908
    %v4064 = vpack.c.b16 %v3911, %v3910
    %v4065 = vpack.c.b16 %v3913, %v3912
    %v4066 = vpack.c.b16 %v3915, %v3914
    %v4067 = vpack.c.b16 %v3917, %v3916
    %v4068 = vpack.c.b16 %v3919, %v3918
    %v4069 = vpack.c.b16 %v3921, %v3920
    %v4070 = vpack.c.b16 %v3923, %v3922
    %v4071 = vpack.c.b16 %v3925, %v3924
    %v4072 = vpack.c.b16 %v3927, %v3926
    %v4073 = vpack.c.b16 %v3929, %v3928
    %v4074 = vpack.c.b16 %v3931, %v3930
    %v4075 = vpack.c.b16 %v3933, %v3932
    %v4076 = vpack.c.b16 %v3935, %v3934
    %v4077 = vpack.c.b16 %v3937, %v3936
    %v4078 = vpack.c.b16 %v3939, %v3938
    %v4079 = vpack.c.b16 %v3941, %v3940
    %v4080 = vpack.c.b16 %v3943, %v3942
    %v4081 = vpack.c.b16 %v3945, %v3944
    %v4082 = vpack.c.b16 %v3947, %v3946
    %v4083 = vpack.c.b16 %v3949, %v3948
    %v4084 = vpack.c.b16 %v3951, %v3950
    %v4085 = vpack.c.b16 %v3953, %v3952
    %v4086 = vpack.c.b16 %v3955, %v3954
    %v4087 = vpack.c.b16 %v3957, %v3956
    %v4088 = vpack.c.b16 %v3959, %v3958
    %v4089 = vpack.c.b16 %v3961, %v3960
    %4218 = vmatprep.subr.bf16.mxu0 0
    %4219 = vmatpush1.bf16.msra.mxu0 %v3969
    %4220 = vmatprep.subr.bf16.mxu0 0
    %4221 = vmatpush1.bf16.msra.mxu0 %v3968
    %4222 = vmatprep.subr.bf16.mxu0 0
    %4223 = vmatpush1.bf16.msra.mxu0 %v3967
    %4224 = vmatprep.subr.bf16.mxu0 0
    %4225 = vmatpush1.bf16.msra.mxu0 %v3966
    %4226 = vmatprep.subr.bf16.mxu0 0
    %4227 = vmatpush1.bf16.msra.mxu0 %v3965
    %4228 = vmatprep.subr.bf16.mxu0 0
    %4229 = vmatpush1.bf16.msra.mxu0 %v3964
    %4230 = vmatprep.subr.bf16.mxu0 0
    %4231 = vmatpush1.bf16.msra.mxu0 %v3963
    %4232 = vmatprep.subr.bf16.mxu0 0
    %4233 = vmatpush1.bf16.msra.mxu0 %v3962
    %4234 = vmatprep.subr.bf16.mxu0 0
    %4235 = vmatpush2.bf16.msra.mxu0 %v3977
    %4236 = vmatprep.subr.bf16.mxu0 0
    %4237 = vmatpush2.bf16.msra.mxu0 %v3976
    %4238 = vmatprep.subr.bf16.mxu0 0
    %4239 = vmatpush2.bf16.msra.mxu0 %v3975
    %4240 = vmatprep.subr.bf16.mxu0 0
    %4241 = vmatpush2.bf16.msra.mxu0 %v3974
    %4242 = vmatprep.subr.bf16.mxu0 0
    %4243 = vmatpush2.bf16.msra.mxu0 %v3973
    %4244 = vmatprep.subr.bf16.mxu0 0
    %4245 = vmatpush2.bf16.msra.mxu0 %v3972
    %4246 = vmatprep.subr.bf16.mxu0 0
    %4247 = vmatpush2.bf16.msra.mxu0 %v3971
    %4248 = vmatprep.subr.bf16.mxu0 0
    %4249 = vmatpush2.bf16.msra.mxu0 %v3970
    %4250 = vmatprep.mubr.bf16.mxu0 %v3175
    %4251 = vmatmul.mubr.bf16.gmra.mxu0 %v3174
    %v4252 = vpop.f32.mrf.mxu0
    %v4253 = vadd.f32 %v3449, %v4252
    %v4254 = vpop.f32.mrf.mxu0
    %v4255 = vpop.f32.mrf.mxu0
    %v4256 = vadd.f32 %v3449, %v4255
    %v4257 = vpop.f32.mrf.mxu0
    %4258 = vdwg.mxu0
    %4259 = vmatprep.subr.bf16.mxu0 0
    %4260 = vmatpush1.bf16.msra.mxu0 %v3985
    %4261 = vmatprep.subr.bf16.mxu0 0
    %4262 = vmatpush1.bf16.msra.mxu0 %v3984
    %4263 = vmatprep.subr.bf16.mxu0 0
    %4264 = vmatpush1.bf16.msra.mxu0 %v3983
    %4265 = vmatprep.subr.bf16.mxu0 0
    %4266 = vmatpush1.bf16.msra.mxu0 %v3982
    %4267 = vmatprep.subr.bf16.mxu0 0
    %4268 = vmatpush1.bf16.msra.mxu0 %v3981
    %4269 = vmatprep.subr.bf16.mxu0 0
    %4270 = vmatpush1.bf16.msra.mxu0 %v3980
    %4271 = vmatprep.subr.bf16.mxu0 0
    %4272 = vmatpush1.bf16.msra.mxu0 %v3979
    %4273 = vmatprep.subr.bf16.mxu0 0
    %4274 = vmatpush1.bf16.msra.mxu0 %v3978
    %4275 = vmatprep.subr.bf16.mxu0 0
    %4276 = vmatpush2.bf16.msra.mxu0 %v3993
    %4277 = vmatprep.subr.bf16.mxu0 0
    %4278 = vmatpush2.bf16.msra.mxu0 %v3992
    %4279 = vmatprep.subr.bf16.mxu0 0
    %4280 = vmatpush2.bf16.msra.mxu0 %v3991
    %4281 = vmatprep.subr.bf16.mxu0 0
    %4282 = vmatpush2.bf16.msra.mxu0 %v3990
    %4283 = vmatprep.subr.bf16.mxu0 0
    %4284 = vmatpush2.bf16.msra.mxu0 %v3989
    %4285 = vmatprep.subr.bf16.mxu0 0
    %4286 = vmatpush2.bf16.msra.mxu0 %v3988
    %4287 = vmatprep.subr.bf16.mxu0 0
    %4288 = vmatpush2.bf16.msra.mxu0 %v3987
    %4289 = vmatprep.subr.bf16.mxu0 0
    %4290 = vmatpush2.bf16.msra.mxu0 %v3986
    %4291 = vmatprep.mubr.bf16.mxu0 %v3177
    %4292 = vmatmul.mubr.bf16.gmra.mxu0 %v3176
    %v4293 = vpop.f32.mrf.mxu0
    %v4294 = vadd.f32 %v4253, %v4293
    %v4295 = vpop.f32.mrf.mxu0
    %v4296 = vpop.f32.mrf.mxu0
    %v4297 = vadd.f32 %v4256, %v4296
    %v4298 = vpop.f32.mrf.mxu0
    %4299 = vdwg.mxu0
    %4300 = vmatprep.subr.bf16.mxu0 0
    %4301 = vmatpush1.bf16.msra.mxu0 %v4001
    %4302 = vmatprep.subr.bf16.mxu0 0
    %4303 = vmatpush1.bf16.msra.mxu0 %v4000
    %4304 = vmatprep.subr.bf16.mxu0 0
    %4305 = vmatpush1.bf16.msra.mxu0 %v3999
    %4306 = vmatprep.subr.bf16.mxu0 0
    %4307 = vmatpush1.bf16.msra.mxu0 %v3998
    %4308 = vmatprep.subr.bf16.mxu0 0
    %4309 = vmatpush1.bf16.msra.mxu0 %v3997
    %4310 = vmatprep.subr.bf16.mxu0 0
    %4311 = vmatpush1.bf16.msra.mxu0 %v3996
    %4312 = vmatprep.subr.bf16.mxu0 0
    %4313 = vmatpush1.bf16.msra.mxu0 %v3995
    %4314 = vmatprep.subr.bf16.mxu0 0
    %4315 = vmatpush1.bf16.msra.mxu0 %v3994
    %4316 = vmatprep.subr.bf16.mxu0 0
    %4317 = vmatpush2.bf16.msra.mxu0 %v4009
    %4318 = vmatprep.subr.bf16.mxu0 0
    %4319 = vmatpush2.bf16.msra.mxu0 %v4008
    %4320 = vmatprep.subr.bf16.mxu0 0
    %4321 = vmatpush2.bf16.msra.mxu0 %v4007
    %4322 = vmatprep.subr.bf16.mxu0 0
    %4323 = vmatpush2.bf16.msra.mxu0 %v4006
    %4324 = vmatprep.subr.bf16.mxu0 0
    %4325 = vmatpush2.bf16.msra.mxu0 %v4005
    %4326 = vmatprep.subr.bf16.mxu0 0
    %4327 = vmatpush2.bf16.msra.mxu0 %v4004
    %4328 = vmatprep.subr.bf16.mxu0 0
    %4329 = vmatpush2.bf16.msra.mxu0 %v4003
    %4330 = vmatprep.subr.bf16.mxu0 0
    %4331 = vmatpush2.bf16.msra.mxu0 %v4002
    %4332 = vmatprep.mubr.bf16.mxu0 %v3179
    %4333 = vmatmul.mubr.bf16.gmra.mxu0 %v3178
    %v4334 = vpop.f32.mrf.mxu0
    %v4335 = vadd.f32 %v4294, %v4334
    %v4336 = vpop.f32.mrf.mxu0
    %v4337 = vpop.f32.mrf.mxu0
    %v4338 = vadd.f32 %v4297, %v4337
    %v4339 = vpop.f32.mrf.mxu0
    %4340 = vdwg.mxu0
    %4341 = vmatprep.subr.bf16.mxu0 0
    %4342 = vmatpush1.bf16.msra.mxu0 %v4017
    %4343 = vmatprep.subr.bf16.mxu0 0
    %4344 = vmatpush1.bf16.msra.mxu0 %v4016
    %4345 = vmatprep.subr.bf16.mxu0 0
    %4346 = vmatpush1.bf16.msra.mxu0 %v4015
    %4347 = vmatprep.subr.bf16.mxu0 0
    %4348 = vmatpush1.bf16.msra.mxu0 %v4014
    %4349 = vmatprep.subr.bf16.mxu0 0
    %4350 = vmatpush1.bf16.msra.mxu0 %v4013
    %4351 = vmatprep.subr.bf16.mxu0 0
    %4352 = vmatpush1.bf16.msra.mxu0 %v4012
    %4353 = vmatprep.subr.bf16.mxu0 0
    %4354 = vmatpush1.bf16.msra.mxu0 %v4011
    %4355 = vmatprep.subr.bf16.mxu0 0
    %4356 = vmatpush1.bf16.msra.mxu0 %v4010
    %4357 = vmatprep.subr.bf16.mxu0 0
    %4358 = vmatpush2.bf16.msra.mxu0 %v4025
    %4359 = vmatprep.subr.bf16.mxu0 0
    %4360 = vmatpush2.bf16.msra.mxu0 %v4024
    %4361 = vmatprep.subr.bf16.mxu0 0
    %4362 = vmatpush2.bf16.msra.mxu0 %v4023
    %4363 = vmatprep.subr.bf16.mxu0 0
    %4364 = vmatpush2.bf16.msra.mxu0 %v4022
    %4365 = vmatprep.subr.bf16.mxu0 0
    %4366 = vmatpush2.bf16.msra.mxu0 %v4021
    %4367 = vmatprep.subr.bf16.mxu0 0
    %4368 = vmatpush2.bf16.msra.mxu0 %v4020
    %4369 = vmatprep.subr.bf16.mxu0 0
    %4370 = vmatpush2.bf16.msra.mxu0 %v4019
    %4371 = vmatprep.subr.bf16.mxu0 0
    %4372 = vmatpush2.bf16.msra.mxu0 %v4018
    %4373 = vmatprep.mubr.bf16.mxu0 %v3181
    %4374 = vmatmul.mubr.bf16.gmra.mxu0 %v3180
    %v4375 = vpop.f32.mrf.mxu0
    %v4376 = vadd.f32 %v4335, %v4375
    %v4377 = vpop.f32.mrf.mxu0
    %v4378 = vpop.f32.mrf.mxu0
    %v4379 = vadd.f32 %v4338, %v4378
    %v4380 = vpop.f32.mrf.mxu0
    %4381 = vdwg.mxu0
    %4382 = vmatprep.subr.bf16.mxu0 0
    %4383 = vmatpush1.bf16.msra.mxu0 %v4033
    %4384 = vmatprep.subr.bf16.mxu0 0
    %4385 = vmatpush1.bf16.msra.mxu0 %v4032
    %4386 = vmatprep.subr.bf16.mxu0 0
    %4387 = vmatpush1.bf16.msra.mxu0 %v4031
    %4388 = vmatprep.subr.bf16.mxu0 0
    %4389 = vmatpush1.bf16.msra.mxu0 %v4030
    %4390 = vmatprep.subr.bf16.mxu0 0
    %4391 = vmatpush1.bf16.msra.mxu0 %v4029
    %4392 = vmatprep.subr.bf16.mxu0 0
    %4393 = vmatpush1.bf16.msra.mxu0 %v4028
    %4394 = vmatprep.subr.bf16.mxu0 0
    %4395 = vmatpush1.bf16.msra.mxu0 %v4027
    %4396 = vmatprep.subr.bf16.mxu0 0
    %4397 = vmatpush1.bf16.msra.mxu0 %v4026
    %4398 = vmatprep.subr.bf16.mxu0 0
    %4399 = vmatpush2.bf16.msra.mxu0 %v4041
    %4400 = vmatprep.subr.bf16.mxu0 0
    %4401 = vmatpush2.bf16.msra.mxu0 %v4040
    %4402 = vmatprep.subr.bf16.mxu0 0
    %4403 = vmatpush2.bf16.msra.mxu0 %v4039
    %4404 = vmatprep.subr.bf16.mxu0 0
    %4405 = vmatpush2.bf16.msra.mxu0 %v4038
    %4406 = vmatprep.subr.bf16.mxu0 0
    %4407 = vmatpush2.bf16.msra.mxu0 %v4037
    %4408 = vmatprep.subr.bf16.mxu0 0
    %4409 = vmatpush2.bf16.msra.mxu0 %v4036
    %4410 = vmatprep.subr.bf16.mxu0 0
    %4411 = vmatpush2.bf16.msra.mxu0 %v4035
    %4412 = vmatprep.subr.bf16.mxu0 0
    %4413 = vmatpush2.bf16.msra.mxu0 %v4034
    %4414 = vmatprep.mubr.bf16.mxu0 %v3183
    %4415 = vmatmul.mubr.bf16.gmra.mxu0 %v3182
    %v4416 = vpop.f32.mrf.mxu0
    %v4417 = vadd.f32 %v4376, %v4416
    %v4418 = vpop.f32.mrf.mxu0
    %v4419 = vpop.f32.mrf.mxu0
    %v4420 = vadd.f32 %v4379, %v4419
    %v4421 = vpop.f32.mrf.mxu0
    %4422 = vdwg.mxu0
    %4423 = vmatprep.subr.bf16.mxu0 0
    %4424 = vmatpush1.bf16.msra.mxu0 %v4049
    %4425 = vmatprep.subr.bf16.mxu0 0
    %4426 = vmatpush1.bf16.msra.mxu0 %v4048
    %4427 = vmatprep.subr.bf16.mxu0 0
    %4428 = vmatpush1.bf16.msra.mxu0 %v4047
    %4429 = vmatprep.subr.bf16.mxu0 0
    %4430 = vmatpush1.bf16.msra.mxu0 %v4046
    %4431 = vmatprep.subr.bf16.mxu0 0
    %4432 = vmatpush1.bf16.msra.mxu0 %v4045
    %4433 = vmatprep.subr.bf16.mxu0 0
    %4434 = vmatpush1.bf16.msra.mxu0 %v4044
    %4435 = vmatprep.subr.bf16.mxu0 0
    %4436 = vmatpush1.bf16.msra.mxu0 %v4043
    %4437 = vmatprep.subr.bf16.mxu0 0
    %4438 = vmatpush1.bf16.msra.mxu0 %v4042
    %4439 = vmatprep.subr.bf16.mxu0 0
    %4440 = vmatpush2.bf16.msra.mxu0 %v4057
    %4441 = vmatprep.subr.bf16.mxu0 0
    %4442 = vmatpush2.bf16.msra.mxu0 %v4056
    %4443 = vmatprep.subr.bf16.mxu0 0
    %4444 = vmatpush2.bf16.msra.mxu0 %v4055
    %4445 = vmatprep.subr.bf16.mxu0 0
    %4446 = vmatpush2.bf16.msra.mxu0 %v4054
    %4447 = vmatprep.subr.bf16.mxu0 0
    %4448 = vmatpush2.bf16.msra.mxu0 %v4053
    %4449 = vmatprep.subr.bf16.mxu0 0
    %4450 = vmatpush2.bf16.msra.mxu0 %v4052
    %4451 = vmatprep.subr.bf16.mxu0 0
    %4452 = vmatpush2.bf16.msra.mxu0 %v4051
    %4453 = vmatprep.subr.bf16.mxu0 0
    %4454 = vmatpush2.bf16.msra.mxu0 %v4050
    %4455 = vmatprep.mubr.bf16.mxu0 %v3185
    %4456 = vmatmul.mubr.bf16.gmra.mxu0 %v3184
    %v4457 = vpop.f32.mrf.mxu0
    %v4458 = vadd.f32 %v4417, %v4457
    %v4459 = vpop.f32.mrf.mxu0
    %v4460 = vpop.f32.mrf.mxu0
    %v4461 = vadd.f32 %v4420, %v4460
    %v4462 = vpop.f32.mrf.mxu0
    %4463 = vdwg.mxu0
    %4464 = vmatprep.subr.bf16.mxu0 0
    %4465 = vmatpush1.bf16.msra.mxu0 %v4065
    %4466 = vmatprep.subr.bf16.mxu0 0
    %4467 = vmatpush1.bf16.msra.mxu0 %v4064
    %4468 = vmatprep.subr.bf16.mxu0 0
    %4469 = vmatpush1.bf16.msra.mxu0 %v4063
    %4470 = vmatprep.subr.bf16.mxu0 0
    %4471 = vmatpush1.bf16.msra.mxu0 %v4062
    %4472 = vmatprep.subr.bf16.mxu0 0
    %4473 = vmatpush1.bf16.msra.mxu0 %v4061
    %4474 = vmatprep.subr.bf16.mxu0 0
    %4475 = vmatpush1.bf16.msra.mxu0 %v4060
    %4476 = vmatprep.subr.bf16.mxu0 0
    %4477 = vmatpush1.bf16.msra.mxu0 %v4059
    %4478 = vmatprep.subr.bf16.mxu0 0
    %4479 = vmatpush1.bf16.msra.mxu0 %v4058
    %4480 = vmatprep.subr.bf16.mxu0 0
    %4481 = vmatpush2.bf16.msra.mxu0 %v4073
    %4482 = vmatprep.subr.bf16.mxu0 0
    %4483 = vmatpush2.bf16.msra.mxu0 %v4072
    %4484 = vmatprep.subr.bf16.mxu0 0
    %4485 = vmatpush2.bf16.msra.mxu0 %v4071
    %4486 = vmatprep.subr.bf16.mxu0 0
    %4487 = vmatpush2.bf16.msra.mxu0 %v4070
    %4488 = vmatprep.subr.bf16.mxu0 0
    %4489 = vmatpush2.bf16.msra.mxu0 %v4069
    %4490 = vmatprep.subr.bf16.mxu0 0
    %4491 = vmatpush2.bf16.msra.mxu0 %v4068
    %4492 = vmatprep.subr.bf16.mxu0 0
    %4493 = vmatpush2.bf16.msra.mxu0 %v4067
    %4494 = vmatprep.subr.bf16.mxu0 0
    %4495 = vmatpush2.bf16.msra.mxu0 %v4066
    %4496 = vmatprep.mubr.bf16.mxu0 %v3187
    %4497 = vmatmul.mubr.bf16.gmra.mxu0 %v3186
    %v4498 = vpop.f32.mrf.mxu0
    %v4499 = vadd.f32 %v4458, %v4498
    %v4500 = vpop.f32.mrf.mxu0
    %v4501 = vpop.f32.mrf.mxu0
    %v4502 = vadd.f32 %v4461, %v4501
    %v4503 = vpop.f32.mrf.mxu0
    %4504 = vdwg.mxu0
    %4505 = vmatprep.subr.bf16.mxu0 0
    %4506 = vmatpush1.bf16.msra.mxu0 %v4081
    %4507 = vmatprep.subr.bf16.mxu0 0
    %4508 = vmatpush1.bf16.msra.mxu0 %v4080
    %4509 = vmatprep.subr.bf16.mxu0 0
    %4510 = vmatpush1.bf16.msra.mxu0 %v4079
    %4511 = vmatprep.subr.bf16.mxu0 0
    %4512 = vmatpush1.bf16.msra.mxu0 %v4078
    %4513 = vmatprep.subr.bf16.mxu0 0
    %4514 = vmatpush1.bf16.msra.mxu0 %v4077
    %4515 = vmatprep.subr.bf16.mxu0 0
    %4516 = vmatpush1.bf16.msra.mxu0 %v4076
    %4517 = vmatprep.subr.bf16.mxu0 0
    %4518 = vmatpush1.bf16.msra.mxu0 %v4075
    %4519 = vmatprep.subr.bf16.mxu0 0
    %4520 = vmatpush1.bf16.msra.mxu0 %v4074
    %4521 = vmatprep.subr.bf16.mxu0 0
    %4522 = vmatpush2.bf16.msra.mxu0 %v4089
    %4523 = vmatprep.subr.bf16.mxu0 0
    %4524 = vmatpush2.bf16.msra.mxu0 %v4088
    %4525 = vmatprep.subr.bf16.mxu0 0
    %4526 = vmatpush2.bf16.msra.mxu0 %v4087
    %4527 = vmatprep.subr.bf16.mxu0 0
    %4528 = vmatpush2.bf16.msra.mxu0 %v4086
    %4529 = vmatprep.subr.bf16.mxu0 0
    %4530 = vmatpush2.bf16.msra.mxu0 %v4085
    %4531 = vmatprep.subr.bf16.mxu0 0
    %4532 = vmatpush2.bf16.msra.mxu0 %v4084
    %4533 = vmatprep.subr.bf16.mxu0 0
    %4534 = vmatpush2.bf16.msra.mxu0 %v4083
    %4535 = vmatprep.subr.bf16.mxu0 0
    %4536 = vmatpush2.bf16.msra.mxu0 %v4082
    %4537 = vmatprep.mubr.bf16.mxu0 %v3189
    %4538 = vmatmul.mubr.bf16.gmra.mxu0 %v3188
    %v4539 = vpop.f32.mrf.mxu0
    %v4540 = vadd.f32 %v4499, %v4539
    %v4541 = vpop.f32.mrf.mxu0
    %v4542 = vpop.f32.mrf.mxu0
    %v4543 = vadd.f32 %v4502, %v4542
    %v4544 = vpop.f32.mrf.mxu0
    %4545 = vdwg.mxu0
    %v4546 = vadd.f32 %v2324, %v4540
    %v4547 = vadd.f32 %v2325, %v4543
    %4548 = vst.msk [vmem:[#allocation2] sm:$0xff] %vm77, %v4546
    %4549 = vst.msk [vmem:[#allocation2 + $0x8] sm:$0xff] %vm77, %v4547
    %s4550 = scalar_lea.vmem [#allocation2], 7
    %v4551 = vld [vmem:[%s4550] ss:$8 sm:$0x3]
    %vm4552 = vcmask 517120
    %v4553 = vsel %vm4552, %v4551, 0.0
    %4554 = vadd.xlane.f32.xlu0 %v4553
    %v4555 = vpop.xlane.xlu0 %4554
    %v4556 = vmul.f32 %v4555, %v2293
    %v4557 = vsub.f32 %v4551, %v4556
    %v4558 = vmul.f32 %v4557, %v4557
    %v4559 = vsel %vm4552, %v4558, 0.0
    %4560 = vadd.xlane.f32.xlu0 %v4559
    %v4561 = vpop.xlane.xlu0 %4560
    %v4562 = vmul.f32 %v4561, %v2293
    %v4563 = vadd.f32 %v4562, 1e-05
    %v4564 = vrsqrt.pop %v4563
    %v4565 = vmul.f32 %v4557, %v4564
    %v4566 = vlaneseq
    %v4567 = vshrl.u32 %v4566, 7
    %v4568 = vsub.s32 4, %v4567
    %v4569 = vrot.slane %v37, %v4568
    %v4570 = vmul.f32 %v4565, %v4569
    %v4571 = vlaneseq
    %v4572 = vshrl.u32 %v4571, 7
    %v4573 = vsub.s32 5, %v4572
    %v4574 = vrot.slane %v37, %v4573
    %v4575 = vadd.f32 %v4570, %v4574
    %4576 = vst.msk [vmem:[#allocation3] sm:$0x3] %vm4552, %v4575
    // Predicated region
    $region42: #{tpu_custom_call.1} parent=1 // pred_check
      _
    $region43: #{tpu_custom_call.1} parent=1 // pred_check_branch
      %4578 = sbr.rel (0) target = $region45
    $region44: #{tpu_custom_call.1} parent=1 // pred_region
      %s4580 = ssub.s32 32, 32
      %4581 = vsyncadd [#allocation4], %s4580
      %s4583 = sshll.u32 [#allocation3], 4
      %s4584 = int_to_ptr.vmem [resolvable:$true] %s4583
      %4586 = dma.vmem_to_hbm [thread:$0]  %s4584, 32, %s10, [#allocation4]
    $region45: #{tpu_custom_call.1} parent=1 // pred_fallthru
      _
    // Predicated region
    $region46: #{tpu_custom_call.1} parent=1 // pred_check
      _
    $region47: #{tpu_custom_call.1} parent=1 // pred_check_branch
      %4588 = sbr.rel (0) target = $region49
    $region48: #{tpu_custom_call.1} parent=1 // pred_region
      %4589 = dma.done [#allocation4], 32
    $region49: #{tpu_custom_call.1} parent=1 // pred_fallthru
      _
    %4590 = vsyncpa [#allocation4], 1

</llo_original>
